<compile_context>
chip_gen: v7x
topology: tpu7x:2x2x1
jax: 0.10.0
libtpu: 0.0.40
codegen_flags: <defaults>
</compile_context>

<pallas_src>
import jax
import jax.numpy as jnp
from jax import lax
from jax.experimental import pallas as pl
from jax.experimental.pallas import tpu as pltpu


# ---------------------------------------------------------------------------
# In-kernel 3x3 "same" conv on a pre-padded (H+2, W+2, Cin) array, expressed
# as ONE im2col MXU matmul: patches (H*W, 9*Cin) @ w_flat (9*Cin, Cout).
# ---------------------------------------------------------------------------
def _im2col_conv3x3_bias_relu(xpad, w_flat_ref, b_ref, H, W):
    taps = [xpad[dy:dy + H, dx:dx + W, :]
            for dy in range(3) for dx in range(3)]          # 9 x (H, W, Cin)
    patches = jnp.concatenate(taps, axis=-1)                # (H, W, 9*Cin)
    patches = patches.reshape(H * W, patches.shape[-1])     # (H*W, 9*Cin)
    acc = jnp.dot(patches, w_flat_ref[...],
                  preferred_element_type=jnp.float32)       # (H*W, Cout)
    acc = acc + b_ref[...]                                  # (1, Cout) broadcast
    return jnp.maximum(acc, 0.0)                            # ReLU


def fused_feature_kernel(x_ref, w1_ref, b1_ref, w2_ref, b2_ref,
                         feat_ref, pool_ref, xpad_ref, h1p_ref):
    # x_ref:    (H, W, Cin)        one batch element (leading dim squeezed)
    # feat_ref: (C2, H*W)          hooked relu2 activation, NCHW-flat order
    # pool_ref: (1, C2)            hooked AdaptiveAvgPool2d(1) activation
    # xpad_ref: (H+2, W+2, Cin)    VMEM scratch (padded input)
    # h1p_ref:  (H+2, W+2, C1)     VMEM scratch (padded conv1 activation)
    H, W, _ = x_ref.shape
    C1 = h1p_ref.shape[-1]

    # --- conv1 + relu1: zero-pad input in VMEM, single im2col matmul -------
    xpad_ref[...] = jnp.zeros_like(xpad_ref)
    xpad_ref[1:H + 1, 1:W + 1, :] = x_ref[...]
    h1 = _im2col_conv3x3_bias_relu(xpad_ref[...], w1_ref, b1_ref, H, W)  # (H*W, C1)

    # --- conv2 + relu2: pad h1 in VMEM (no HBM writeback), im2col matmul ---
    h1p_ref[...] = jnp.zeros_like(h1p_ref)
    h1p_ref[1:H + 1, 1:W + 1, :] = h1.reshape(H, W, C1)
    h2 = _im2col_conv3x3_bias_relu(h1p_ref[...], w2_ref, b2_ref, H, W)   # (H*W, C2)

    # Hook "relu2": PyTorch flatten(1) of NCHW == (C2, H*W); lane-dense store.
    feat_ref[...] = h2.T

    # Hook "pool": AdaptiveAvgPool2d(1) == mean over spatial positions.
    pool_ref[...] = jnp.mean(h2, axis=0, keepdims=True)

    # fc head intentionally omitted: FeatureExtractor discards the logits.


def feature_extractor_forward(x_nchw, params):
    """Pallas implementation of FeatureExtractor(BaseCNN(), topk=2).forward."""
    w1, b1, w2, b2, _wfc, _bfc = params          # fc params unused (logits dropped)
    B, Cin, H, W = x_nchw.shape
    C1 = w1.shape[-1]
    C2 = w2.shape[-1]

    # One-time layout glue outside the kernel: NCHW -> NHWC input, flat weights.
    x = jnp.transpose(x_nchw, (0, 2, 3, 1)).astype(jnp.float32)   # (B, H, W, Cin)
    w1f = w1.reshape(9 * Cin, C1).astype(jnp.float32)             # (9*Cin, C1)
    w2f = w2.reshape(9 * C1, C2).astype(jnp.float32)              # (9*C1, C2)

    feat, pooled = pl.pallas_call(
        fused_feature_kernel,
        out_shape=(jax.ShapeDtypeStruct((B, C2, H * W), jnp.float32),
                   jax.ShapeDtypeStruct((B, 1, C2), jnp.float32)),
        grid_spec=pltpu.PrefetchScalarGridSpec(
            num_scalar_prefetch=0,
            grid=(B,),
            in_specs=[
                pl.BlockSpec((None, H, W, Cin), lambda b: (b, 0, 0, 0)),
                pl.BlockSpec((9 * Cin, C1), lambda b: (0, 0)),
                pl.BlockSpec((1, C1), lambda b: (0, 0)),
                pl.BlockSpec((9 * C1, C2), lambda b: (0, 0)),
                pl.BlockSpec((1, C2), lambda b: (0, 0)),
            ],
            out_specs=(
                pl.BlockSpec((None, C2, H * W), lambda b: (b, 0, 0)),
                pl.BlockSpec((None, 1, C2), lambda b: (b, 0, 0)),
            ),
            scratch_shapes=[
                pltpu.VMEM((H + 2, W + 2, Cin), jnp.float32),
                pltpu.VMEM((H + 2, W + 2, C1), jnp.float32),
            ],
        ),
        compiler_params=pltpu.CompilerParams(
            dimension_semantics=("parallel",)),
    )(x, w1f, b1, w2f, b2)

    # Hooked features concatenated exactly like FeatureExtractor.forward
    # (relu2 hook first, then pool hook).  feat is already in NCHW-flat order,
    # so this is a free contiguous reshape, not a transpose.
    return jnp.concatenate([feat.reshape(B, C2 * H * W),
                            pooled.reshape(B, C2)], axis=1)


# ---------------------------------------------------------------------------
# Pure-JAX reference (for correctness check only).
# ---------------------------------------------------------------------------
def reference_forward(x_nchw, params):
    w1, b1, w2, b2, _wfc, _bfc = params
    B = x_nchw.shape[0]

    def conv_relu(x, w_hwio, b):
        w_oihw = jnp.transpose(w_hwio, (3, 2, 0, 1))
        y = lax.conv_general_dilated(x, w_oihw, (1, 1), "SAME")
        return jnp.maximum(y + b.reshape(1, -1, 1, 1), 0.0)

    h1 = conv_relu(x_nchw, w1, b1)
    h2 = conv_relu(h1, w2, b2)
    pooled = jnp.mean(h2, axis=(2, 3))
    return jnp.concatenate([h2.reshape(B, -1), pooled], axis=1)


def init_params(key, cin=4, c1=8, c2=16, n_cls=10):
    ks = jax.random.split(key, 6)
    w1 = jax.random.normal(ks[0], (3, 3, cin, c1), jnp.float32) * 0.1
    b1 = jax.random.normal(ks[1], (1, c1), jnp.float32) * 0.1
    w2 = jax.random.normal(ks[2], (3, 3, c1, c2), jnp.float32) * 0.1
    b2 = jax.random.normal(ks[3], (1, c2), jnp.float32) * 0.1
    wfc = jax.random.normal(ks[4], (c2, n_cls), jnp.float32) * 0.1
    bfc = jax.random.normal(ks[5], (1, n_cls), jnp.float32) * 0.1
    return (w1, b1, w2, b2, wfc, bfc)


if __name__ == "__main__":
    key = jax.random.PRNGKey(0)
    k_params, k_x = jax.random.split(key)
    params = init_params(k_params)

    B, Cin, H, W = 2, 4, 16, 16
    x = jax.random.normal(k_x, (B, Cin, H, W), jnp.float32)   # NCHW like PyTorch

    out = jax.block_until_ready(feature_extractor_forward(x, params))
    ref = jax.block_until_ready(reference_forward(x, params))

    assert out.shape == (B, 16 * H * W + 16), out.shape
    assert jnp.allclose(out, ref, atol=1e-4, rtol=1e-4), float(
        jnp.max(jnp.abs(out - ref)))

    print("KERNEL_OK")
</pallas_src>

<mosaic_0001>
module attributes {stable_mosaic.version = 11 : i64} {
  func.func @fused_feature_kernel(%arg0: i32, %arg1: memref<1x16x16x4xf32, #tpu.memory_space<vmem>>, %arg2: memref<36x8xf32, #tpu.memory_space<vmem>>, %arg3: memref<1x8xf32, #tpu.memory_space<vmem>>, %arg4: memref<72x16xf32, #tpu.memory_space<vmem>>, %arg5: memref<1x16xf32, #tpu.memory_space<vmem>>, %arg6: memref<1x16x256xf32, #tpu.memory_space<vmem>>, %arg7: memref<1x1x16xf32, #tpu.memory_space<vmem>>, %arg8: memref<18x18x4xf32, #tpu.memory_space<vmem>>, %arg9: memref<18x18x8xf32, #tpu.memory_space<vmem>>) attributes {dimension_semantics = [#tpu.dimension_semantics<parallel>], iteration_bounds = array<i64: 2>, scalar_prefetch = 0 : i64, scratch_operands = 2 : i64, tpu.core_type = #tpu.core_type<tc>, window_params = [{transform_indices = @transform_0, window_bounds = array<i64: 1, 16, 16, 4>}, {pipeline_mode = #tpu.pipeline_mode<synchronous>, transform_indices = @transform_1, window_bounds = array<i64: 36, 8>}, {pipeline_mode = #tpu.pipeline_mode<synchronous>, transform_indices = @transform_2, window_bounds = array<i64: 1, 8>}, {pipeline_mode = #tpu.pipeline_mode<synchronous>, transform_indices = @transform_3, window_bounds = array<i64: 72, 16>}, {pipeline_mode = #tpu.pipeline_mode<synchronous>, transform_indices = @transform_4, window_bounds = array<i64: 1, 16>}, {transform_indices = @transform_5, window_bounds = array<i64: 1, 16, 256>}, {transform_indices = @transform_6, window_bounds = array<i64: 1, 1, 16>}]} {
    %cst = arith.constant 0.000000e+00 : f32
    %0 = vector.broadcast %cst : f32 to vector<18x18x4xf32>
    %c0 = arith.constant 0 : index
    %c0_0 = arith.constant 0 : index
    %c0_1 = arith.constant 0 : index
    %1 = vector.load %arg8[%c0, %c0_0, %c0_1] : memref<18x18x4xf32, #tpu.memory_space<vmem>>, vector<18x18x4xf32>
    tpu.vector_store %arg8[%c0, %c0_0, %c0_1], %0 {strides = array<i32>} : memref<18x18x4xf32, #tpu.memory_space<vmem>>, vector<18x18x4xf32>,
    %c0_2 = arith.constant 0 : index
    %c0_3 = arith.constant 0 : index
    %c0_4 = arith.constant 0 : index
    %c0_5 = arith.constant 0 : index
    %2 = vector.load %arg1[%c0_2, %c0_3, %c0_4, %c0_5] : memref<1x16x16x4xf32, #tpu.memory_space<vmem>>, vector<1x16x16x4xf32>
    %3 = vector.shape_cast %2 : vector<1x16x16x4xf32> to vector<16x16x4xf32>
    %c1 = arith.constant 1 : index
    %c1_6 = arith.constant 1 : index
    %c0_7 = arith.constant 0 : index
    %4 = vector.load %arg8[%c1, %c1_6, %c0_7] : memref<18x18x4xf32, #tpu.memory_space<vmem>>, vector<16x16x4xf32>
    tpu.vector_store %arg8[%c1, %c1_6, %c0_7], %3 {strides = array<i32>} : memref<18x18x4xf32, #tpu.memory_space<vmem>>, vector<16x16x4xf32>,
    %c0_8 = arith.constant 0 : index
    %c0_9 = arith.constant 0 : index
    %c0_10 = arith.constant 0 : index
    %5 = vector.load %arg8[%c0_8, %c0_9, %c0_10] : memref<18x18x4xf32, #tpu.memory_space<vmem>>, vector<18x18x4xf32>
    %6 = vector.extract_strided_slice %5 {offsets = [0, 0, 0], sizes = [16, 16, 4], strides = [1, 1, 1]} : vector<18x18x4xf32> to vector<16x16x4xf32>
    %7 = vector.extract_strided_slice %5 {offsets = [0, 1, 0], sizes = [16, 16, 4], strides = [1, 1, 1]} : vector<18x18x4xf32> to vector<16x16x4xf32>
    %8 = vector.extract_strided_slice %5 {offsets = [0, 2, 0], sizes = [16, 16, 4], strides = [1, 1, 1]} : vector<18x18x4xf32> to vector<16x16x4xf32>
    %9 = vector.extract_strided_slice %5 {offsets = [1, 0, 0], sizes = [16, 16, 4], strides = [1, 1, 1]} : vector<18x18x4xf32> to vector<16x16x4xf32>
    %10 = vector.extract_strided_slice %5 {offsets = [1, 1, 0], sizes = [16, 16, 4], strides = [1, 1, 1]} : vector<18x18x4xf32> to vector<16x16x4xf32>
    %11 = vector.extract_strided_slice %5 {offsets = [1, 2, 0], sizes = [16, 16, 4], strides = [1, 1, 1]} : vector<18x18x4xf32> to vector<16x16x4xf32>
    %12 = vector.extract_strided_slice %5 {offsets = [2, 0, 0], sizes = [16, 16, 4], strides = [1, 1, 1]} : vector<18x18x4xf32> to vector<16x16x4xf32>
    %13 = vector.extract_strided_slice %5 {offsets = [2, 1, 0], sizes = [16, 16, 4], strides = [1, 1, 1]} : vector<18x18x4xf32> to vector<16x16x4xf32>
    %14 = vector.extract_strided_slice %5 {offsets = [2, 2, 0], sizes = [16, 16, 4], strides = [1, 1, 1]} : vector<18x18x4xf32> to vector<16x16x4xf32>
    %15 = tpu.concatenate %6, %7, %8, %9, %10, %11, %12, %13, %14 in 2 : vector<16x16x4xf32>, vector<16x16x4xf32>, vector<16x16x4xf32>, vector<16x16x4xf32>, vector<16x16x4xf32>, vector<16x16x4xf32>, vector<16x16x4xf32>, vector<16x16x4xf32>, vector<16x16x4xf32> -> vector<16x16x36xf32>
    %16 = vector.shape_cast %15 : vector<16x16x36xf32> to vector<256x36xf32>
    %c0_11 = arith.constant 0 : index
    %c0_12 = arith.constant 0 : index
    %17 = vector.load %arg2[%c0_11, %c0_12] : memref<36x8xf32, #tpu.memory_space<vmem>>, vector<36x8xf32>
    %cst_13 = arith.constant dense<0.000000e+00> : vector<256x8xf32>
    %18 = tpu.matmul %16, %17, %cst_13 {dimension_numbers = #tpu.dot_dimension_numbers<[1], [0], [0], [1], [0, 0, 1, 1], [], []>} : vector<256x36xf32>, vector<36x8xf32>, vector<256x8xf32> -> vector<256x8xf32>
    %c0_14 = arith.constant 0 : index
    %c0_15 = arith.constant 0 : index
    %19 = vector.load %arg3[%c0_14, %c0_15] : memref<1x8xf32, #tpu.memory_space<vmem>>, vector<1x8xf32>
    %20 = vector.broadcast %19 : vector<1x8xf32> to vector<256x8xf32>
    %21 = arith.addf %18, %20 : vector<256x8xf32>
    %cst_16 = arith.constant 0.000000e+00 : f32
    %22 = vector.broadcast %cst_16 : f32 to vector<256x8xf32>
    %23 = arith.maximumf %21, %22 : vector<256x8xf32>
    %cst_17 = arith.constant 0.000000e+00 : f32
    %24 = vector.broadcast %cst_17 : f32 to vector<18x18x8xf32>
    %c0_18 = arith.constant 0 : index
    %c0_19 = arith.constant 0 : index
    %c0_20 = arith.constant 0 : index
    %25 = vector.load %arg9[%c0_18, %c0_19, %c0_20] : memref<18x18x8xf32, #tpu.memory_space<vmem>>, vector<18x18x8xf32>
    tpu.vector_store %arg9[%c0_18, %c0_19, %c0_20], %24 {strides = array<i32>} : memref<18x18x8xf32, #tpu.memory_space<vmem>>, vector<18x18x8xf32>,
    %26 = vector.shape_cast %23 : vector<256x8xf32> to vector<16x16x8xf32>
    %c1_21 = arith.constant 1 : index
    %c1_22 = arith.constant 1 : index
    %c0_23 = arith.constant 0 : index
    %27 = vector.load %arg9[%c1_21, %c1_22, %c0_23] : memref<18x18x8xf32, #tpu.memory_space<vmem>>, vector<16x16x8xf32>
    tpu.vector_store %arg9[%c1_21, %c1_22, %c0_23], %26 {strides = array<i32>} : memref<18x18x8xf32, #tpu.memory_space<vmem>>, vector<16x16x8xf32>,
    %c0_24 = arith.constant 0 : index
    %c0_25 = arith.constant 0 : index
    %c0_26 = arith.constant 0 : index
    %28 = vector.load %arg9[%c0_24, %c0_25, %c0_26] : memref<18x18x8xf32, #tpu.memory_space<vmem>>, vector<18x18x8xf32>
    %29 = vector.extract_strided_slice %28 {offsets = [0, 0, 0], sizes = [16, 16, 8], strides = [1, 1, 1]} : vector<18x18x8xf32> to vector<16x16x8xf32>
    %30 = vector.extract_strided_slice %28 {offsets = [0, 1, 0], sizes = [16, 16, 8], strides = [1, 1, 1]} : vector<18x18x8xf32> to vector<16x16x8xf32>
    %31 = vector.extract_strided_slice %28 {offsets = [0, 2, 0], sizes = [16, 16, 8], strides = [1, 1, 1]} : vector<18x18x8xf32> to vector<16x16x8xf32>
    %32 = vector.extract_strided_slice %28 {offsets = [1, 0, 0], sizes = [16, 16, 8], strides = [1, 1, 1]} : vector<18x18x8xf32> to vector<16x16x8xf32>
    %33 = vector.extract_strided_slice %28 {offsets = [1, 1, 0], sizes = [16, 16, 8], strides = [1, 1, 1]} : vector<18x18x8xf32> to vector<16x16x8xf32>
    %34 = vector.extract_strided_slice %28 {offsets = [1, 2, 0], sizes = [16, 16, 8], strides = [1, 1, 1]} : vector<18x18x8xf32> to vector<16x16x8xf32>
    %35 = vector.extract_strided_slice %28 {offsets = [2, 0, 0], sizes = [16, 16, 8], strides = [1, 1, 1]} : vector<18x18x8xf32> to vector<16x16x8xf32>
    %36 = vector.extract_strided_slice %28 {offsets = [2, 1, 0], sizes = [16, 16, 8], strides = [1, 1, 1]} : vector<18x18x8xf32> to vector<16x16x8xf32>
    %37 = vector.extract_strided_slice %28 {offsets = [2, 2, 0], sizes = [16, 16, 8], strides = [1, 1, 1]} : vector<18x18x8xf32> to vector<16x16x8xf32>
    %38 = tpu.concatenate %29, %30, %31, %32, %33, %34, %35, %36, %37 in 2 : vector<16x16x8xf32>, vector<16x16x8xf32>, vector<16x16x8xf32>, vector<16x16x8xf32>, vector<16x16x8xf32>, vector<16x16x8xf32>, vector<16x16x8xf32>, vector<16x16x8xf32>, vector<16x16x8xf32> -> vector<16x16x72xf32>
    %39 = vector.shape_cast %38 : vector<16x16x72xf32> to vector<256x72xf32>
    %c0_27 = arith.constant 0 : index
    %c0_28 = arith.constant 0 : index
    %40 = vector.load %arg4[%c0_27, %c0_28] : memref<72x16xf32, #tpu.memory_space<vmem>>, vector<72x16xf32>
    %cst_29 = arith.constant dense<0.000000e+00> : vector<256x16xf32>
    %41 = tpu.matmul %39, %40, %cst_29 {dimension_numbers = #tpu.dot_dimension_numbers<[1], [0], [0], [1], [0, 0, 1, 1], [], []>} : vector<256x72xf32>, vector<72x16xf32>, vector<256x16xf32> -> vector<256x16xf32>
    %c0_30 = arith.constant 0 : index
    %c0_31 = arith.constant 0 : index
    %42 = vector.load %arg5[%c0_30, %c0_31] : memref<1x16xf32, #tpu.memory_space<vmem>>, vector<1x16xf32>
    %43 = vector.broadcast %42 : vector<1x16xf32> to vector<256x16xf32>
    %44 = arith.addf %41, %43 : vector<256x16xf32>
    %cst_32 = arith.constant 0.000000e+00 : f32
    %45 = vector.broadcast %cst_32 : f32 to vector<256x16xf32>
    %46 = arith.maximumf %44, %45 : vector<256x16xf32>
    %47 = tpu.transpose %46, [1, 0] : vector<256x16xf32> -> vector<16x256xf32>
    %c0_33 = arith.constant 0 : index
    %c0_34 = arith.constant 0 : index
    %c0_35 = arith.constant 0 : index
    %48 = vector.load %arg6[%c0_33, %c0_34, %c0_35] : memref<1x16x256xf32, #tpu.memory_space<vmem>>, vector<1x16x256xf32>
    %49 = vector.shape_cast %48 : vector<1x16x256xf32> to vector<16x256xf32>
    %50 = vector.shape_cast %47 : vector<16x256xf32> to vector<1x16x256xf32>
    tpu.vector_store %arg6[%c0_33, %c0_34, %c0_35], %50 {strides = array<i32>} : memref<1x16x256xf32, #tpu.memory_space<vmem>>, vector<1x16x256xf32>,
    %cst_36 = arith.constant dense<0.000000e+00> : vector<16xf32>
    %51 = vector.multi_reduction <add>, %46, %cst_36 [0] : vector<256x16xf32> to vector<16xf32>
    %52 = vector.shape_cast %51 : vector<16xf32> to vector<1x16xf32>
    %cst_37 = arith.constant 2.560000e+02 : f32
    %53 = vector.broadcast %cst_37 : f32 to vector<1x16xf32>
    %54 = arith.divf %52, %53 : vector<1x16xf32>
    %c0_38 = arith.constant 0 : index
    %c0_39 = arith.constant 0 : index
    %c0_40 = arith.constant 0 : index
    %55 = vector.load %arg7[%c0_38, %c0_39, %c0_40] : memref<1x1x16xf32, #tpu.memory_space<vmem>>, vector<1x1x16xf32>
    %56 = vector.shape_cast %55 : vector<1x1x16xf32> to vector<1x16xf32>
    %57 = vector.shape_cast %54 : vector<1x16xf32> to vector<1x1x16xf32>
    tpu.vector_store %arg7[%c0_38, %c0_39, %c0_40], %57 {strides = array<i32>} : memref<1x1x16xf32, #tpu.memory_space<vmem>>, vector<1x1x16xf32>,
    return
  }
  func.func @transform_0(%arg0: i32) -> (i32, i32, i32, i32) {
    %c0_i32 = arith.constant 0 : i32
    %c0_i32_0 = arith.constant 0 : i32
    %c0_i32_1 = arith.constant 0 : i32
    %c0_i32_2 = arith.constant 0 : i32
    return %arg0, %c0_i32, %c0_i32_0, %c0_i32_1 : i32, i32, i32, i32
  }
  func.func @transform_1(%arg0: i32) -> (i32, i32) {
    %c0_i32 = arith.constant 0 : i32
    %c0_i32_0 = arith.constant 0 : i32
    %c0_i32_1 = arith.constant 0 : i32
    return %c0_i32, %c0_i32_0 : i32, i32
  }
  func.func @transform_2(%arg0: i32) -> (i32, i32) {
    %c0_i32 = arith.constant 0 : i32
    %c0_i32_0 = arith.constant 0 : i32
    %c0_i32_1 = arith.constant 0 : i32
    return %c0_i32, %c0_i32_0 : i32, i32
  }
  func.func @transform_3(%arg0: i32) -> (i32, i32) {
    %c0_i32 = arith.constant 0 : i32
    %c0_i32_0 = arith.constant 0 : i32
    %c0_i32_1 = arith.constant 0 : i32
    return %c0_i32, %c0_i32_0 : i32, i32
  }
  func.func @transform_4(%arg0: i32) -> (i32, i32) {
    %c0_i32 = arith.constant 0 : i32
    %c0_i32_0 = arith.constant 0 : i32
    %c0_i32_1 = arith.constant 0 : i32
    return %c0_i32, %c0_i32_0 : i32, i32
  }
  func.func @transform_5(%arg0: i32) -> (i32, i32, i32) {
    %c0_i32 = arith.constant 0 : i32
    %c0_i32_0 = arith.constant 0 : i32
    %c0_i32_1 = arith.constant 0 : i32
    return %arg0, %c0_i32, %c0_i32_0 : i32, i32, i32
  }
  func.func @transform_6(%arg0: i32) -> (i32, i32, i32) {
    %c0_i32 = arith.constant 0 : i32
    %c0_i32_0 = arith.constant 0 : i32
    %c0_i32_1 = arith.constant 0 : i32
    return %arg0, %c0_i32, %c0_i32_0 : i32, i32, i32
  }
}

</mosaic_0001>

<llo_original>
// kernel: tpu_custom_call.1
$region0: #{tpu_custom_call.1}
  #allocation0 [shape = 'u32[]', space=smem, size = 0x4, offset = 0x4, fixed_abs, tag = 'smem constant byte address 0x4 - core index']
  #allocation1 [shape = 'u32[144,128]{1,0:T(1,128)}', space=vmem, size = 0x12000, scoped, tag = 'internal scratch']
  #allocation2 [shape = 'f32[18,18,4]{2,1,0:T(8,128)}', space=vmem, size = 0x36000, scoped, tag = 'scratch operand']
  #allocation3 [shape = 'f32[18,18,8]{2,1,0:T(8,128)}', space=vmem, size = 0x36000, scoped, tag = 'scratch operand']
  %s0 = inlined_call_operand.vmem [shape: f32[2,16,16,4], index: 0, kind: input, shape index: {}]
  %s1 = inlined_call_operand.vmem [shape: f32[36,8], index: 1, kind: input, shape index: {}]
  %s2 = inlined_call_operand.vmem [shape: f32[1,8], index: 2, kind: input, shape index: {}]
  %s3 = inlined_call_operand.vmem [shape: f32[72,16], index: 3, kind: input, shape index: {}]
  %s4 = inlined_call_operand.vmem [shape: f32[1,16], index: 4, kind: input, shape index: {}]
  %s5 = inlined_call_operand.hbm [shape: f32[2,16,256], index: 5, kind: output, shape index: {0}]
  %s6 = inlined_call_operand.hbm [shape: f32[2,1,16], index: 6, kind: output, shape index: {1}]
  %7 = xla_tuple %s5, %s6
  %s8 = sld [smem:[#allocation0]]
  $region61: #{tpu_custom_call.1} parent=0
    _
  %s10 = ssub.s32 1, %s8
  %s11 = scalar_select 0, %s10, %s8
  $region1: #{tpu_custom_call.1} parent=0
    #allocation4 [shape = 'u8[32768]{0}', space=vmem, size = 0x8000, scoped, tag = 'output window, operand 0']
    #allocation5 [shape = 's32[2]{0}', space=sflag, size = 0x8, scoped, tag = 'scoped memory for tpu_custom_call.1']
    #allocation6 [shape = 'u8[1024]{0}', space=vmem, size = 0x400, scoped, tag = 'output window, operand 1']
    #allocation7 [shape = 's32[2]{0}', space=sflag, size = 0x8, scoped, tag = 'scoped memory for tpu_custom_call.1']
    %12 = vsyncpa [#allocation5], 0
    %s13 = scalar_lea.sflag [#allocation5], 1
    %14 = vsyncpa %s13, 0
    %15 = vsyncpa [#allocation7], 0
    %s16 = scalar_lea.sflag [#allocation7], 1
    %17 = vsyncpa %s16, 0
    loop: start=0, step=1, limit=4
    $region2: #{tpu_custom_call.1} parent=1 // loop_pre_header
      _
    $region3: #{tpu_custom_call.1} parent=1 // loop_header
      %s19 = sphi 0, %s23
      %p20 = scmp.ge.s32.totalorder %s19, 4
      %s29 = sphi 0, %s31
      %s32 = sphi 0, %s29
      %s33 = sphi 0, %s32
      %s49 = sphi 0, %s33
      %s53 = sphi 0, %s53
      %s55 = sphi 0, %s53
      %s56 = sphi 0, %s55
      %s70 = sphi 0, %s56
      %s74 = sphi 0, %s74
      %s76 = sphi 0, %s74
      %s77 = sphi 0, %s76
      %s91 = sphi 0, %s77
      %s95 = sphi 0, %s95
      %s97 = sphi 0, %s95
      %s98 = sphi 0, %s97
      %s112 = sphi 0, %s98
      %s116 = sphi 0, %s116
      %s118 = sphi 0, %s116
      %s119 = sphi 0, %s118
      %s133 = sphi 0, %s119
      %s139 = sphi 0, %s141
      %s142 = sphi 0, %s139
      %s143 = sphi 0, %s142
      %s159 = sphi 0, %s143
      %s165 = sphi 0, %s167
      %s168 = sphi 0, %s165
      %s169 = sphi 0, %s168
      %s185 = sphi 0, %s169
    $region4: #{tpu_custom_call.1} parent=1 // loop_header_branch
      %22 = sbr.rel (%p20) target = $region8
    $region5: #{tpu_custom_call.1} parent=1 // loop_body
      %s24 = ssub.s32 %s19, 1
      %s25 = ssub.s32 %s19, 2
      %s26 = sadd.s32 %s19, 1
      %s27 = ssub.s32 %s19, %s26
      %p28 = scmp.eq.s32.totalorder %s27, 0
      %s30 = sadd.s32 %s29, 1
      %s31 = scalar_select %p28, %s29, %s30
      %p34 = pneg %p28
      %p35 = scmp.eq.s32.totalorder %s19, 1
      %p36 = por %p34, %p35
      %p37 = scmp.ne.s32.totalorder %s29, %s32
      %p38 = scmp.eq.s32.totalorder %s19, 0
      %p39 = por %p37, %p38
      %p40 = scmp.ne.s32.totalorder %s29, %s32
      %p41 = scmp.eq.s32.totalorder %s24, 1
      %p42 = por %p40, %p41
      %p43 = scmp.ne.s32.totalorder %s32, %s33
      %p44 = scmp.eq.s32.totalorder %s24, 0
      %p45 = por %p43, %p44
      %p46 = scmp.ne.s32.totalorder %s32, %s33
      %p47 = scmp.eq.s32.totalorder %s25, 1
      %p48 = por %p46, %p47
      %p50 = scmp.ne.s32.totalorder %s33, %s49
      %p51 = scmp.eq.s32.totalorder %s25, 0
      %p52 = por %p50, %p51
      %s54 = sadd.s32 %s53, 1
      %p57 = scmp.eq.s32.totalorder %s19, 1
      %p58 = scmp.ne.s32.totalorder %s53, %s55
      %p59 = scmp.eq.s32.totalorder %s19, 0
      %p60 = por %p58, %p59
      %p61 = scmp.ne.s32.totalorder %s53, %s55
      %p62 = scmp.eq.s32.totalorder %s24, 1
      %p63 = por %p61, %p62
      %p64 = scmp.ne.s32.totalorder %s55, %s56
      %p65 = scmp.eq.s32.totalorder %s24, 0
      %p66 = por %p64, %p65
      %p67 = scmp.ne.s32.totalorder %s55, %s56
      %p68 = scmp.eq.s32.totalorder %s25, 1
      %p69 = por %p67, %p68
      %p71 = scmp.ne.s32.totalorder %s56, %s70
      %p72 = scmp.eq.s32.totalorder %s25, 0
      %p73 = por %p71, %p72
      %s75 = sadd.s32 %s74, 1
      %p78 = scmp.eq.s32.totalorder %s19, 1
      %p79 = scmp.ne.s32.totalorder %s74, %s76
      %p80 = scmp.eq.s32.totalorder %s19, 0
      %p81 = por %p79, %p80
      %p82 = scmp.ne.s32.totalorder %s74, %s76
      %p83 = scmp.eq.s32.totalorder %s24, 1
      %p84 = por %p82, %p83
      %p85 = scmp.ne.s32.totalorder %s76, %s77
      %p86 = scmp.eq.s32.totalorder %s24, 0
      %p87 = por %p85, %p86
      %p88 = scmp.ne.s32.totalorder %s76, %s77
      %p89 = scmp.eq.s32.totalorder %s25, 1
      %p90 = por %p88, %p89
      %p92 = scmp.ne.s32.totalorder %s77, %s91
      %p93 = scmp.eq.s32.totalorder %s25, 0
      %p94 = por %p92, %p93
      %s96 = sadd.s32 %s95, 1
      %p99 = scmp.eq.s32.totalorder %s19, 1
      %p100 = scmp.ne.s32.totalorder %s95, %s97
      %p101 = scmp.eq.s32.totalorder %s19, 0
      %p102 = por %p100, %p101
      %p103 = scmp.ne.s32.totalorder %s95, %s97
      %p104 = scmp.eq.s32.totalorder %s24, 1
      %p105 = por %p103, %p104
      %p106 = scmp.ne.s32.totalorder %s97, %s98
      %p107 = scmp.eq.s32.totalorder %s24, 0
      %p108 = por %p106, %p107
      %p109 = scmp.ne.s32.totalorder %s97, %s98
      %p110 = scmp.eq.s32.totalorder %s25, 1
      %p111 = por %p109, %p110
      %p113 = scmp.ne.s32.totalorder %s98, %s112
      %p114 = scmp.eq.s32.totalorder %s25, 0
      %p115 = por %p113, %p114
      %s117 = sadd.s32 %s116, 1
      %p120 = scmp.eq.s32.totalorder %s19, 1
      %p121 = scmp.ne.s32.totalorder %s116, %s118
      %p122 = scmp.eq.s32.totalorder %s19, 0
      %p123 = por %p121, %p122
      %p124 = scmp.ne.s32.totalorder %s116, %s118
      %p125 = scmp.eq.s32.totalorder %s24, 1
      %p126 = por %p124, %p125
      %p127 = scmp.ne.s32.totalorder %s118, %s119
      %p128 = scmp.eq.s32.totalorder %s24, 0
      %p129 = por %p127, %p128
      %p130 = scmp.ne.s32.totalorder %s118, %s119
      %p131 = scmp.eq.s32.totalorder %s25, 1
      %p132 = por %p130, %p131
      %p134 = scmp.ne.s32.totalorder %s119, %s133
      %p135 = scmp.eq.s32.totalorder %s25, 0
      %p136 = por %p134, %p135
      %s137 = ssub.s32 %s19, %s26
      %p138 = scmp.eq.s32.totalorder %s137, 0
      %s140 = sadd.s32 %s139, 1
      %s141 = scalar_select %p138, %s139, %s140
      %p144 = pneg %p138
      %p145 = scmp.eq.s32.totalorder %s19, 1
      %p146 = por %p144, %p145
      %p147 = scmp.ne.s32.totalorder %s139, %s142
      %p148 = scmp.eq.s32.totalorder %s19, 0
      %p149 = por %p147, %p148
      %p150 = scmp.ne.s32.totalorder %s139, %s142
      %p151 = scmp.eq.s32.totalorder %s24, 1
      %p152 = por %p150, %p151
      %p153 = scmp.ne.s32.totalorder %s142, %s143
      %p154 = scmp.eq.s32.totalorder %s24, 0
      %p155 = por %p153, %p154
      %p156 = scmp.ne.s32.totalorder %s142, %s143
      %p157 = scmp.eq.s32.totalorder %s25, 1
      %p158 = por %p156, %p157
      %p160 = scmp.ne.s32.totalorder %s143, %s159
      %p161 = scmp.eq.s32.totalorder %s25, 0
      %p162 = por %p160, %p161
      %s163 = ssub.s32 %s19, %s26
      %p164 = scmp.eq.s32.totalorder %s163, 0
      %s166 = sadd.s32 %s165, 1
      %s167 = scalar_select %p164, %s165, %s166
      %p170 = pneg %p164
      %p171 = scmp.eq.s32.totalorder %s19, 1
      %p172 = por %p170, %p171
      %p173 = scmp.ne.s32.totalorder %s165, %s168
      %p174 = scmp.eq.s32.totalorder %s19, 0
      %p175 = por %p173, %p174
      %p176 = scmp.ne.s32.totalorder %s165, %s168
      %p177 = scmp.eq.s32.totalorder %s24, 1
      %p178 = por %p176, %p177
      %p179 = scmp.ne.s32.totalorder %s168, %s169
      %p180 = scmp.eq.s32.totalorder %s24, 0
      %p181 = por %p179, %p180
      %p182 = scmp.ne.s32.totalorder %s168, %s169
      %p183 = scmp.eq.s32.totalorder %s25, 1
      %p184 = por %p182, %p183
      %p186 = scmp.ne.s32.totalorder %s169, %s185
      %p187 = scmp.eq.s32.totalorder %s25, 0
      %p188 = por %p186, %p187
      %p189 = scmp.le.s32.totalorder 1, %s19
      %p190 = scmp.lt.s32.totalorder %s19, 3
      %p191 = pnand %p189, %p190
      %p192 = pneg %p191
      // Predicated region
      $region9: #{tpu_custom_call.1} parent=5 // pred_check
        _
      $region10: #{tpu_custom_call.1} parent=5 // pred_check_branch
        %194 = sbr.rel (%p191) target = $region12
      $region11: #{tpu_custom_call.1} parent=5 // pred_region
        %s195 = ssub.s32 %s19, 1
        // Predicated region
        $region13: #{tpu_custom_call.1} parent=11 // pred_check
          %p196 = pneg %p66
        $region14: #{tpu_custom_call.1} parent=11 // pred_check_branch
          %198 = sbr.rel (%p196) target = $region16
        $region15: #{tpu_custom_call.1} parent=11 // pred_region
          _
        $region16: #{tpu_custom_call.1} parent=11 // pred_fallthru
          _
        // Predicated region
        $region17: #{tpu_custom_call.1} parent=11 // pred_check
          %p199 = pneg %p87
        $region18: #{tpu_custom_call.1} parent=11 // pred_check_branch
          %201 = sbr.rel (%p199) target = $region20
        $region19: #{tpu_custom_call.1} parent=11 // pred_region
          _
        $region20: #{tpu_custom_call.1} parent=11 // pred_fallthru
          _
        // Predicated region
        $region21: #{tpu_custom_call.1} parent=11 // pred_check
          %p202 = pneg %p108
        $region22: #{tpu_custom_call.1} parent=11 // pred_check_branch
          %204 = sbr.rel (%p202) target = $region24
        $region23: #{tpu_custom_call.1} parent=11 // pred_region
          _
        $region24: #{tpu_custom_call.1} parent=11 // pred_fallthru
          _
        // Predicated region
        $region25: #{tpu_custom_call.1} parent=11 // pred_check
          %p205 = pneg %p129
        $region26: #{tpu_custom_call.1} parent=11 // pred_check_branch
          %207 = sbr.rel (%p205) target = $region28
        $region27: #{tpu_custom_call.1} parent=11 // pred_region
          _
        $region28: #{tpu_custom_call.1} parent=11 // pred_fallthru
          _
      $region12: #{tpu_custom_call.1} parent=5 // pred_fallthru
        _
      %p208 = scmp.lt.s32.totalorder %s19, 2
      // Predicated region
      $region29: #{tpu_custom_call.1} parent=5 // pred_check
        %p209 = pneg %p208
      $region30: #{tpu_custom_call.1} parent=5 // pred_check_branch
        %211 = sbr.rel (%p209) target = $region32
      $region31: #{tpu_custom_call.1} parent=5 // pred_region
        // Predicated region
        $region33: #{tpu_custom_call.1} parent=31 // pred_check
          %p212 = pneg %p39
        $region34: #{tpu_custom_call.1} parent=31 // pred_check_branch
          %214 = sbr.rel (%p212) target = $region36
        $region35: #{tpu_custom_call.1} parent=31 // pred_region
          %p215 = scmp.lt.s32.totalorder %s19, 1
          %s216 = scalar_select %p215, %s19, 1
          %s217 = smul.addr %s216, 32
          %s218 = smul.addr %s217, 8
          %s219 = scalar_lea.vmem %s0, %s218
        $region36: #{tpu_custom_call.1} parent=31 // pred_fallthru
          _
      $region32: #{tpu_custom_call.1} parent=5 // pred_fallthru
        _
      %p220 = scmp.le.s32.totalorder 1, %s19
      %p221 = scmp.lt.s32.totalorder %s19, 3
      %p222 = pnand %p220, %p221
      %p223 = pneg %p222
      // Predicated region
      $region37: #{tpu_custom_call.1} parent=5 // pred_check
        _
      $region38: #{tpu_custom_call.1} parent=5 // pred_check_branch
        %225 = sbr.rel (%p222) target = $region40
      $region39: #{tpu_custom_call.1} parent=5 // pred_region
        %s226 = ssub.s32 %s19, 1
        %p227 = scmp.lt.s32.totalorder %s24, 1
        %s228 = scalar_select %p227, %s24, 1
        %s229 = smul.addr %s228, 32
        %s230 = smul.addr %s229, 8
        %s231 = scalar_lea.vmem %s0, %s230
        %p232 = pneg %p45
        %p233 = pneg %p42
        %p234 = pneg %p66
        %p235 = pneg %p63
        %p236 = pneg %p87
        %p237 = pneg %p84
        %p238 = pneg %p108
        %p239 = pneg %p105
        %p240 = pneg %p129
        %p241 = pneg %p126
        %p242 = pneg %p155
        %p243 = pneg %p152
        %s244 = sand.u32 %s142, 1
        %s245 = scalar_lea.sflag [#allocation5], %s244
        %s246 = sand.u32 %s142, 1
        %s247 = smul.addr %s246, 32
        %s248 = scalar_lea.vmem [#allocation4], %s247
        %p249 = pneg %p181
        %p250 = pneg %p178
        %s251 = sand.u32 %s168, 1
        %s252 = scalar_lea.sflag [#allocation7], %s251
        %s253 = sand.u32 %s168, 1
        %s254 = scalar_lea.vmem [#allocation6], %s253
        %p255 = scmp.lt.s32.totalorder %s24, 1
        %s256 = scalar_select %p255, %s24, 1
        %s257 = smul.addr %s256, 32
        %s258 = smul.addr %s257, 8
        %s259 = scalar_lea.vmem %s0, %s258
        %vm260 = vcmask 31744
        %261 = vst.msk [vmem:[#allocation2] sm:$0xff] %vm260, 0.0
        %262 = vst.msk [vmem:[#allocation2 + $0x8] sm:$0xff] %vm260, 0.0
        %vm263 = vcmask 25600
        %264 = vst.msk [vmem:[#allocation2 + $0x10] sm:$0x3] %vm263, 0.0
        %265 = vst.msk [vmem:[#allocation2 + $0x18] sm:$0xff] %vm260, 0.0
        %266 = vst.msk [vmem:[#allocation2 + $0x20] sm:$0xff] %vm260, 0.0
        %267 = vst.msk [vmem:[#allocation2 + $0x28] sm:$0x3] %vm263, 0.0
        %268 = vst.msk [vmem:[#allocation2 + $0x30] sm:$0xff] %vm260, 0.0
        %269 = vst.msk [vmem:[#allocation2 + $0x38] sm:$0xff] %vm260, 0.0
        %270 = vst.msk [vmem:[#allocation2 + $0x40] sm:$0x3] %vm263, 0.0
        %271 = vst.msk [vmem:[#allocation2 + $0x48] sm:$0xff] %vm260, 0.0
        %272 = vst.msk [vmem:[#allocation2 + $0x50] sm:$0xff] %vm260, 0.0
        %273 = vst.msk [vmem:[#allocation2 + $0x58] sm:$0x3] %vm263, 0.0
        %274 = vst.msk [vmem:[#allocation2 + $0x60] sm:$0xff] %vm260, 0.0
        %275 = vst.msk [vmem:[#allocation2 + $0x68] sm:$0xff] %vm260, 0.0
        %276 = vst.msk [vmem:[#allocation2 + $0x70] sm:$0x3] %vm263, 0.0
        %277 = vst.msk [vmem:[#allocation2 + $0x78] sm:$0xff] %vm260, 0.0
        %278 = vst.msk [vmem:[#allocation2 + $0x80] sm:$0xff] %vm260, 0.0
        %279 = vst.msk [vmem:[#allocation2 + $0x88] sm:$0x3] %vm263, 0.0
        %280 = vst.msk [vmem:[#allocation2 + $0x90] sm:$0xff] %vm260, 0.0
        %281 = vst.msk [vmem:[#allocation2 + $0x98] sm:$0xff] %vm260, 0.0
        %282 = vst.msk [vmem:[#allocation2 + $0xa0] sm:$0x3] %vm263, 0.0
        %283 = vst.msk [vmem:[#allocation2 + $0xa8] sm:$0xff] %vm260, 0.0
        %284 = vst.msk [vmem:[#allocation2 + $0xb0] sm:$0xff] %vm260, 0.0
        %285 = vst.msk [vmem:[#allocation2 + $0xb8] sm:$0x3] %vm263, 0.0
        %286 = vst.msk [vmem:[#allocation2 + $0xc0] sm:$0xff] %vm260, 0.0
        %287 = vst.msk [vmem:[#allocation2 + $0xc8] sm:$0xff] %vm260, 0.0
        %288 = vst.msk [vmem:[#allocation2 + $0xd0] sm:$0x3] %vm263, 0.0
        %289 = vst.msk [vmem:[#allocation2 + $0xd8] sm:$0xff] %vm260, 0.0
        %290 = vst.msk [vmem:[#allocation2 + $0xe0] sm:$0xff] %vm260, 0.0
        %291 = vst.msk [vmem:[#allocation2 + $0xe8] sm:$0x3] %vm263, 0.0
        %292 = vst.msk [vmem:[#allocation2 + $0xf0] sm:$0xff] %vm260, 0.0
        %293 = vst.msk [vmem:[#allocation2 + $0xf8] sm:$0xff] %vm260, 0.0
        %294 = vst.msk [vmem:[#allocation2 + $0x100] sm:$0x3] %vm263, 0.0
        %295 = vst.msk [vmem:[#allocation2 + $0x108] sm:$0xff] %vm260, 0.0
        %296 = vst.msk [vmem:[#allocation2 + $0x110] sm:$0xff] %vm260, 0.0
        %297 = vst.msk [vmem:[#allocation2 + $0x118] sm:$0x3] %vm263, 0.0
        %298 = vst.msk [vmem:[#allocation2 + $0x120] sm:$0xff] %vm260, 0.0
        %299 = vst.msk [vmem:[#allocation2 + $0x128] sm:$0xff] %vm260, 0.0
        %300 = vst.msk [vmem:[#allocation2 + $0x130] sm:$0x3] %vm263, 0.0
        %301 = vst.msk [vmem:[#allocation2 + $0x138] sm:$0xff] %vm260, 0.0
        %302 = vst.msk [vmem:[#allocation2 + $0x140] sm:$0xff] %vm260, 0.0
        %303 = vst.msk [vmem:[#allocation2 + $0x148] sm:$0x3] %vm263, 0.0
        %304 = vst.msk [vmem:[#allocation2 + $0x150] sm:$0xff] %vm260, 0.0
        %305 = vst.msk [vmem:[#allocation2 + $0x158] sm:$0xff] %vm260, 0.0
        %306 = vst.msk [vmem:[#allocation2 + $0x160] sm:$0x3] %vm263, 0.0
        %307 = vst.msk [vmem:[#allocation2 + $0x168] sm:$0xff] %vm260, 0.0
        %308 = vst.msk [vmem:[#allocation2 + $0x170] sm:$0xff] %vm260, 0.0
        %309 = vst.msk [vmem:[#allocation2 + $0x178] sm:$0x3] %vm263, 0.0
        %310 = vst.msk [vmem:[#allocation2 + $0x180] sm:$0xff] %vm260, 0.0
        %311 = vst.msk [vmem:[#allocation2 + $0x188] sm:$0xff] %vm260, 0.0
        %312 = vst.msk [vmem:[#allocation2 + $0x190] sm:$0x3] %vm263, 0.0
        %313 = vst.msk [vmem:[#allocation2 + $0x198] sm:$0xff] %vm260, 0.0
        %314 = vst.msk [vmem:[#allocation2 + $0x1a0] sm:$0xff] %vm260, 0.0
        %315 = vst.msk [vmem:[#allocation2 + $0x1a8] sm:$0x3] %vm263, 0.0
        %v316 = vld [vmem:[%s259] sm:$0xff]
        %v317 = vld [vmem:[%s259 + $0x8] sm:$0xff]
        %v318 = vld [vmem:[%s259 + $0x10] sm:$0xff]
        %v319 = vld [vmem:[%s259 + $0x18] sm:$0xff]
        %v320 = vld [vmem:[%s259 + $0x20] sm:$0xff]
        %v321 = vld [vmem:[%s259 + $0x28] sm:$0xff]
        %v322 = vld [vmem:[%s259 + $0x30] sm:$0xff]
        %v323 = vld [vmem:[%s259 + $0x38] sm:$0xff]
        %v324 = vld [vmem:[%s259 + $0x40] sm:$0xff]
        %v325 = vld [vmem:[%s259 + $0x48] sm:$0xff]
        %v326 = vld [vmem:[%s259 + $0x50] sm:$0xff]
        %v327 = vld [vmem:[%s259 + $0x58] sm:$0xff]
        %v328 = vld [vmem:[%s259 + $0x60] sm:$0xff]
        %v329 = vld [vmem:[%s259 + $0x68] sm:$0xff]
        %v330 = vld [vmem:[%s259 + $0x70] sm:$0xff]
        %v331 = vld [vmem:[%s259 + $0x78] sm:$0xff]
        %v332 = vld [vmem:[%s259 + $0x80] sm:$0xff]
        %v333 = vld [vmem:[%s259 + $0x88] sm:$0xff]
        %v334 = vld [vmem:[%s259 + $0x90] sm:$0xff]
        %v335 = vld [vmem:[%s259 + $0x98] sm:$0xff]
        %v336 = vld [vmem:[%s259 + $0xa0] sm:$0xff]
        %v337 = vld [vmem:[%s259 + $0xa8] sm:$0xff]
        %v338 = vld [vmem:[%s259 + $0xb0] sm:$0xff]
        %v339 = vld [vmem:[%s259 + $0xb8] sm:$0xff]
        %v340 = vld [vmem:[%s259 + $0xc0] sm:$0xff]
        %v341 = vld [vmem:[%s259 + $0xc8] sm:$0xff]
        %v342 = vld [vmem:[%s259 + $0xd0] sm:$0xff]
        %v343 = vld [vmem:[%s259 + $0xd8] sm:$0xff]
        %v344 = vld [vmem:[%s259 + $0xe0] sm:$0xff]
        %v345 = vld [vmem:[%s259 + $0xe8] sm:$0xff]
        %v346 = vld [vmem:[%s259 + $0xf0] sm:$0xff]
        %v347 = vld [vmem:[%s259 + $0xf8] sm:$0xff]
        %s348 = scalar_lea.vmem [#allocation2], 24
        %349 = vst.msk [vmem:[%s348 + $0x1] sm:$0xff] %vm260, %v316
        %350 = vst.msk [vmem:[%s348 + $0x9] sm:$0xff] %vm260, %v317
        %351 = vst.msk [vmem:[%s348 + $0x19] sm:$0xff] %vm260, %v318
        %352 = vst.msk [vmem:[%s348 + $0x21] sm:$0xff] %vm260, %v319
        %353 = vst.msk [vmem:[%s348 + $0x31] sm:$0xff] %vm260, %v320
        %354 = vst.msk [vmem:[%s348 + $0x39] sm:$0xff] %vm260, %v321
        %355 = vst.msk [vmem:[%s348 + $0x49] sm:$0xff] %vm260, %v322
        %356 = vst.msk [vmem:[%s348 + $0x51] sm:$0xff] %vm260, %v323
        %357 = vst.msk [vmem:[%s348 + $0x61] sm:$0xff] %vm260, %v324
        %358 = vst.msk [vmem:[%s348 + $0x69] sm:$0xff] %vm260, %v325
        %359 = vst.msk [vmem:[%s348 + $0x79] sm:$0xff] %vm260, %v326
        %360 = vst.msk [vmem:[%s348 + $0x81] sm:$0xff] %vm260, %v327
        %361 = vst.msk [vmem:[%s348 + $0x91] sm:$0xff] %vm260, %v328
        %362 = vst.msk [vmem:[%s348 + $0x99] sm:$0xff] %vm260, %v329
        %363 = vst.msk [vmem:[%s348 + $0xa9] sm:$0xff] %vm260, %v330
        %364 = vst.msk [vmem:[%s348 + $0xb1] sm:$0xff] %vm260, %v331
        %365 = vst.msk [vmem:[%s348 + $0xc1] sm:$0xff] %vm260, %v332
        %366 = vst.msk [vmem:[%s348 + $0xc9] sm:$0xff] %vm260, %v333
        %367 = vst.msk [vmem:[%s348 + $0xd9] sm:$0xff] %vm260, %v334
        %368 = vst.msk [vmem:[%s348 + $0xe1] sm:$0xff] %vm260, %v335
        %369 = vst.msk [vmem:[%s348 + $0xf1] sm:$0xff] %vm260, %v336
        %370 = vst.msk [vmem:[%s348 + $0xf9] sm:$0xff] %vm260, %v337
        %371 = vst.msk [vmem:[%s348 + $0x109] sm:$0xff] %vm260, %v338
        %372 = vst.msk [vmem:[%s348 + $0x111] sm:$0xff] %vm260, %v339
        %373 = vst.msk [vmem:[%s348 + $0x121] sm:$0xff] %vm260, %v340
        %374 = vst.msk [vmem:[%s348 + $0x129] sm:$0xff] %vm260, %v341
        %375 = vst.msk [vmem:[%s348 + $0x139] sm:$0xff] %vm260, %v342
        %376 = vst.msk [vmem:[%s348 + $0x141] sm:$0xff] %vm260, %v343
        %377 = vst.msk [vmem:[%s348 + $0x151] sm:$0xff] %vm260, %v344
        %378 = vst.msk [vmem:[%s348 + $0x159] sm:$0xff] %vm260, %v345
        %379 = vst.msk [vmem:[%s348 + $0x169] sm:$0xff] %vm260, %v346
        %380 = vst.msk [vmem:[%s348 + $0x171] sm:$0xff] %vm260, %v347
        %v381 = vld [vmem:[#allocation2] sm:$0xff]
        %v382 = vld [vmem:[#allocation2 + $0x8] sm:$0xff]
        %v383 = vld [vmem:[#allocation2 + $0x10] sm:$0x3]
        %v384 = vld [vmem:[#allocation2 + $0x18] sm:$0xff]
        %v385 = vld [vmem:[#allocation2 + $0x20] sm:$0xff]
        %v386 = vld [vmem:[#allocation2 + $0x28] sm:$0x3]
        %v387 = vld [vmem:[#allocation2 + $0x30] sm:$0xff]
        %v388 = vld [vmem:[#allocation2 + $0x38] sm:$0xff]
        %v389 = vld [vmem:[#allocation2 + $0x40] sm:$0x3]
        %v390 = vld [vmem:[#allocation2 + $0x48] sm:$0xff]
        %v391 = vld [vmem:[#allocation2 + $0x50] sm:$0xff]
        %v392 = vld [vmem:[#allocation2 + $0x58] sm:$0x3]
        %v393 = vld [vmem:[#allocation2 + $0x60] sm:$0xff]
        %v394 = vld [vmem:[#allocation2 + $0x68] sm:$0xff]
        %v395 = vld [vmem:[#allocation2 + $0x70] sm:$0x3]
        %v396 = vld [vmem:[#allocation2 + $0x78] sm:$0xff]
        %v397 = vld [vmem:[#allocation2 + $0x80] sm:$0xff]
        %v398 = vld [vmem:[#allocation2 + $0x88] sm:$0x3]
        %v399 = vld [vmem:[#allocation2 + $0x90] sm:$0xff]
        %v400 = vld [vmem:[#allocation2 + $0x98] sm:$0xff]
        %v401 = vld [vmem:[#allocation2 + $0xa0] sm:$0x3]
        %v402 = vld [vmem:[#allocation2 + $0xa8] sm:$0xff]
        %v403 = vld [vmem:[#allocation2 + $0xb0] sm:$0xff]
        %v404 = vld [vmem:[#allocation2 + $0xb8] sm:$0x3]
        %v405 = vld [vmem:[#allocation2 + $0xc0] sm:$0xff]
        %v406 = vld [vmem:[#allocation2 + $0xc8] sm:$0xff]
        %v407 = vld [vmem:[#allocation2 + $0xd0] sm:$0x3]
        %v408 = vld [vmem:[#allocation2 + $0xd8] sm:$0xff]
        %v409 = vld [vmem:[#allocation2 + $0xe0] sm:$0xff]
        %v410 = vld [vmem:[#allocation2 + $0xe8] sm:$0x3]
        %v411 = vld [vmem:[#allocation2 + $0xf0] sm:$0xff]
        %v412 = vld [vmem:[#allocation2 + $0xf8] sm:$0xff]
        %v413 = vld [vmem:[#allocation2 + $0x100] sm:$0x3]
        %v414 = vld [vmem:[#allocation2 + $0x108] sm:$0xff]
        %v415 = vld [vmem:[#allocation2 + $0x110] sm:$0xff]
        %v416 = vld [vmem:[#allocation2 + $0x118] sm:$0x3]
        %v417 = vld [vmem:[#allocation2 + $0x120] sm:$0xff]
        %v418 = vld [vmem:[#allocation2 + $0x128] sm:$0xff]
        %v419 = vld [vmem:[#allocation2 + $0x130] sm:$0x3]
        %v420 = vld [vmem:[#allocation2 + $0x138] sm:$0xff]
        %v421 = vld [vmem:[#allocation2 + $0x140] sm:$0xff]
        %v422 = vld [vmem:[#allocation2 + $0x148] sm:$0x3]
        %v423 = vld [vmem:[#allocation2 + $0x150] sm:$0xff]
        %v424 = vld [vmem:[#allocation2 + $0x158] sm:$0xff]
        %v425 = vld [vmem:[#allocation2 + $0x160] sm:$0x3]
        %v426 = vld [vmem:[#allocation2 + $0x168] sm:$0xff]
        %v427 = vld [vmem:[#allocation2 + $0x170] sm:$0xff]
        %v428 = vld [vmem:[#allocation2 + $0x178] sm:$0x3]
        %v429 = vld [vmem:[#allocation2 + $0x180] sm:$0xff]
        %v430 = vld [vmem:[#allocation2 + $0x188] sm:$0xff]
        %v431 = vld [vmem:[#allocation2 + $0x190] sm:$0x3]
        %v432 = vld [vmem:[#allocation2 + $0x198] sm:$0xff]
        %v433 = vld [vmem:[#allocation2 + $0x1a0] sm:$0xff]
        %v434 = vld [vmem:[#allocation2 + $0x1a8] sm:$0x3]
        %vm483 = vcmask 1046528
        %v484 = vrot.slane %v381, 1
        %v485 = vrot.slane %v382, 1
        %v486 = vsel %vm483, %v484, %v485
        %v487 = vrot.slane %v383, 1
        %v488 = vsel %vm483, %v485, %v487
        %v489 = vrot.slane %v384, 1
        %v490 = vrot.slane %v385, 1
        %v491 = vsel %vm483, %v489, %v490
        %v492 = vrot.slane %v386, 1
        %v493 = vsel %vm483, %v490, %v492
        %v494 = vrot.slane %v387, 1
        %v495 = vrot.slane %v388, 1
        %v496 = vsel %vm483, %v494, %v495
        %v497 = vrot.slane %v389, 1
        %v498 = vsel %vm483, %v495, %v497
        %v499 = vrot.slane %v390, 1
        %v500 = vrot.slane %v391, 1
        %v501 = vsel %vm483, %v499, %v500
        %v502 = vrot.slane %v392, 1
        %v503 = vsel %vm483, %v500, %v502
        %v504 = vrot.slane %v393, 1
        %v505 = vrot.slane %v394, 1
        %v506 = vsel %vm483, %v504, %v505
        %v507 = vrot.slane %v395, 1
        %v508 = vsel %vm483, %v505, %v507
        %v509 = vrot.slane %v396, 1
        %v510 = vrot.slane %v397, 1
        %v511 = vsel %vm483, %v509, %v510
        %v512 = vrot.slane %v398, 1
        %v513 = vsel %vm483, %v510, %v512
        %v514 = vrot.slane %v399, 1
        %v515 = vrot.slane %v400, 1
        %v516 = vsel %vm483, %v514, %v515
        %v517 = vrot.slane %v401, 1
        %v518 = vsel %vm483, %v515, %v517
        %v519 = vrot.slane %v402, 1
        %v520 = vrot.slane %v403, 1
        %v521 = vsel %vm483, %v519, %v520
        %v522 = vrot.slane %v404, 1
        %v523 = vsel %vm483, %v520, %v522
        %v524 = vrot.slane %v405, 1
        %v525 = vrot.slane %v406, 1
        %v526 = vsel %vm483, %v524, %v525
        %v527 = vrot.slane %v407, 1
        %v528 = vsel %vm483, %v525, %v527
        %v529 = vrot.slane %v408, 1
        %v530 = vrot.slane %v409, 1
        %v531 = vsel %vm483, %v529, %v530
        %v532 = vrot.slane %v410, 1
        %v533 = vsel %vm483, %v530, %v532
        %v534 = vrot.slane %v411, 1
        %v535 = vrot.slane %v412, 1
        %v536 = vsel %vm483, %v534, %v535
        %v537 = vrot.slane %v413, 1
        %v538 = vsel %vm483, %v535, %v537
        %v539 = vrot.slane %v414, 1
        %v540 = vrot.slane %v415, 1
        %v541 = vsel %vm483, %v539, %v540
        %v542 = vrot.slane %v416, 1
        %v543 = vsel %vm483, %v540, %v542
        %v544 = vrot.slane %v417, 1
        %v545 = vrot.slane %v418, 1
        %v546 = vsel %vm483, %v544, %v545
        %v547 = vrot.slane %v419, 1
        %v548 = vsel %vm483, %v545, %v547
        %v549 = vrot.slane %v420, 1
        %v550 = vrot.slane %v421, 1
        %v551 = vsel %vm483, %v549, %v550
        %v552 = vrot.slane %v422, 1
        %v553 = vsel %vm483, %v550, %v552
        %v554 = vrot.slane %v423, 1
        %v555 = vrot.slane %v424, 1
        %v556 = vsel %vm483, %v554, %v555
        %v557 = vrot.slane %v425, 1
        %v558 = vsel %vm483, %v555, %v557
        %v559 = vrot.slane %v426, 1
        %v560 = vrot.slane %v427, 1
        %v561 = vsel %vm483, %v559, %v560
        %v562 = vrot.slane %v428, 1
        %v563 = vsel %vm483, %v560, %v562
        %564 = vrot.lane.b32.xlu0 %v486, 4
        %v565 = vpop.permute.xlu0 %564
        %566 = vrot.lane.b32.xlu0 %v488, 4
        %v567 = vpop.permute.xlu0 %566
        %568 = vrot.lane.b32.xlu0 %v491, 4
        %v569 = vpop.permute.xlu0 %568
        %570 = vrot.lane.b32.xlu0 %v493, 4
        %v571 = vpop.permute.xlu0 %570
        %572 = vrot.lane.b32.xlu0 %v496, 4
        %v573 = vpop.permute.xlu0 %572
        %574 = vrot.lane.b32.xlu0 %v498, 4
        %v575 = vpop.permute.xlu0 %574
        %576 = vrot.lane.b32.xlu0 %v501, 4
        %v577 = vpop.permute.xlu0 %576
        %578 = vrot.lane.b32.xlu0 %v503, 4
        %v579 = vpop.permute.xlu0 %578
        %580 = vrot.lane.b32.xlu0 %v506, 4
        %v581 = vpop.permute.xlu0 %580
        %582 = vrot.lane.b32.xlu0 %v508, 4
        %v583 = vpop.permute.xlu0 %582
        %584 = vrot.lane.b32.xlu0 %v511, 4
        %v585 = vpop.permute.xlu0 %584
        %586 = vrot.lane.b32.xlu0 %v513, 4
        %v587 = vpop.permute.xlu0 %586
        %588 = vrot.lane.b32.xlu0 %v516, 4
        %v589 = vpop.permute.xlu0 %588
        %590 = vrot.lane.b32.xlu0 %v518, 4
        %v591 = vpop.permute.xlu0 %590
        %592 = vrot.lane.b32.xlu0 %v521, 4
        %v593 = vpop.permute.xlu0 %592
        %594 = vrot.lane.b32.xlu0 %v523, 4
        %v595 = vpop.permute.xlu0 %594
        %596 = vrot.lane.b32.xlu0 %v526, 4
        %v597 = vpop.permute.xlu0 %596
        %598 = vrot.lane.b32.xlu0 %v528, 4
        %v599 = vpop.permute.xlu0 %598
        %600 = vrot.lane.b32.xlu0 %v531, 4
        %v601 = vpop.permute.xlu0 %600
        %602 = vrot.lane.b32.xlu0 %v533, 4
        %v603 = vpop.permute.xlu0 %602
        %604 = vrot.lane.b32.xlu0 %v536, 4
        %v605 = vpop.permute.xlu0 %604
        %606 = vrot.lane.b32.xlu0 %v538, 4
        %v607 = vpop.permute.xlu0 %606
        %608 = vrot.lane.b32.xlu0 %v541, 4
        %v609 = vpop.permute.xlu0 %608
        %610 = vrot.lane.b32.xlu0 %v543, 4
        %v611 = vpop.permute.xlu0 %610
        %612 = vrot.lane.b32.xlu0 %v546, 4
        %v613 = vpop.permute.xlu0 %612
        %614 = vrot.lane.b32.xlu0 %v548, 4
        %v615 = vpop.permute.xlu0 %614
        %616 = vrot.lane.b32.xlu0 %v551, 4
        %v617 = vpop.permute.xlu0 %616
        %618 = vrot.lane.b32.xlu0 %v553, 4
        %v619 = vpop.permute.xlu0 %618
        %620 = vrot.lane.b32.xlu0 %v556, 4
        %v621 = vpop.permute.xlu0 %620
        %622 = vrot.lane.b32.xlu0 %v558, 4
        %v623 = vpop.permute.xlu0 %622
        %624 = vrot.lane.b32.xlu0 %v561, 4
        %v625 = vpop.permute.xlu0 %624
        %626 = vrot.lane.b32.xlu0 %v563, 4
        %v627 = vpop.permute.xlu0 %626
        %vm660 = vcmask 1045504
        %v661 = vrot.slane %v381, 2
        %v662 = vrot.slane %v382, 2
        %v663 = vsel %vm660, %v661, %v662
        %v664 = vrot.slane %v383, 2
        %v665 = vsel %vm660, %v662, %v664
        %v666 = vrot.slane %v384, 2
        %v667 = vrot.slane %v385, 2
        %v668 = vsel %vm660, %v666, %v667
        %v669 = vrot.slane %v386, 2
        %v670 = vsel %vm660, %v667, %v669
        %v671 = vrot.slane %v387, 2
        %v672 = vrot.slane %v388, 2
        %v673 = vsel %vm660, %v671, %v672
        %v674 = vrot.slane %v389, 2
        %v675 = vsel %vm660, %v672, %v674
        %v676 = vrot.slane %v390, 2
        %v677 = vrot.slane %v391, 2
        %v678 = vsel %vm660, %v676, %v677
        %v679 = vrot.slane %v392, 2
        %v680 = vsel %vm660, %v677, %v679
        %v681 = vrot.slane %v393, 2
        %v682 = vrot.slane %v394, 2
        %v683 = vsel %vm660, %v681, %v682
        %v684 = vrot.slane %v395, 2
        %v685 = vsel %vm660, %v682, %v684
        %v686 = vrot.slane %v396, 2
        %v687 = vrot.slane %v397, 2
        %v688 = vsel %vm660, %v686, %v687
        %v689 = vrot.slane %v398, 2
        %v690 = vsel %vm660, %v687, %v689
        %v691 = vrot.slane %v399, 2
        %v692 = vrot.slane %v400, 2
        %v693 = vsel %vm660, %v691, %v692
        %v694 = vrot.slane %v401, 2
        %v695 = vsel %vm660, %v692, %v694
        %v696 = vrot.slane %v402, 2
        %v697 = vrot.slane %v403, 2
        %v698 = vsel %vm660, %v696, %v697
        %v699 = vrot.slane %v404, 2
        %v700 = vsel %vm660, %v697, %v699
        %v701 = vrot.slane %v405, 2
        %v702 = vrot.slane %v406, 2
        %v703 = vsel %vm660, %v701, %v702
        %v704 = vrot.slane %v407, 2
        %v705 = vsel %vm660, %v702, %v704
        %v706 = vrot.slane %v408, 2
        %v707 = vrot.slane %v409, 2
        %v708 = vsel %vm660, %v706, %v707
        %v709 = vrot.slane %v410, 2
        %v710 = vsel %vm660, %v707, %v709
        %v711 = vrot.slane %v411, 2
        %v712 = vrot.slane %v412, 2
        %v713 = vsel %vm660, %v711, %v712
        %v714 = vrot.slane %v413, 2
        %v715 = vsel %vm660, %v712, %v714
        %v716 = vrot.slane %v414, 2
        %v717 = vrot.slane %v415, 2
        %v718 = vsel %vm660, %v716, %v717
        %v719 = vrot.slane %v416, 2
        %v720 = vsel %vm660, %v717, %v719
        %v721 = vrot.slane %v417, 2
        %v722 = vrot.slane %v418, 2
        %v723 = vsel %vm660, %v721, %v722
        %v724 = vrot.slane %v419, 2
        %v725 = vsel %vm660, %v722, %v724
        %v726 = vrot.slane %v420, 2
        %v727 = vrot.slane %v421, 2
        %v728 = vsel %vm660, %v726, %v727
        %v729 = vrot.slane %v422, 2
        %v730 = vsel %vm660, %v727, %v729
        %v731 = vrot.slane %v423, 2
        %v732 = vrot.slane %v424, 2
        %v733 = vsel %vm660, %v731, %v732
        %v734 = vrot.slane %v425, 2
        %v735 = vsel %vm660, %v732, %v734
        %v736 = vrot.slane %v426, 2
        %v737 = vrot.slane %v427, 2
        %v738 = vsel %vm660, %v736, %v737
        %v739 = vrot.slane %v428, 2
        %v740 = vsel %vm660, %v737, %v739
        %741 = vrot.lane.b32.xlu0 %v663, 8
        %v742 = vpop.permute.xlu0 %741
        %743 = vrot.lane.b32.xlu0 %v665, 8
        %v744 = vpop.permute.xlu0 %743
        %745 = vrot.lane.b32.xlu0 %v668, 8
        %v746 = vpop.permute.xlu0 %745
        %747 = vrot.lane.b32.xlu0 %v670, 8
        %v748 = vpop.permute.xlu0 %747
        %749 = vrot.lane.b32.xlu0 %v673, 8
        %v750 = vpop.permute.xlu0 %749
        %751 = vrot.lane.b32.xlu0 %v675, 8
        %v752 = vpop.permute.xlu0 %751
        %753 = vrot.lane.b32.xlu0 %v678, 8
        %v754 = vpop.permute.xlu0 %753
        %755 = vrot.lane.b32.xlu0 %v680, 8
        %v756 = vpop.permute.xlu0 %755
        %757 = vrot.lane.b32.xlu0 %v683, 8
        %v758 = vpop.permute.xlu0 %757
        %759 = vrot.lane.b32.xlu0 %v685, 8
        %v760 = vpop.permute.xlu0 %759
        %761 = vrot.lane.b32.xlu0 %v688, 8
        %v762 = vpop.permute.xlu0 %761
        %763 = vrot.lane.b32.xlu0 %v690, 8
        %v764 = vpop.permute.xlu0 %763
        %765 = vrot.lane.b32.xlu0 %v693, 8
        %v766 = vpop.permute.xlu0 %765
        %767 = vrot.lane.b32.xlu0 %v695, 8
        %v768 = vpop.permute.xlu0 %767
        %769 = vrot.lane.b32.xlu0 %v698, 8
        %v770 = vpop.permute.xlu0 %769
        %771 = vrot.lane.b32.xlu0 %v700, 8
        %v772 = vpop.permute.xlu0 %771
        %773 = vrot.lane.b32.xlu0 %v703, 8
        %v774 = vpop.permute.xlu0 %773
        %775 = vrot.lane.b32.xlu0 %v705, 8
        %v776 = vpop.permute.xlu0 %775
        %777 = vrot.lane.b32.xlu0 %v708, 8
        %v778 = vpop.permute.xlu0 %777
        %779 = vrot.lane.b32.xlu0 %v710, 8
        %v780 = vpop.permute.xlu0 %779
        %781 = vrot.lane.b32.xlu0 %v713, 8
        %v782 = vpop.permute.xlu0 %781
        %783 = vrot.lane.b32.xlu0 %v715, 8
        %v784 = vpop.permute.xlu0 %783
        %785 = vrot.lane.b32.xlu0 %v718, 8
        %v786 = vpop.permute.xlu0 %785
        %787 = vrot.lane.b32.xlu0 %v720, 8
        %v788 = vpop.permute.xlu0 %787
        %789 = vrot.lane.b32.xlu0 %v723, 8
        %v790 = vpop.permute.xlu0 %789
        %791 = vrot.lane.b32.xlu0 %v725, 8
        %v792 = vpop.permute.xlu0 %791
        %793 = vrot.lane.b32.xlu0 %v728, 8
        %v794 = vpop.permute.xlu0 %793
        %795 = vrot.lane.b32.xlu0 %v730, 8
        %v796 = vpop.permute.xlu0 %795
        %797 = vrot.lane.b32.xlu0 %v733, 8
        %v798 = vpop.permute.xlu0 %797
        %799 = vrot.lane.b32.xlu0 %v735, 8
        %v800 = vpop.permute.xlu0 %799
        %801 = vrot.lane.b32.xlu0 %v738, 8
        %v802 = vpop.permute.xlu0 %801
        %803 = vrot.lane.b32.xlu0 %v740, 8
        %v804 = vpop.permute.xlu0 %803
        %839 = vrot.lane.b32.xlu0 %v384, 12
        %v840 = vpop.permute.xlu0 %839
        %841 = vrot.lane.b32.xlu0 %v385, 12
        %v842 = vpop.permute.xlu0 %841
        %843 = vrot.lane.b32.xlu0 %v387, 12
        %v844 = vpop.permute.xlu0 %843
        %845 = vrot.lane.b32.xlu0 %v388, 12
        %v846 = vpop.permute.xlu0 %845
        %847 = vrot.lane.b32.xlu0 %v390, 12
        %v848 = vpop.permute.xlu0 %847
        %849 = vrot.lane.b32.xlu0 %v391, 12
        %v850 = vpop.permute.xlu0 %849
        %851 = vrot.lane.b32.xlu0 %v393, 12
        %v852 = vpop.permute.xlu0 %851
        %853 = vrot.lane.b32.xlu0 %v394, 12
        %v854 = vpop.permute.xlu0 %853
        %855 = vrot.lane.b32.xlu0 %v396, 12
        %v856 = vpop.permute.xlu0 %855
        %857 = vrot.lane.b32.xlu0 %v397, 12
        %v858 = vpop.permute.xlu0 %857
        %859 = vrot.lane.b32.xlu0 %v399, 12
        %v860 = vpop.permute.xlu0 %859
        %861 = vrot.lane.b32.xlu0 %v400, 12
        %v862 = vpop.permute.xlu0 %861
        %863 = vrot.lane.b32.xlu0 %v402, 12
        %v864 = vpop.permute.xlu0 %863
        %865 = vrot.lane.b32.xlu0 %v403, 12
        %v866 = vpop.permute.xlu0 %865
        %867 = vrot.lane.b32.xlu0 %v405, 12
        %v868 = vpop.permute.xlu0 %867
        %869 = vrot.lane.b32.xlu0 %v406, 12
        %v870 = vpop.permute.xlu0 %869
        %871 = vrot.lane.b32.xlu0 %v408, 12
        %v872 = vpop.permute.xlu0 %871
        %873 = vrot.lane.b32.xlu0 %v409, 12
        %v874 = vpop.permute.xlu0 %873
        %875 = vrot.lane.b32.xlu0 %v411, 12
        %v876 = vpop.permute.xlu0 %875
        %877 = vrot.lane.b32.xlu0 %v412, 12
        %v878 = vpop.permute.xlu0 %877
        %879 = vrot.lane.b32.xlu0 %v414, 12
        %v880 = vpop.permute.xlu0 %879
        %881 = vrot.lane.b32.xlu0 %v415, 12
        %v882 = vpop.permute.xlu0 %881
        %883 = vrot.lane.b32.xlu0 %v417, 12
        %v884 = vpop.permute.xlu0 %883
        %885 = vrot.lane.b32.xlu0 %v418, 12
        %v886 = vpop.permute.xlu0 %885
        %887 = vrot.lane.b32.xlu0 %v420, 12
        %v888 = vpop.permute.xlu0 %887
        %889 = vrot.lane.b32.xlu0 %v421, 12
        %v890 = vpop.permute.xlu0 %889
        %891 = vrot.lane.b32.xlu0 %v423, 12
        %v892 = vpop.permute.xlu0 %891
        %893 = vrot.lane.b32.xlu0 %v424, 12
        %v894 = vpop.permute.xlu0 %893
        %895 = vrot.lane.b32.xlu0 %v426, 12
        %v896 = vpop.permute.xlu0 %895
        %897 = vrot.lane.b32.xlu0 %v427, 12
        %v898 = vpop.permute.xlu0 %897
        %899 = vrot.lane.b32.xlu0 %v429, 12
        %v900 = vpop.permute.xlu0 %899
        %901 = vrot.lane.b32.xlu0 %v430, 12
        %v902 = vpop.permute.xlu0 %901
        %v936 = vrot.slane %v429, 1
        %v937 = vrot.slane %v430, 1
        %v938 = vsel %vm483, %v936, %v937
        %v939 = vrot.slane %v431, 1
        %v940 = vsel %vm483, %v937, %v939
        %941 = vrot.lane.b32.xlu0 %v491, 16
        %v942 = vpop.permute.xlu0 %941
        %943 = vrot.lane.b32.xlu0 %v493, 16
        %v944 = vpop.permute.xlu0 %943
        %945 = vrot.lane.b32.xlu0 %v496, 16
        %v946 = vpop.permute.xlu0 %945
        %947 = vrot.lane.b32.xlu0 %v498, 16
        %v948 = vpop.permute.xlu0 %947
        %949 = vrot.lane.b32.xlu0 %v501, 16
        %v950 = vpop.permute.xlu0 %949
        %951 = vrot.lane.b32.xlu0 %v503, 16
        %v952 = vpop.permute.xlu0 %951
        %953 = vrot.lane.b32.xlu0 %v506, 16
        %v954 = vpop.permute.xlu0 %953
        %955 = vrot.lane.b32.xlu0 %v508, 16
        %v956 = vpop.permute.xlu0 %955
        %957 = vrot.lane.b32.xlu0 %v511, 16
        %v958 = vpop.permute.xlu0 %957
        %959 = vrot.lane.b32.xlu0 %v513, 16
        %v960 = vpop.permute.xlu0 %959
        %961 = vrot.lane.b32.xlu0 %v516, 16
        %v962 = vpop.permute.xlu0 %961
        %963 = vrot.lane.b32.xlu0 %v518, 16
        %v964 = vpop.permute.xlu0 %963
        %965 = vrot.lane.b32.xlu0 %v521, 16
        %v966 = vpop.permute.xlu0 %965
        %967 = vrot.lane.b32.xlu0 %v523, 16
        %v968 = vpop.permute.xlu0 %967
        %969 = vrot.lane.b32.xlu0 %v526, 16
        %v970 = vpop.permute.xlu0 %969
        %971 = vrot.lane.b32.xlu0 %v528, 16
        %v972 = vpop.permute.xlu0 %971
        %973 = vrot.lane.b32.xlu0 %v531, 16
        %v974 = vpop.permute.xlu0 %973
        %975 = vrot.lane.b32.xlu0 %v533, 16
        %v976 = vpop.permute.xlu0 %975
        %977 = vrot.lane.b32.xlu0 %v536, 16
        %v978 = vpop.permute.xlu0 %977
        %979 = vrot.lane.b32.xlu0 %v538, 16
        %v980 = vpop.permute.xlu0 %979
        %981 = vrot.lane.b32.xlu0 %v541, 16
        %v982 = vpop.permute.xlu0 %981
        %983 = vrot.lane.b32.xlu0 %v543, 16
        %v984 = vpop.permute.xlu0 %983
        %985 = vrot.lane.b32.xlu0 %v546, 16
        %v986 = vpop.permute.xlu0 %985
        %987 = vrot.lane.b32.xlu0 %v548, 16
        %v988 = vpop.permute.xlu0 %987
        %989 = vrot.lane.b32.xlu0 %v551, 16
        %v990 = vpop.permute.xlu0 %989
        %991 = vrot.lane.b32.xlu0 %v553, 16
        %v992 = vpop.permute.xlu0 %991
        %993 = vrot.lane.b32.xlu0 %v556, 16
        %v994 = vpop.permute.xlu0 %993
        %995 = vrot.lane.b32.xlu0 %v558, 16
        %v996 = vpop.permute.xlu0 %995
        %997 = vrot.lane.b32.xlu0 %v561, 16
        %v998 = vpop.permute.xlu0 %997
        %999 = vrot.lane.b32.xlu0 %v563, 16
        %v1000 = vpop.permute.xlu0 %999
        %1001 = vrot.lane.b32.xlu0 %v938, 16
        %v1002 = vpop.permute.xlu0 %1001
        %1003 = vrot.lane.b32.xlu0 %v940, 16
        %v1004 = vpop.permute.xlu0 %1003
        %v1037 = vrot.slane %v429, 2
        %v1038 = vrot.slane %v430, 2
        %v1039 = vsel %vm660, %v1037, %v1038
        %v1040 = vrot.slane %v431, 2
        %v1041 = vsel %vm660, %v1038, %v1040
        %1042 = vrot.lane.b32.xlu0 %v668, 20
        %v1043 = vpop.permute.xlu0 %1042
        %1044 = vrot.lane.b32.xlu0 %v670, 20
        %v1045 = vpop.permute.xlu0 %1044
        %1046 = vrot.lane.b32.xlu0 %v673, 20
        %v1047 = vpop.permute.xlu0 %1046
        %1048 = vrot.lane.b32.xlu0 %v675, 20
        %v1049 = vpop.permute.xlu0 %1048
        %1050 = vrot.lane.b32.xlu0 %v678, 20
        %v1051 = vpop.permute.xlu0 %1050
        %1052 = vrot.lane.b32.xlu0 %v680, 20
        %v1053 = vpop.permute.xlu0 %1052
        %1054 = vrot.lane.b32.xlu0 %v683, 20
        %v1055 = vpop.permute.xlu0 %1054
        %1056 = vrot.lane.b32.xlu0 %v685, 20
        %v1057 = vpop.permute.xlu0 %1056
        %1058 = vrot.lane.b32.xlu0 %v688, 20
        %v1059 = vpop.permute.xlu0 %1058
        %1060 = vrot.lane.b32.xlu0 %v690, 20
        %v1061 = vpop.permute.xlu0 %1060
        %1062 = vrot.lane.b32.xlu0 %v693, 20
        %v1063 = vpop.permute.xlu0 %1062
        %1064 = vrot.lane.b32.xlu0 %v695, 20
        %v1065 = vpop.permute.xlu0 %1064
        %1066 = vrot.lane.b32.xlu0 %v698, 20
        %v1067 = vpop.permute.xlu0 %1066
        %1068 = vrot.lane.b32.xlu0 %v700, 20
        %v1069 = vpop.permute.xlu0 %1068
        %1070 = vrot.lane.b32.xlu0 %v703, 20
        %v1071 = vpop.permute.xlu0 %1070
        %1072 = vrot.lane.b32.xlu0 %v705, 20
        %v1073 = vpop.permute.xlu0 %1072
        %1074 = vrot.lane.b32.xlu0 %v708, 20
        %v1075 = vpop.permute.xlu0 %1074
        %1076 = vrot.lane.b32.xlu0 %v710, 20
        %v1077 = vpop.permute.xlu0 %1076
        %1078 = vrot.lane.b32.xlu0 %v713, 20
        %v1079 = vpop.permute.xlu0 %1078
        %1080 = vrot.lane.b32.xlu0 %v715, 20
        %v1081 = vpop.permute.xlu0 %1080
        %1082 = vrot.lane.b32.xlu0 %v718, 20
        %v1083 = vpop.permute.xlu0 %1082
        %1084 = vrot.lane.b32.xlu0 %v720, 20
        %v1085 = vpop.permute.xlu0 %1084
        %1086 = vrot.lane.b32.xlu0 %v723, 20
        %v1087 = vpop.permute.xlu0 %1086
        %1088 = vrot.lane.b32.xlu0 %v725, 20
        %v1089 = vpop.permute.xlu0 %1088
        %1090 = vrot.lane.b32.xlu0 %v728, 20
        %v1091 = vpop.permute.xlu0 %1090
        %1092 = vrot.lane.b32.xlu0 %v730, 20
        %v1093 = vpop.permute.xlu0 %1092
        %1094 = vrot.lane.b32.xlu0 %v733, 20
        %v1095 = vpop.permute.xlu0 %1094
        %1096 = vrot.lane.b32.xlu0 %v735, 20
        %v1097 = vpop.permute.xlu0 %1096
        %1098 = vrot.lane.b32.xlu0 %v738, 20
        %v1099 = vpop.permute.xlu0 %1098
        %1100 = vrot.lane.b32.xlu0 %v740, 20
        %v1101 = vpop.permute.xlu0 %1100
        %1102 = vrot.lane.b32.xlu0 %v1039, 20
        %v1103 = vpop.permute.xlu0 %1102
        %1104 = vrot.lane.b32.xlu0 %v1041, 20
        %v1105 = vpop.permute.xlu0 %1104
        %1140 = vrot.lane.b32.xlu0 %v387, 24
        %v1141 = vpop.permute.xlu0 %1140
        %1142 = vrot.lane.b32.xlu0 %v388, 24
        %v1143 = vpop.permute.xlu0 %1142
        %1144 = vrot.lane.b32.xlu0 %v390, 24
        %v1145 = vpop.permute.xlu0 %1144
        %1146 = vrot.lane.b32.xlu0 %v391, 24
        %v1147 = vpop.permute.xlu0 %1146
        %1148 = vrot.lane.b32.xlu0 %v393, 24
        %v1149 = vpop.permute.xlu0 %1148
        %1150 = vrot.lane.b32.xlu0 %v394, 24
        %v1151 = vpop.permute.xlu0 %1150
        %1152 = vrot.lane.b32.xlu0 %v396, 24
        %v1153 = vpop.permute.xlu0 %1152
        %1154 = vrot.lane.b32.xlu0 %v397, 24
        %v1155 = vpop.permute.xlu0 %1154
        %1156 = vrot.lane.b32.xlu0 %v399, 24
        %v1157 = vpop.permute.xlu0 %1156
        %1158 = vrot.lane.b32.xlu0 %v400, 24
        %v1159 = vpop.permute.xlu0 %1158
        %1160 = vrot.lane.b32.xlu0 %v402, 24
        %v1161 = vpop.permute.xlu0 %1160
        %1162 = vrot.lane.b32.xlu0 %v403, 24
        %v1163 = vpop.permute.xlu0 %1162
        %1164 = vrot.lane.b32.xlu0 %v405, 24
        %v1165 = vpop.permute.xlu0 %1164
        %1166 = vrot.lane.b32.xlu0 %v406, 24
        %v1167 = vpop.permute.xlu0 %1166
        %1168 = vrot.lane.b32.xlu0 %v408, 24
        %v1169 = vpop.permute.xlu0 %1168
        %1170 = vrot.lane.b32.xlu0 %v409, 24
        %v1171 = vpop.permute.xlu0 %1170
        %1172 = vrot.lane.b32.xlu0 %v411, 24
        %v1173 = vpop.permute.xlu0 %1172
        %1174 = vrot.lane.b32.xlu0 %v412, 24
        %v1175 = vpop.permute.xlu0 %1174
        %1176 = vrot.lane.b32.xlu0 %v414, 24
        %v1177 = vpop.permute.xlu0 %1176
        %1178 = vrot.lane.b32.xlu0 %v415, 24
        %v1179 = vpop.permute.xlu0 %1178
        %1180 = vrot.lane.b32.xlu0 %v417, 24
        %v1181 = vpop.permute.xlu0 %1180
        %1182 = vrot.lane.b32.xlu0 %v418, 24
        %v1183 = vpop.permute.xlu0 %1182
        %1184 = vrot.lane.b32.xlu0 %v420, 24
        %v1185 = vpop.permute.xlu0 %1184
        %1186 = vrot.lane.b32.xlu0 %v421, 24
        %v1187 = vpop.permute.xlu0 %1186
        %1188 = vrot.lane.b32.xlu0 %v423, 24
        %v1189 = vpop.permute.xlu0 %1188
        %1190 = vrot.lane.b32.xlu0 %v424, 24
        %v1191 = vpop.permute.xlu0 %1190
        %1192 = vrot.lane.b32.xlu0 %v426, 24
        %v1193 = vpop.permute.xlu0 %1192
        %1194 = vrot.lane.b32.xlu0 %v427, 24
        %v1195 = vpop.permute.xlu0 %1194
        %1196 = vrot.lane.b32.xlu0 %v429, 24
        %v1197 = vpop.permute.xlu0 %1196
        %1198 = vrot.lane.b32.xlu0 %v430, 24
        %v1199 = vpop.permute.xlu0 %1198
        %1200 = vrot.lane.b32.xlu0 %v432, 24
        %v1201 = vpop.permute.xlu0 %1200
        %1202 = vrot.lane.b32.xlu0 %v433, 24
        %v1203 = vpop.permute.xlu0 %1202
        %v1237 = vrot.slane %v432, 1
        %v1238 = vrot.slane %v433, 1
        %v1239 = vsel %vm483, %v1237, %v1238
        %v1240 = vrot.slane %v434, 1
        %v1241 = vsel %vm483, %v1238, %v1240
        %1242 = vrot.lane.b32.xlu0 %v496, 28
        %v1243 = vpop.permute.xlu0 %1242
        %1244 = vrot.lane.b32.xlu0 %v498, 28
        %v1245 = vpop.permute.xlu0 %1244
        %1246 = vrot.lane.b32.xlu0 %v501, 28
        %v1247 = vpop.permute.xlu0 %1246
        %1248 = vrot.lane.b32.xlu0 %v503, 28
        %v1249 = vpop.permute.xlu0 %1248
        %1250 = vrot.lane.b32.xlu0 %v506, 28
        %v1251 = vpop.permute.xlu0 %1250
        %1252 = vrot.lane.b32.xlu0 %v508, 28
        %v1253 = vpop.permute.xlu0 %1252
        %1254 = vrot.lane.b32.xlu0 %v511, 28
        %v1255 = vpop.permute.xlu0 %1254
        %1256 = vrot.lane.b32.xlu0 %v513, 28
        %v1257 = vpop.permute.xlu0 %1256
        %1258 = vrot.lane.b32.xlu0 %v516, 28
        %v1259 = vpop.permute.xlu0 %1258
        %1260 = vrot.lane.b32.xlu0 %v518, 28
        %v1261 = vpop.permute.xlu0 %1260
        %1262 = vrot.lane.b32.xlu0 %v521, 28
        %v1263 = vpop.permute.xlu0 %1262
        %1264 = vrot.lane.b32.xlu0 %v523, 28
        %v1265 = vpop.permute.xlu0 %1264
        %1266 = vrot.lane.b32.xlu0 %v526, 28
        %v1267 = vpop.permute.xlu0 %1266
        %1268 = vrot.lane.b32.xlu0 %v528, 28
        %v1269 = vpop.permute.xlu0 %1268
        %1270 = vrot.lane.b32.xlu0 %v531, 28
        %v1271 = vpop.permute.xlu0 %1270
        %1272 = vrot.lane.b32.xlu0 %v533, 28
        %v1273 = vpop.permute.xlu0 %1272
        %1274 = vrot.lane.b32.xlu0 %v536, 28
        %v1275 = vpop.permute.xlu0 %1274
        %1276 = vrot.lane.b32.xlu0 %v538, 28
        %v1277 = vpop.permute.xlu0 %1276
        %1278 = vrot.lane.b32.xlu0 %v541, 28
        %v1279 = vpop.permute.xlu0 %1278
        %1280 = vrot.lane.b32.xlu0 %v543, 28
        %v1281 = vpop.permute.xlu0 %1280
        %1282 = vrot.lane.b32.xlu0 %v546, 28
        %v1283 = vpop.permute.xlu0 %1282
        %1284 = vrot.lane.b32.xlu0 %v548, 28
        %v1285 = vpop.permute.xlu0 %1284
        %1286 = vrot.lane.b32.xlu0 %v551, 28
        %v1287 = vpop.permute.xlu0 %1286
        %1288 = vrot.lane.b32.xlu0 %v553, 28
        %v1289 = vpop.permute.xlu0 %1288
        %1290 = vrot.lane.b32.xlu0 %v556, 28
        %v1291 = vpop.permute.xlu0 %1290
        %1292 = vrot.lane.b32.xlu0 %v558, 28
        %v1293 = vpop.permute.xlu0 %1292
        %1294 = vrot.lane.b32.xlu0 %v561, 28
        %v1295 = vpop.permute.xlu0 %1294
        %1296 = vrot.lane.b32.xlu0 %v563, 28
        %v1297 = vpop.permute.xlu0 %1296
        %1298 = vrot.lane.b32.xlu0 %v938, 28
        %v1299 = vpop.permute.xlu0 %1298
        %1300 = vrot.lane.b32.xlu0 %v940, 28
        %v1301 = vpop.permute.xlu0 %1300
        %1302 = vrot.lane.b32.xlu0 %v1239, 28
        %v1303 = vpop.permute.xlu0 %1302
        %1304 = vrot.lane.b32.xlu0 %v1241, 28
        %v1305 = vpop.permute.xlu0 %1304
        %v1338 = vrot.slane %v432, 2
        %v1339 = vrot.slane %v433, 2
        %v1340 = vsel %vm660, %v1338, %v1339
        %v1341 = vrot.slane %v434, 2
        %v1342 = vsel %vm660, %v1339, %v1341
        %1343 = vrot.lane.b32.xlu0 %v673, 32
        %v1344 = vpop.permute.xlu0 %1343
        %1345 = vrot.lane.b32.xlu0 %v675, 32
        %v1346 = vpop.permute.xlu0 %1345
        %1347 = vrot.lane.b32.xlu0 %v678, 32
        %v1348 = vpop.permute.xlu0 %1347
        %1349 = vrot.lane.b32.xlu0 %v680, 32
        %v1350 = vpop.permute.xlu0 %1349
        %1351 = vrot.lane.b32.xlu0 %v683, 32
        %v1352 = vpop.permute.xlu0 %1351
        %1353 = vrot.lane.b32.xlu0 %v685, 32
        %v1354 = vpop.permute.xlu0 %1353
        %1355 = vrot.lane.b32.xlu0 %v688, 32
        %v1356 = vpop.permute.xlu0 %1355
        %1357 = vrot.lane.b32.xlu0 %v690, 32
        %v1358 = vpop.permute.xlu0 %1357
        %1359 = vrot.lane.b32.xlu0 %v693, 32
        %v1360 = vpop.permute.xlu0 %1359
        %1361 = vrot.lane.b32.xlu0 %v695, 32
        %v1362 = vpop.permute.xlu0 %1361
        %1363 = vrot.lane.b32.xlu0 %v698, 32
        %v1364 = vpop.permute.xlu0 %1363
        %1365 = vrot.lane.b32.xlu0 %v700, 32
        %v1366 = vpop.permute.xlu0 %1365
        %1367 = vrot.lane.b32.xlu0 %v703, 32
        %v1368 = vpop.permute.xlu0 %1367
        %1369 = vrot.lane.b32.xlu0 %v705, 32
        %v1370 = vpop.permute.xlu0 %1369
        %1371 = vrot.lane.b32.xlu0 %v708, 32
        %v1372 = vpop.permute.xlu0 %1371
        %1373 = vrot.lane.b32.xlu0 %v710, 32
        %v1374 = vpop.permute.xlu0 %1373
        %1375 = vrot.lane.b32.xlu0 %v713, 32
        %v1376 = vpop.permute.xlu0 %1375
        %1377 = vrot.lane.b32.xlu0 %v715, 32
        %v1378 = vpop.permute.xlu0 %1377
        %1379 = vrot.lane.b32.xlu0 %v718, 32
        %v1380 = vpop.permute.xlu0 %1379
        %1381 = vrot.lane.b32.xlu0 %v720, 32
        %v1382 = vpop.permute.xlu0 %1381
        %1383 = vrot.lane.b32.xlu0 %v723, 32
        %v1384 = vpop.permute.xlu0 %1383
        %1385 = vrot.lane.b32.xlu0 %v725, 32
        %v1386 = vpop.permute.xlu0 %1385
        %1387 = vrot.lane.b32.xlu0 %v728, 32
        %v1388 = vpop.permute.xlu0 %1387
        %1389 = vrot.lane.b32.xlu0 %v730, 32
        %v1390 = vpop.permute.xlu0 %1389
        %1391 = vrot.lane.b32.xlu0 %v733, 32
        %v1392 = vpop.permute.xlu0 %1391
        %1393 = vrot.lane.b32.xlu0 %v735, 32
        %v1394 = vpop.permute.xlu0 %1393
        %1395 = vrot.lane.b32.xlu0 %v738, 32
        %v1396 = vpop.permute.xlu0 %1395
        %1397 = vrot.lane.b32.xlu0 %v740, 32
        %v1398 = vpop.permute.xlu0 %1397
        %1399 = vrot.lane.b32.xlu0 %v1039, 32
        %v1400 = vpop.permute.xlu0 %1399
        %1401 = vrot.lane.b32.xlu0 %v1041, 32
        %v1402 = vpop.permute.xlu0 %1401
        %1403 = vrot.lane.b32.xlu0 %v1340, 32
        %v1404 = vpop.permute.xlu0 %1403
        %1405 = vrot.lane.b32.xlu0 %v1342, 32
        %v1406 = vpop.permute.xlu0 %1405
        %v1439 = vsel %vm260, %v381, %v565
        %v1440 = vsel %vm260, %v382, %v567
        %v1441 = vsel %vm260, %v384, %v569
        %v1442 = vsel %vm260, %v385, %v571
        %v1443 = vsel %vm260, %v387, %v573
        %v1444 = vsel %vm260, %v388, %v575
        %v1445 = vsel %vm260, %v390, %v577
        %v1446 = vsel %vm260, %v391, %v579
        %v1447 = vsel %vm260, %v393, %v581
        %v1448 = vsel %vm260, %v394, %v583
        %v1449 = vsel %vm260, %v396, %v585
        %v1450 = vsel %vm260, %v397, %v587
        %v1451 = vsel %vm260, %v399, %v589
        %v1452 = vsel %vm260, %v400, %v591
        %v1453 = vsel %vm260, %v402, %v593
        %v1454 = vsel %vm260, %v403, %v595
        %v1455 = vsel %vm260, %v405, %v597
        %v1456 = vsel %vm260, %v406, %v599
        %v1457 = vsel %vm260, %v408, %v601
        %v1458 = vsel %vm260, %v409, %v603
        %v1459 = vsel %vm260, %v411, %v605
        %v1460 = vsel %vm260, %v412, %v607
        %v1461 = vsel %vm260, %v414, %v609
        %v1462 = vsel %vm260, %v415, %v611
        %v1463 = vsel %vm260, %v417, %v613
        %v1464 = vsel %vm260, %v418, %v615
        %v1465 = vsel %vm260, %v420, %v617
        %v1466 = vsel %vm260, %v421, %v619
        %v1467 = vsel %vm260, %v423, %v621
        %v1468 = vsel %vm260, %v424, %v623
        %v1469 = vsel %vm260, %v426, %v625
        %v1470 = vsel %vm260, %v427, %v627
        %vm1471 = vcmask 64512
        %v1472 = vsel %vm1471, %v1439, %v742
        %v1473 = vsel %vm1471, %v1440, %v744
        %v1474 = vsel %vm1471, %v1441, %v746
        %v1475 = vsel %vm1471, %v1442, %v748
        %v1476 = vsel %vm1471, %v1443, %v750
        %v1477 = vsel %vm1471, %v1444, %v752
        %v1478 = vsel %vm1471, %v1445, %v754
        %v1479 = vsel %vm1471, %v1446, %v756
        %v1480 = vsel %vm1471, %v1447, %v758
        %v1481 = vsel %vm1471, %v1448, %v760
        %v1482 = vsel %vm1471, %v1449, %v762
        %v1483 = vsel %vm1471, %v1450, %v764
        %v1484 = vsel %vm1471, %v1451, %v766
        %v1485 = vsel %vm1471, %v1452, %v768
        %v1486 = vsel %vm1471, %v1453, %v770
        %v1487 = vsel %vm1471, %v1454, %v772
        %v1488 = vsel %vm1471, %v1455, %v774
        %v1489 = vsel %vm1471, %v1456, %v776
        %v1490 = vsel %vm1471, %v1457, %v778
        %v1491 = vsel %vm1471, %v1458, %v780
        %v1492 = vsel %vm1471, %v1459, %v782
        %v1493 = vsel %vm1471, %v1460, %v784
        %v1494 = vsel %vm1471, %v1461, %v786
        %v1495 = vsel %vm1471, %v1462, %v788
        %v1496 = vsel %vm1471, %v1463, %v790
        %v1497 = vsel %vm1471, %v1464, %v792
        %v1498 = vsel %vm1471, %v1465, %v794
        %v1499 = vsel %vm1471, %v1466, %v796
        %v1500 = vsel %vm1471, %v1467, %v798
        %v1501 = vsel %vm1471, %v1468, %v800
        %v1502 = vsel %vm1471, %v1469, %v802
        %v1503 = vsel %vm1471, %v1470, %v804
        %vm1504 = vcmask 97280
        %v1505 = vsel %vm1504, %v1472, %v840
        %v1506 = vsel %vm1504, %v1473, %v842
        %v1507 = vsel %vm1504, %v1474, %v844
        %v1508 = vsel %vm1504, %v1475, %v846
        %v1509 = vsel %vm1504, %v1476, %v848
        %v1510 = vsel %vm1504, %v1477, %v850
        %v1511 = vsel %vm1504, %v1478, %v852
        %v1512 = vsel %vm1504, %v1479, %v854
        %v1513 = vsel %vm1504, %v1480, %v856
        %v1514 = vsel %vm1504, %v1481, %v858
        %v1515 = vsel %vm1504, %v1482, %v860
        %v1516 = vsel %vm1504, %v1483, %v862
        %v1517 = vsel %vm1504, %v1484, %v864
        %v1518 = vsel %vm1504, %v1485, %v866
        %v1519 = vsel %vm1504, %v1486, %v868
        %v1520 = vsel %vm1504, %v1487, %v870
        %v1521 = vsel %vm1504, %v1488, %v872
        %v1522 = vsel %vm1504, %v1489, %v874
        %v1523 = vsel %vm1504, %v1490, %v876
        %v1524 = vsel %vm1504, %v1491, %v878
        %v1525 = vsel %vm1504, %v1492, %v880
        %v1526 = vsel %vm1504, %v1493, %v882
        %v1527 = vsel %vm1504, %v1494, %v884
        %v1528 = vsel %vm1504, %v1495, %v886
        %v1529 = vsel %vm1504, %v1496, %v888
        %v1530 = vsel %vm1504, %v1497, %v890
        %v1531 = vsel %vm1504, %v1498, %v892
        %v1532 = vsel %vm1504, %v1499, %v894
        %v1533 = vsel %vm1504, %v1500, %v896
        %v1534 = vsel %vm1504, %v1501, %v898
        %v1535 = vsel %vm1504, %v1502, %v900
        %v1536 = vsel %vm1504, %v1503, %v902
        %vm1537 = vcmask 130048
        %v1538 = vsel %vm1537, %v1505, %v942
        %v1539 = vsel %vm1537, %v1506, %v944
        %v1540 = vsel %vm1537, %v1507, %v946
        %v1541 = vsel %vm1537, %v1508, %v948
        %v1542 = vsel %vm1537, %v1509, %v950
        %v1543 = vsel %vm1537, %v1510, %v952
        %v1544 = vsel %vm1537, %v1511, %v954
        %v1545 = vsel %vm1537, %v1512, %v956
        %v1546 = vsel %vm1537, %v1513, %v958
        %v1547 = vsel %vm1537, %v1514, %v960
        %v1548 = vsel %vm1537, %v1515, %v962
        %v1549 = vsel %vm1537, %v1516, %v964
        %v1550 = vsel %vm1537, %v1517, %v966
        %v1551 = vsel %vm1537, %v1518, %v968
        %v1552 = vsel %vm1537, %v1519, %v970
        %v1553 = vsel %vm1537, %v1520, %v972
        %v1554 = vsel %vm1537, %v1521, %v974
        %v1555 = vsel %vm1537, %v1522, %v976
        %v1556 = vsel %vm1537, %v1523, %v978
        %v1557 = vsel %vm1537, %v1524, %v980
        %v1558 = vsel %vm1537, %v1525, %v982
        %v1559 = vsel %vm1537, %v1526, %v984
        %v1560 = vsel %vm1537, %v1527, %v986
        %v1561 = vsel %vm1537, %v1528, %v988
        %v1562 = vsel %vm1537, %v1529, %v990
        %v1563 = vsel %vm1537, %v1530, %v992
        %v1564 = vsel %vm1537, %v1531, %v994
        %v1565 = vsel %vm1537, %v1532, %v996
        %v1566 = vsel %vm1537, %v1533, %v998
        %v1567 = vsel %vm1537, %v1534, %v1000
        %v1568 = vsel %vm1537, %v1535, %v1002
        %v1569 = vsel %vm1537, %v1536, %v1004
        %vm1570 = vcmask 162816
        %v1571 = vsel %vm1570, %v1538, %v1043
        %v1572 = vsel %vm1570, %v1539, %v1045
        %v1573 = vsel %vm1570, %v1540, %v1047
        %v1574 = vsel %vm1570, %v1541, %v1049
        %v1575 = vsel %vm1570, %v1542, %v1051
        %v1576 = vsel %vm1570, %v1543, %v1053
        %v1577 = vsel %vm1570, %v1544, %v1055
        %v1578 = vsel %vm1570, %v1545, %v1057
        %v1579 = vsel %vm1570, %v1546, %v1059
        %v1580 = vsel %vm1570, %v1547, %v1061
        %v1581 = vsel %vm1570, %v1548, %v1063
        %v1582 = vsel %vm1570, %v1549, %v1065
        %v1583 = vsel %vm1570, %v1550, %v1067
        %v1584 = vsel %vm1570, %v1551, %v1069
        %v1585 = vsel %vm1570, %v1552, %v1071
        %v1586 = vsel %vm1570, %v1553, %v1073
        %v1587 = vsel %vm1570, %v1554, %v1075
        %v1588 = vsel %vm1570, %v1555, %v1077
        %v1589 = vsel %vm1570, %v1556, %v1079
        %v1590 = vsel %vm1570, %v1557, %v1081
        %v1591 = vsel %vm1570, %v1558, %v1083
        %v1592 = vsel %vm1570, %v1559, %v1085
        %v1593 = vsel %vm1570, %v1560, %v1087
        %v1594 = vsel %vm1570, %v1561, %v1089
        %v1595 = vsel %vm1570, %v1562, %v1091
        %v1596 = vsel %vm1570, %v1563, %v1093
        %v1597 = vsel %vm1570, %v1564, %v1095
        %v1598 = vsel %vm1570, %v1565, %v1097
        %v1599 = vsel %vm1570, %v1566, %v1099
        %v1600 = vsel %vm1570, %v1567, %v1101
        %v1601 = vsel %vm1570, %v1568, %v1103
        %v1602 = vsel %vm1570, %v1569, %v1105
        %vm1603 = vcmask 195584
        %v1604 = vsel %vm1603, %v1571, %v1141
        %v1605 = vsel %vm1603, %v1572, %v1143
        %v1606 = vsel %vm1603, %v1573, %v1145
        %v1607 = vsel %vm1603, %v1574, %v1147
        %v1608 = vsel %vm1603, %v1575, %v1149
        %v1609 = vsel %vm1603, %v1576, %v1151
        %v1610 = vsel %vm1603, %v1577, %v1153
        %v1611 = vsel %vm1603, %v1578, %v1155
        %v1612 = vsel %vm1603, %v1579, %v1157
        %v1613 = vsel %vm1603, %v1580, %v1159
        %v1614 = vsel %vm1603, %v1581, %v1161
        %v1615 = vsel %vm1603, %v1582, %v1163
        %v1616 = vsel %vm1603, %v1583, %v1165
        %v1617 = vsel %vm1603, %v1584, %v1167
        %v1618 = vsel %vm1603, %v1585, %v1169
        %v1619 = vsel %vm1603, %v1586, %v1171
        %v1620 = vsel %vm1603, %v1587, %v1173
        %v1621 = vsel %vm1603, %v1588, %v1175
        %v1622 = vsel %vm1603, %v1589, %v1177
        %v1623 = vsel %vm1603, %v1590, %v1179
        %v1624 = vsel %vm1603, %v1591, %v1181
        %v1625 = vsel %vm1603, %v1592, %v1183
        %v1626 = vsel %vm1603, %v1593, %v1185
        %v1627 = vsel %vm1603, %v1594, %v1187
        %v1628 = vsel %vm1603, %v1595, %v1189
        %v1629 = vsel %vm1603, %v1596, %v1191
        %v1630 = vsel %vm1603, %v1597, %v1193
        %v1631 = vsel %vm1603, %v1598, %v1195
        %v1632 = vsel %vm1603, %v1599, %v1197
        %v1633 = vsel %vm1603, %v1600, %v1199
        %v1634 = vsel %vm1603, %v1601, %v1201
        %v1635 = vsel %vm1603, %v1602, %v1203
        %vm1636 = vcmask 228352
        %v1637 = vsel %vm1636, %v1604, %v1243
        %v1638 = vsel %vm1636, %v1605, %v1245
        %v1639 = vsel %vm1636, %v1606, %v1247
        %v1640 = vsel %vm1636, %v1607, %v1249
        %v1641 = vsel %vm1636, %v1608, %v1251
        %v1642 = vsel %vm1636, %v1609, %v1253
        %v1643 = vsel %vm1636, %v1610, %v1255
        %v1644 = vsel %vm1636, %v1611, %v1257
        %v1645 = vsel %vm1636, %v1612, %v1259
        %v1646 = vsel %vm1636, %v1613, %v1261
        %v1647 = vsel %vm1636, %v1614, %v1263
        %v1648 = vsel %vm1636, %v1615, %v1265
        %v1649 = vsel %vm1636, %v1616, %v1267
        %v1650 = vsel %vm1636, %v1617, %v1269
        %v1651 = vsel %vm1636, %v1618, %v1271
        %v1652 = vsel %vm1636, %v1619, %v1273
        %v1653 = vsel %vm1636, %v1620, %v1275
        %v1654 = vsel %vm1636, %v1621, %v1277
        %v1655 = vsel %vm1636, %v1622, %v1279
        %v1656 = vsel %vm1636, %v1623, %v1281
        %v1657 = vsel %vm1636, %v1624, %v1283
        %v1658 = vsel %vm1636, %v1625, %v1285
        %v1659 = vsel %vm1636, %v1626, %v1287
        %v1660 = vsel %vm1636, %v1627, %v1289
        %v1661 = vsel %vm1636, %v1628, %v1291
        %v1662 = vsel %vm1636, %v1629, %v1293
        %v1663 = vsel %vm1636, %v1630, %v1295
        %v1664 = vsel %vm1636, %v1631, %v1297
        %v1665 = vsel %vm1636, %v1632, %v1299
        %v1666 = vsel %vm1636, %v1633, %v1301
        %v1667 = vsel %vm1636, %v1634, %v1303
        %v1668 = vsel %vm1636, %v1635, %v1305
        %vm1669 = vcmask 261120
        %v1670 = vsel %vm1669, %v1637, %v1344
        %v1671 = vsel %vm1669, %v1638, %v1346
        %v1672 = vsel %vm1669, %v1639, %v1348
        %v1673 = vsel %vm1669, %v1640, %v1350
        %v1674 = vsel %vm1669, %v1641, %v1352
        %v1675 = vsel %vm1669, %v1642, %v1354
        %v1676 = vsel %vm1669, %v1643, %v1356
        %v1677 = vsel %vm1669, %v1644, %v1358
        %v1678 = vsel %vm1669, %v1645, %v1360
        %v1679 = vsel %vm1669, %v1646, %v1362
        %v1680 = vsel %vm1669, %v1647, %v1364
        %v1681 = vsel %vm1669, %v1648, %v1366
        %v1682 = vsel %vm1669, %v1649, %v1368
        %v1683 = vsel %vm1669, %v1650, %v1370
        %v1684 = vsel %vm1669, %v1651, %v1372
        %v1685 = vsel %vm1669, %v1652, %v1374
        %v1686 = vsel %vm1669, %v1653, %v1376
        %v1687 = vsel %vm1669, %v1654, %v1378
        %v1688 = vsel %vm1669, %v1655, %v1380
        %v1689 = vsel %vm1669, %v1656, %v1382
        %v1690 = vsel %vm1669, %v1657, %v1384
        %v1691 = vsel %vm1669, %v1658, %v1386
        %v1692 = vsel %vm1669, %v1659, %v1388
        %v1693 = vsel %vm1669, %v1660, %v1390
        %v1694 = vsel %vm1669, %v1661, %v1392
        %v1695 = vsel %vm1669, %v1662, %v1394
        %v1696 = vsel %vm1669, %v1663, %v1396
        %v1697 = vsel %vm1669, %v1664, %v1398
        %v1698 = vsel %vm1669, %v1665, %v1400
        %v1699 = vsel %vm1669, %v1666, %v1402
        %v1700 = vsel %vm1669, %v1667, %v1404
        %v1701 = vsel %vm1669, %v1668, %v1406
        %v1702 = vld [vmem:[%s1] sm:$0xff]
        %v1703 = vld [vmem:[%s1 + $0x8] sm:$0xff]
        %v1704 = vld [vmem:[%s1 + $0x10] sm:$0xff]
        %v1705 = vld [vmem:[%s1 + $0x18] sm:$0xff]
        %v1706 = vld [vmem:[%s1 + $0x20] sm:$0xf]
        %v1707 = vld [vmem:[%s2] sm:$0x1]
        %v1709 = vlaneseq
        %v1710 = vshrl.u32 %v1709, 7
        %v1711 = vsub.s32 0, %v1710
        %v1712 = vrot.slane %v1707, %v1711
        %vm1714 = vcmask 293888
        %v1716 = vsel %vm1714, %v1670, 0
        %v1719 = vsel %vm1714, %v1671, 0
        %v1722 = vsel %vm1714, %v1672, 0
        %v1725 = vsel %vm1714, %v1673, 0
        %v1728 = vsel %vm1714, %v1674, 0
        %v1731 = vsel %vm1714, %v1675, 0
        %v1734 = vsel %vm1714, %v1676, 0
        %v1737 = vsel %vm1714, %v1677, 0
        %v1740 = vsel %vm1714, %v1678, 0
        %v1743 = vsel %vm1714, %v1679, 0
        %v1746 = vsel %vm1714, %v1680, 0
        %v1749 = vsel %vm1714, %v1681, 0
        %v1752 = vsel %vm1714, %v1682, 0
        %v1755 = vsel %vm1714, %v1683, 0
        %v1758 = vsel %vm1714, %v1684, 0
        %v1761 = vsel %vm1714, %v1685, 0
        %v1764 = vsel %vm1714, %v1686, 0
        %v1767 = vsel %vm1714, %v1687, 0
        %v1770 = vsel %vm1714, %v1688, 0
        %v1773 = vsel %vm1714, %v1689, 0
        %v1776 = vsel %vm1714, %v1690, 0
        %v1779 = vsel %vm1714, %v1691, 0
        %v1782 = vsel %vm1714, %v1692, 0
        %v1785 = vsel %vm1714, %v1693, 0
        %v1788 = vsel %vm1714, %v1694, 0
        %v1791 = vsel %vm1714, %v1695, 0
        %v1794 = vsel %vm1714, %v1696, 0
        %v1797 = vsel %vm1714, %v1697, 0
        %v1800 = vsel %vm1714, %v1698, 0
        %v1803 = vsel %vm1714, %v1699, 0
        %v1806 = vsel %vm1714, %v1700, 0
        %v1809 = vsel %vm1714, %v1701, 0
        %vm1811 = vcmask 1043456
        %v1813 = vsel %vm1811, %v1706, 0
        %1815 = vmatprep.subr.mxu0 0.0
        %1816 = vmatpush1.msra.mxu0 %v1702
        %1817 = vmatprep.subr.mxu0 0.0
        %1818 = vmatpush1.msra.mxu0 %v1703
        %1819 = vmatprep.subr.mxu0 0.0
        %1820 = vmatpush1.msra.mxu0 %v1704
        %1821 = vmatprep.subr.mxu0 0.0
        %1822 = vmatpush1.msra.mxu0 %v1705
        %1823 = vmatprep.subr.mxu0 0.0
        %1824 = vmatpush1.msra.mxu0 %v1813
        %1825 = vmatprep.subr.mxu0 0.0
        %1826 = vmatpush1.msra.mxu0 0.0
        %1827 = vmatprep.subr.mxu0 0.0
        %1828 = vmatpush1.msra.mxu0 0.0
        %1829 = vmatprep.subr.mxu0 0.0
        %1830 = vmatpush1.msra.mxu0 0.0
        %1831 = vmatprep.subr.mxu0 0.0
        %1832 = vmatpush1.msra.mxu0 0.0
        %1833 = vmatprep.subr.mxu0 0.0
        %1834 = vmatpush1.msra.mxu0 0.0
        %1835 = vmatprep.subr.mxu0 0.0
        %1836 = vmatpush1.msra.mxu0 0.0
        %1837 = vmatprep.subr.mxu0 0.0
        %1838 = vmatpush1.msra.mxu0 0.0
        %1839 = vmatprep.subr.mxu0 0.0
        %1840 = vmatpush1.msra.mxu0 0.0
        %1841 = vmatprep.subr.mxu0 0.0
        %1842 = vmatpush1.msra.mxu0 0.0
        %1843 = vmatprep.subr.mxu0 0.0
        %1844 = vmatpush1.msra.mxu0 0.0
        %1845 = vmatprep.subr.mxu0 0.0
        %1846 = vmatpush1.msra.mxu0 0.0
        %1847 = vmatprep.subr.mxu0 0.0
        %1848 = vmatpush1.msra.mxu0 0.0
        %1849 = vmatprep.subr.mxu0 0.0
        %1850 = vmatpush1.msra.mxu0 0.0
        %1851 = vmatprep.subr.mxu0 0.0
        %1852 = vmatpush1.msra.mxu0 0.0
        %1853 = vmatprep.subr.mxu0 0.0
        %1854 = vmatpush1.msra.mxu0 0.0
        %1855 = vmatprep.subr.mxu0 0.0
        %1856 = vmatpush1.msra.mxu0 0.0
        %1857 = vmatprep.subr.mxu0 0.0
        %1858 = vmatpush1.msra.mxu0 0.0
        %1859 = vmatprep.subr.mxu0 0.0
        %1860 = vmatpush1.msra.mxu0 0.0
        %1861 = vmatprep.subr.mxu0 0.0
        %1862 = vmatpush1.msra.mxu0 0.0
        %1863 = vmatprep.subr.mxu0 0.0
        %1864 = vmatpush1.msra.mxu0 0.0
        %1865 = vmatprep.subr.mxu0 0.0
        %1866 = vmatpush1.msra.mxu0 0.0
        %1867 = vmatprep.subr.mxu0 0.0
        %1868 = vmatpush1.msra.mxu0 0.0
        %1869 = vmatprep.subr.mxu0 0.0
        %1870 = vmatpush1.msra.mxu0 0.0
        %1871 = vmatprep.subr.mxu0 0.0
        %1872 = vmatpush1.msra.mxu0 0.0
        %1873 = vmatprep.subr.mxu0 0.0
        %1874 = vmatpush1.msra.mxu0 0.0
        %1875 = vmatprep.subr.mxu0 0.0
        %1876 = vmatpush1.msra.mxu0 0.0
        %1877 = vmatprep.subr.mxu0 0.0
        %1878 = vmatpush1.msra.mxu0 0.0
        %1879 = vmatprep.mubr.f32.mxu0 0.0
        %1880 = vmatmul.mubr.f32.gmra.mrb[0].mxu0 %v1716
        %v1881 = vpop.f32.mrb[0].mxu0
        %v1882 = vadd.f32 %v1712, %v1881
        %v1883 = vpop.f32.mrb[0].mxu0
        %1884 = vmatprep.mubr.f32.mxu0 0.0
        %1885 = vmatmul.mubr.f32.gmra.mrb[0].mxu0 %v1719
        %v1886 = vpop.f32.mrb[0].mxu0
        %v1887 = vadd.f32 %v1712, %v1886
        %v1888 = vpop.f32.mrb[0].mxu0
        %1889 = vmatprep.mubr.f32.mxu0 0.0
        %1890 = vmatmul.mubr.f32.gmra.mrb[0].mxu0 %v1722
        %v1891 = vpop.f32.mrb[0].mxu0
        %v1892 = vadd.f32 %v1712, %v1891
        %v1893 = vpop.f32.mrb[0].mxu0
        %1894 = vmatprep.mubr.f32.mxu0 0.0
        %1895 = vmatmul.mubr.f32.gmra.mrb[0].mxu0 %v1725
        %v1896 = vpop.f32.mrb[0].mxu0
        %v1897 = vadd.f32 %v1712, %v1896
        %v1898 = vpop.f32.mrb[0].mxu0
        %1899 = vmatprep.mubr.f32.mxu0 0.0
        %1900 = vmatmul.mubr.f32.gmra.mrb[0].mxu0 %v1728
        %v1901 = vpop.f32.mrb[0].mxu0
        %v1902 = vadd.f32 %v1712, %v1901
        %v1903 = vpop.f32.mrb[0].mxu0
        %1904 = vmatprep.mubr.f32.mxu0 0.0
        %1905 = vmatmul.mubr.f32.gmra.mrb[0].mxu0 %v1731
        %v1906 = vpop.f32.mrb[0].mxu0
        %v1907 = vadd.f32 %v1712, %v1906
        %v1908 = vpop.f32.mrb[0].mxu0
        %1909 = vmatprep.mubr.f32.mxu0 0.0
        %1910 = vmatmul.mubr.f32.gmra.mrb[0].mxu0 %v1734
        %v1911 = vpop.f32.mrb[0].mxu0
        %v1912 = vadd.f32 %v1712, %v1911
        %v1913 = vpop.f32.mrb[0].mxu0
        %1914 = vmatprep.mubr.f32.mxu0 0.0
        %1915 = vmatmul.mubr.f32.gmra.mrb[0].mxu0 %v1737
        %v1916 = vpop.f32.mrb[0].mxu0
        %v1917 = vadd.f32 %v1712, %v1916
        %v1918 = vpop.f32.mrb[0].mxu0
        %1919 = vmatprep.mubr.f32.mxu0 0.0
        %1920 = vmatmul.mubr.f32.gmra.mrb[0].mxu0 %v1740
        %v1921 = vpop.f32.mrb[0].mxu0
        %v1922 = vadd.f32 %v1712, %v1921
        %v1923 = vpop.f32.mrb[0].mxu0
        %1924 = vmatprep.mubr.f32.mxu0 0.0
        %1925 = vmatmul.mubr.f32.gmra.mrb[0].mxu0 %v1743
        %v1926 = vpop.f32.mrb[0].mxu0
        %v1927 = vadd.f32 %v1712, %v1926
        %v1928 = vpop.f32.mrb[0].mxu0
        %1929 = vmatprep.mubr.f32.mxu0 0.0
        %1930 = vmatmul.mubr.f32.gmra.mrb[0].mxu0 %v1746
        %v1931 = vpop.f32.mrb[0].mxu0
        %v1932 = vadd.f32 %v1712, %v1931
        %v1933 = vpop.f32.mrb[0].mxu0
        %1934 = vmatprep.mubr.f32.mxu0 0.0
        %1935 = vmatmul.mubr.f32.gmra.mrb[0].mxu0 %v1749
        %v1936 = vpop.f32.mrb[0].mxu0
        %v1937 = vadd.f32 %v1712, %v1936
        %v1938 = vpop.f32.mrb[0].mxu0
        %1939 = vmatprep.mubr.f32.mxu0 0.0
        %1940 = vmatmul.mubr.f32.gmra.mrb[0].mxu0 %v1752
        %v1941 = vpop.f32.mrb[0].mxu0
        %v1942 = vadd.f32 %v1712, %v1941
        %v1943 = vpop.f32.mrb[0].mxu0
        %1944 = vmatprep.mubr.f32.mxu0 0.0
        %1945 = vmatmul.mubr.f32.gmra.mrb[0].mxu0 %v1755
        %v1946 = vpop.f32.mrb[0].mxu0
        %v1947 = vadd.f32 %v1712, %v1946
        %v1948 = vpop.f32.mrb[0].mxu0
        %1949 = vmatprep.mubr.f32.mxu0 0.0
        %1950 = vmatmul.mubr.f32.gmra.mrb[0].mxu0 %v1758
        %v1951 = vpop.f32.mrb[0].mxu0
        %v1952 = vadd.f32 %v1712, %v1951
        %v1953 = vpop.f32.mrb[0].mxu0
        %1954 = vmatprep.mubr.f32.mxu0 0.0
        %1955 = vmatmul.mubr.f32.gmra.mrb[0].mxu0 %v1761
        %v1956 = vpop.f32.mrb[0].mxu0
        %v1957 = vadd.f32 %v1712, %v1956
        %v1958 = vpop.f32.mrb[0].mxu0
        %1959 = vmatprep.mubr.f32.mxu0 0.0
        %1960 = vmatmul.mubr.f32.gmra.mrb[0].mxu0 %v1764
        %v1961 = vpop.f32.mrb[0].mxu0
        %v1962 = vadd.f32 %v1712, %v1961
        %v1963 = vpop.f32.mrb[0].mxu0
        %1964 = vmatprep.mubr.f32.mxu0 0.0
        %1965 = vmatmul.mubr.f32.gmra.mrb[0].mxu0 %v1767
        %v1966 = vpop.f32.mrb[0].mxu0
        %v1967 = vadd.f32 %v1712, %v1966
        %v1968 = vpop.f32.mrb[0].mxu0
        %1969 = vmatprep.mubr.f32.mxu0 0.0
        %1970 = vmatmul.mubr.f32.gmra.mrb[0].mxu0 %v1770
        %v1971 = vpop.f32.mrb[0].mxu0
        %v1972 = vadd.f32 %v1712, %v1971
        %v1973 = vpop.f32.mrb[0].mxu0
        %1974 = vmatprep.mubr.f32.mxu0 0.0
        %1975 = vmatmul.mubr.f32.gmra.mrb[0].mxu0 %v1773
        %v1976 = vpop.f32.mrb[0].mxu0
        %v1977 = vadd.f32 %v1712, %v1976
        %v1978 = vpop.f32.mrb[0].mxu0
        %1979 = vmatprep.mubr.f32.mxu0 0.0
        %1980 = vmatmul.mubr.f32.gmra.mrb[0].mxu0 %v1776
        %v1981 = vpop.f32.mrb[0].mxu0
        %v1982 = vadd.f32 %v1712, %v1981
        %v1983 = vpop.f32.mrb[0].mxu0
        %1984 = vmatprep.mubr.f32.mxu0 0.0
        %1985 = vmatmul.mubr.f32.gmra.mrb[0].mxu0 %v1779
        %v1986 = vpop.f32.mrb[0].mxu0
        %v1987 = vadd.f32 %v1712, %v1986
        %v1988 = vpop.f32.mrb[0].mxu0
        %1989 = vmatprep.mubr.f32.mxu0 0.0
        %1990 = vmatmul.mubr.f32.gmra.mrb[0].mxu0 %v1782
        %v1991 = vpop.f32.mrb[0].mxu0
        %v1992 = vadd.f32 %v1712, %v1991
        %v1993 = vpop.f32.mrb[0].mxu0
        %1994 = vmatprep.mubr.f32.mxu0 0.0
        %1995 = vmatmul.mubr.f32.gmra.mrb[0].mxu0 %v1785
        %v1996 = vpop.f32.mrb[0].mxu0
        %v1997 = vadd.f32 %v1712, %v1996
        %v1998 = vpop.f32.mrb[0].mxu0
        %1999 = vmatprep.mubr.f32.mxu0 0.0
        %2000 = vmatmul.mubr.f32.gmra.mrb[0].mxu0 %v1788
        %v2001 = vpop.f32.mrb[0].mxu0
        %v2002 = vadd.f32 %v1712, %v2001
        %v2003 = vpop.f32.mrb[0].mxu0
        %2004 = vmatprep.mubr.f32.mxu0 0.0
        %2005 = vmatmul.mubr.f32.gmra.mrb[0].mxu0 %v1791
        %v2006 = vpop.f32.mrb[0].mxu0
        %v2007 = vadd.f32 %v1712, %v2006
        %v2008 = vpop.f32.mrb[0].mxu0
        %2009 = vmatprep.mubr.f32.mxu0 0.0
        %2010 = vmatmul.mubr.f32.gmra.mrb[0].mxu0 %v1794
        %v2011 = vpop.f32.mrb[0].mxu0
        %v2012 = vadd.f32 %v1712, %v2011
        %v2013 = vpop.f32.mrb[0].mxu0
        %2014 = vmatprep.mubr.f32.mxu0 0.0
        %2015 = vmatmul.mubr.f32.gmra.mrb[0].mxu0 %v1797
        %v2016 = vpop.f32.mrb[0].mxu0
        %v2017 = vadd.f32 %v1712, %v2016
        %v2018 = vpop.f32.mrb[0].mxu0
        %2019 = vmatprep.mubr.f32.mxu0 0.0
        %2020 = vmatmul.mubr.f32.gmra.mrb[0].mxu0 %v1800
        %v2021 = vpop.f32.mrb[0].mxu0
        %v2022 = vadd.f32 %v1712, %v2021
        %v2023 = vpop.f32.mrb[0].mxu0
        %2024 = vmatprep.mubr.f32.mxu0 0.0
        %2025 = vmatmul.mubr.f32.gmra.mrb[0].mxu0 %v1803
        %v2026 = vpop.f32.mrb[0].mxu0
        %v2027 = vadd.f32 %v1712, %v2026
        %v2028 = vpop.f32.mrb[0].mxu0
        %2029 = vmatprep.mubr.f32.mxu0 0.0
        %2030 = vmatmul.mubr.f32.gmra.mrb[0].mxu0 %v1806
        %v2031 = vpop.f32.mrb[0].mxu0
        %v2032 = vadd.f32 %v1712, %v2031
        %v2033 = vpop.f32.mrb[0].mxu0
        %2034 = vmatprep.mubr.f32.mxu0 0.0
        %2035 = vmatmul.mubr.f32.gmra.mrb[0].mxu0 %v1809
        %v2036 = vpop.f32.mrb[0].mxu0
        %v2037 = vadd.f32 %v1712, %v2036
        %v2038 = vpop.f32.mrb[0].mxu0
        %2039 = vdwg.mxu0
        %v2040 = vmax.f32 %v1882, 0.0
        %v2041 = vmax.f32 %v1887, 0.0
        %v2042 = vmax.f32 %v1892, 0.0
        %v2043 = vmax.f32 %v1897, 0.0
        %v2044 = vmax.f32 %v1902, 0.0
        %v2045 = vmax.f32 %v1907, 0.0
        %v2046 = vmax.f32 %v1912, 0.0
        %v2047 = vmax.f32 %v1917, 0.0
        %v2048 = vmax.f32 %v1922, 0.0
        %v2049 = vmax.f32 %v1927, 0.0
        %v2050 = vmax.f32 %v1932, 0.0
        %v2051 = vmax.f32 %v1937, 0.0
        %v2052 = vmax.f32 %v1942, 0.0
        %v2053 = vmax.f32 %v1947, 0.0
        %v2054 = vmax.f32 %v1952, 0.0
        %v2055 = vmax.f32 %v1957, 0.0
        %v2056 = vmax.f32 %v1962, 0.0
        %v2057 = vmax.f32 %v1967, 0.0
        %v2058 = vmax.f32 %v1972, 0.0
        %v2059 = vmax.f32 %v1977, 0.0
        %v2060 = vmax.f32 %v1982, 0.0
        %v2061 = vmax.f32 %v1987, 0.0
        %v2062 = vmax.f32 %v1992, 0.0
        %v2063 = vmax.f32 %v1997, 0.0
        %v2064 = vmax.f32 %v2002, 0.0
        %v2065 = vmax.f32 %v2007, 0.0
        %v2066 = vmax.f32 %v2012, 0.0
        %v2067 = vmax.f32 %v2017, 0.0
        %v2068 = vmax.f32 %v2022, 0.0
        %v2069 = vmax.f32 %v2027, 0.0
        %v2070 = vmax.f32 %v2032, 0.0
        %v2071 = vmax.f32 %v2037, 0.0
        %2072 = vst.msk [vmem:[#allocation3] sm:$0xff] %vm1471, 0.0
        %2073 = vst.msk [vmem:[#allocation3 + $0x8] sm:$0xff] %vm1471, 0.0
        %vm2074 = vcmask 58368
        %2075 = vst.msk [vmem:[#allocation3 + $0x10] sm:$0x3] %vm2074, 0.0
        %2076 = vst.msk [vmem:[#allocation3 + $0x18] sm:$0xff] %vm1471, 0.0
        %2077 = vst.msk [vmem:[#allocation3 + $0x20] sm:$0xff] %vm1471, 0.0
        %2078 = vst.msk [vmem:[#allocation3 + $0x28] sm:$0x3] %vm2074, 0.0
        %2079 = vst.msk [vmem:[#allocation3 + $0x30] sm:$0xff] %vm1471, 0.0
        %2080 = vst.msk [vmem:[#allocation3 + $0x38] sm:$0xff] %vm1471, 0.0
        %2081 = vst.msk [vmem:[#allocation3 + $0x40] sm:$0x3] %vm2074, 0.0
        %2082 = vst.msk [vmem:[#allocation3 + $0x48] sm:$0xff] %vm1471, 0.0
        %2083 = vst.msk [vmem:[#allocation3 + $0x50] sm:$0xff] %vm1471, 0.0
        %2084 = vst.msk [vmem:[#allocation3 + $0x58] sm:$0x3] %vm2074, 0.0
        %2085 = vst.msk [vmem:[#allocation3 + $0x60] sm:$0xff] %vm1471, 0.0
        %2086 = vst.msk [vmem:[#allocation3 + $0x68] sm:$0xff] %vm1471, 0.0
        %2087 = vst.msk [vmem:[#allocation3 + $0x70] sm:$0x3] %vm2074, 0.0
        %2088 = vst.msk [vmem:[#allocation3 + $0x78] sm:$0xff] %vm1471, 0.0
        %2089 = vst.msk [vmem:[#allocation3 + $0x80] sm:$0xff] %vm1471, 0.0
        %2090 = vst.msk [vmem:[#allocation3 + $0x88] sm:$0x3] %vm2074, 0.0
        %2091 = vst.msk [vmem:[#allocation3 + $0x90] sm:$0xff] %vm1471, 0.0
        %2092 = vst.msk [vmem:[#allocation3 + $0x98] sm:$0xff] %vm1471, 0.0
        %2093 = vst.msk [vmem:[#allocation3 + $0xa0] sm:$0x3] %vm2074, 0.0
        %2094 = vst.msk [vmem:[#allocation3 + $0xa8] sm:$0xff] %vm1471, 0.0
        %2095 = vst.msk [vmem:[#allocation3 + $0xb0] sm:$0xff] %vm1471, 0.0
        %2096 = vst.msk [vmem:[#allocation3 + $0xb8] sm:$0x3] %vm2074, 0.0
        %2097 = vst.msk [vmem:[#allocation3 + $0xc0] sm:$0xff] %vm1471, 0.0
        %2098 = vst.msk [vmem:[#allocation3 + $0xc8] sm:$0xff] %vm1471, 0.0
        %2099 = vst.msk [vmem:[#allocation3 + $0xd0] sm:$0x3] %vm2074, 0.0
        %2100 = vst.msk [vmem:[#allocation3 + $0xd8] sm:$0xff] %vm1471, 0.0
        %2101 = vst.msk [vmem:[#allocation3 + $0xe0] sm:$0xff] %vm1471, 0.0
        %2102 = vst.msk [vmem:[#allocation3 + $0xe8] sm:$0x3] %vm2074, 0.0
        %2103 = vst.msk [vmem:[#allocation3 + $0xf0] sm:$0xff] %vm1471, 0.0
        %2104 = vst.msk [vmem:[#allocation3 + $0xf8] sm:$0xff] %vm1471, 0.0
        %2105 = vst.msk [vmem:[#allocation3 + $0x100] sm:$0x3] %vm2074, 0.0
        %2106 = vst.msk [vmem:[#allocation3 + $0x108] sm:$0xff] %vm1471, 0.0
        %2107 = vst.msk [vmem:[#allocation3 + $0x110] sm:$0xff] %vm1471, 0.0
        %2108 = vst.msk [vmem:[#allocation3 + $0x118] sm:$0x3] %vm2074, 0.0
        %2109 = vst.msk [vmem:[#allocation3 + $0x120] sm:$0xff] %vm1471, 0.0
        %2110 = vst.msk [vmem:[#allocation3 + $0x128] sm:$0xff] %vm1471, 0.0
        %2111 = vst.msk [vmem:[#allocation3 + $0x130] sm:$0x3] %vm2074, 0.0
        %2112 = vst.msk [vmem:[#allocation3 + $0x138] sm:$0xff] %vm1471, 0.0
        %2113 = vst.msk [vmem:[#allocation3 + $0x140] sm:$0xff] %vm1471, 0.0
        %2114 = vst.msk [vmem:[#allocation3 + $0x148] sm:$0x3] %vm2074, 0.0
        %2115 = vst.msk [vmem:[#allocation3 + $0x150] sm:$0xff] %vm1471, 0.0
        %2116 = vst.msk [vmem:[#allocation3 + $0x158] sm:$0xff] %vm1471, 0.0
        %2117 = vst.msk [vmem:[#allocation3 + $0x160] sm:$0x3] %vm2074, 0.0
        %2118 = vst.msk [vmem:[#allocation3 + $0x168] sm:$0xff] %vm1471, 0.0
        %2119 = vst.msk [vmem:[#allocation3 + $0x170] sm:$0xff] %vm1471, 0.0
        %2120 = vst.msk [vmem:[#allocation3 + $0x178] sm:$0x3] %vm2074, 0.0
        %2121 = vst.msk [vmem:[#allocation3 + $0x180] sm:$0xff] %vm1471, 0.0
        %2122 = vst.msk [vmem:[#allocation3 + $0x188] sm:$0xff] %vm1471, 0.0
        %2123 = vst.msk [vmem:[#allocation3 + $0x190] sm:$0x3] %vm2074, 0.0
        %2124 = vst.msk [vmem:[#allocation3 + $0x198] sm:$0xff] %vm1471, 0.0
        %2125 = vst.msk [vmem:[#allocation3 + $0x1a0] sm:$0xff] %vm1471, 0.0
        %2126 = vst.msk [vmem:[#allocation3 + $0x1a8] sm:$0x3] %vm2074, 0.0
        %s2127 = scalar_lea.vmem [#allocation3], 24
        %2128 = vst.msk [vmem:[%s2127 + $0x1] sm:$0xff] %vm1471, %v2040
        %2129 = vst.msk [vmem:[%s2127 + $0x9] sm:$0xff] %vm1471, %v2041
        %2130 = vst.msk [vmem:[%s2127 + $0x19] sm:$0xff] %vm1471, %v2042
        %2131 = vst.msk [vmem:[%s2127 + $0x21] sm:$0xff] %vm1471, %v2043
        %2132 = vst.msk [vmem:[%s2127 + $0x31] sm:$0xff] %vm1471, %v2044
        %2133 = vst.msk [vmem:[%s2127 + $0x39] sm:$0xff] %vm1471, %v2045
        %2134 = vst.msk [vmem:[%s2127 + $0x49] sm:$0xff] %vm1471, %v2046
        %2135 = vst.msk [vmem:[%s2127 + $0x51] sm:$0xff] %vm1471, %v2047
        %2136 = vst.msk [vmem:[%s2127 + $0x61] sm:$0xff] %vm1471, %v2048
        %2137 = vst.msk [vmem:[%s2127 + $0x69] sm:$0xff] %vm1471, %v2049
        %2138 = vst.msk [vmem:[%s2127 + $0x79] sm:$0xff] %vm1471, %v2050
        %2139 = vst.msk [vmem:[%s2127 + $0x81] sm:$0xff] %vm1471, %v2051
        %2140 = vst.msk [vmem:[%s2127 + $0x91] sm:$0xff] %vm1471, %v2052
        %2141 = vst.msk [vmem:[%s2127 + $0x99] sm:$0xff] %vm1471, %v2053
        %2142 = vst.msk [vmem:[%s2127 + $0xa9] sm:$0xff] %vm1471, %v2054
        %2143 = vst.msk [vmem:[%s2127 + $0xb1] sm:$0xff] %vm1471, %v2055
        %2144 = vst.msk [vmem:[%s2127 + $0xc1] sm:$0xff] %vm1471, %v2056
        %2145 = vst.msk [vmem:[%s2127 + $0xc9] sm:$0xff] %vm1471, %v2057
        %2146 = vst.msk [vmem:[%s2127 + $0xd9] sm:$0xff] %vm1471, %v2058
        %2147 = vst.msk [vmem:[%s2127 + $0xe1] sm:$0xff] %vm1471, %v2059
        %2148 = vst.msk [vmem:[%s2127 + $0xf1] sm:$0xff] %vm1471, %v2060
        %2149 = vst.msk [vmem:[%s2127 + $0xf9] sm:$0xff] %vm1471, %v2061
        %2150 = vst.msk [vmem:[%s2127 + $0x109] sm:$0xff] %vm1471, %v2062
        %2151 = vst.msk [vmem:[%s2127 + $0x111] sm:$0xff] %vm1471, %v2063
        %2152 = vst.msk [vmem:[%s2127 + $0x121] sm:$0xff] %vm1471, %v2064
        %2153 = vst.msk [vmem:[%s2127 + $0x129] sm:$0xff] %vm1471, %v2065
        %2154 = vst.msk [vmem:[%s2127 + $0x139] sm:$0xff] %vm1471, %v2066
        %2155 = vst.msk [vmem:[%s2127 + $0x141] sm:$0xff] %vm1471, %v2067
        %2156 = vst.msk [vmem:[%s2127 + $0x151] sm:$0xff] %vm1471, %v2068
        %2157 = vst.msk [vmem:[%s2127 + $0x159] sm:$0xff] %vm1471, %v2069
        %2158 = vst.msk [vmem:[%s2127 + $0x169] sm:$0xff] %vm1471, %v2070
        %2159 = vst.msk [vmem:[%s2127 + $0x171] sm:$0xff] %vm1471, %v2071
        %v2160 = vld [vmem:[#allocation3] sm:$0xff]
        %v2161 = vld [vmem:[#allocation3 + $0x8] sm:$0xff]
        %v2162 = vld [vmem:[#allocation3 + $0x10] sm:$0x3]
        %v2163 = vld [vmem:[#allocation3 + $0x18] sm:$0xff]
        %v2164 = vld [vmem:[#allocation3 + $0x20] sm:$0xff]
        %v2165 = vld [vmem:[#allocation3 + $0x28] sm:$0x3]
        %v2166 = vld [vmem:[#allocation3 + $0x30] sm:$0xff]
        %v2167 = vld [vmem:[#allocation3 + $0x38] sm:$0xff]
        %v2168 = vld [vmem:[#allocation3 + $0x40] sm:$0x3]
        %v2169 = vld [vmem:[#allocation3 + $0x48] sm:$0xff]
        %v2170 = vld [vmem:[#allocation3 + $0x50] sm:$0xff]
        %v2171 = vld [vmem:[#allocation3 + $0x58] sm:$0x3]
        %v2172 = vld [vmem:[#allocation3 + $0x60] sm:$0xff]
        %v2173 = vld [vmem:[#allocation3 + $0x68] sm:$0xff]
        %v2174 = vld [vmem:[#allocation3 + $0x70] sm:$0x3]
        %v2175 = vld [vmem:[#allocation3 + $0x78] sm:$0xff]
        %v2176 = vld [vmem:[#allocation3 + $0x80] sm:$0xff]
        %v2177 = vld [vmem:[#allocation3 + $0x88] sm:$0x3]
        %v2178 = vld [vmem:[#allocation3 + $0x90] sm:$0xff]
        %v2179 = vld [vmem:[#allocation3 + $0x98] sm:$0xff]
        %v2180 = vld [vmem:[#allocation3 + $0xa0] sm:$0x3]
        %v2181 = vld [vmem:[#allocation3 + $0xa8] sm:$0xff]
        %v2182 = vld [vmem:[#allocation3 + $0xb0] sm:$0xff]
        %v2183 = vld [vmem:[#allocation3 + $0xb8] sm:$0x3]
        %v2184 = vld [vmem:[#allocation3 + $0xc0] sm:$0xff]
        %v2185 = vld [vmem:[#allocation3 + $0xc8] sm:$0xff]
        %v2186 = vld [vmem:[#allocation3 + $0xd0] sm:$0x3]
        %v2187 = vld [vmem:[#allocation3 + $0xd8] sm:$0xff]
        %v2188 = vld [vmem:[#allocation3 + $0xe0] sm:$0xff]
        %v2189 = vld [vmem:[#allocation3 + $0xe8] sm:$0x3]
        %v2190 = vld [vmem:[#allocation3 + $0xf0] sm:$0xff]
        %v2191 = vld [vmem:[#allocation3 + $0xf8] sm:$0xff]
        %v2192 = vld [vmem:[#allocation3 + $0x100] sm:$0x3]
        %v2193 = vld [vmem:[#allocation3 + $0x108] sm:$0xff]
        %v2194 = vld [vmem:[#allocation3 + $0x110] sm:$0xff]
        %v2195 = vld [vmem:[#allocation3 + $0x118] sm:$0x3]
        %v2196 = vld [vmem:[#allocation3 + $0x120] sm:$0xff]
        %v2197 = vld [vmem:[#allocation3 + $0x128] sm:$0xff]
        %v2198 = vld [vmem:[#allocation3 + $0x130] sm:$0x3]
        %v2199 = vld [vmem:[#allocation3 + $0x138] sm:$0xff]
        %v2200 = vld [vmem:[#allocation3 + $0x140] sm:$0xff]
        %v2201 = vld [vmem:[#allocation3 + $0x148] sm:$0x3]
        %v2202 = vld [vmem:[#allocation3 + $0x150] sm:$0xff]
        %v2203 = vld [vmem:[#allocation3 + $0x158] sm:$0xff]
        %v2204 = vld [vmem:[#allocation3 + $0x160] sm:$0x3]
        %v2205 = vld [vmem:[#allocation3 + $0x168] sm:$0xff]
        %v2206 = vld [vmem:[#allocation3 + $0x170] sm:$0xff]
        %v2207 = vld [vmem:[#allocation3 + $0x178] sm:$0x3]
        %v2208 = vld [vmem:[#allocation3 + $0x180] sm:$0xff]
        %v2209 = vld [vmem:[#allocation3 + $0x188] sm:$0xff]
        %v2210 = vld [vmem:[#allocation3 + $0x190] sm:$0x3]
        %v2211 = vld [vmem:[#allocation3 + $0x198] sm:$0xff]
        %v2212 = vld [vmem:[#allocation3 + $0x1a0] sm:$0xff]
        %v2213 = vld [vmem:[#allocation3 + $0x1a8] sm:$0x3]
        %v2262 = vrot.slane %v2160, 1
        %v2263 = vrot.slane %v2161, 1
        %v2264 = vsel %vm483, %v2262, %v2263
        %v2265 = vrot.slane %v2162, 1
        %v2266 = vsel %vm483, %v2263, %v2265
        %v2267 = vrot.slane %v2163, 1
        %v2268 = vrot.slane %v2164, 1
        %v2269 = vsel %vm483, %v2267, %v2268
        %v2270 = vrot.slane %v2165, 1
        %v2271 = vsel %vm483, %v2268, %v2270
        %v2272 = vrot.slane %v2166, 1
        %v2273 = vrot.slane %v2167, 1
        %v2274 = vsel %vm483, %v2272, %v2273
        %v2275 = vrot.slane %v2168, 1
        %v2276 = vsel %vm483, %v2273, %v2275
        %v2277 = vrot.slane %v2169, 1
        %v2278 = vrot.slane %v2170, 1
        %v2279 = vsel %vm483, %v2277, %v2278
        %v2280 = vrot.slane %v2171, 1
        %v2281 = vsel %vm483, %v2278, %v2280
        %v2282 = vrot.slane %v2172, 1
        %v2283 = vrot.slane %v2173, 1
        %v2284 = vsel %vm483, %v2282, %v2283
        %v2285 = vrot.slane %v2174, 1
        %v2286 = vsel %vm483, %v2283, %v2285
        %v2287 = vrot.slane %v2175, 1
        %v2288 = vrot.slane %v2176, 1
        %v2289 = vsel %vm483, %v2287, %v2288
        %v2290 = vrot.slane %v2177, 1
        %v2291 = vsel %vm483, %v2288, %v2290
        %v2292 = vrot.slane %v2178, 1
        %v2293 = vrot.slane %v2179, 1
        %v2294 = vsel %vm483, %v2292, %v2293
        %v2295 = vrot.slane %v2180, 1
        %v2296 = vsel %vm483, %v2293, %v2295
        %v2297 = vrot.slane %v2181, 1
        %v2298 = vrot.slane %v2182, 1
        %v2299 = vsel %vm483, %v2297, %v2298
        %v2300 = vrot.slane %v2183, 1
        %v2301 = vsel %vm483, %v2298, %v2300
        %v2302 = vrot.slane %v2184, 1
        %v2303 = vrot.slane %v2185, 1
        %v2304 = vsel %vm483, %v2302, %v2303
        %v2305 = vrot.slane %v2186, 1
        %v2306 = vsel %vm483, %v2303, %v2305
        %v2307 = vrot.slane %v2187, 1
        %v2308 = vrot.slane %v2188, 1
        %v2309 = vsel %vm483, %v2307, %v2308
        %v2310 = vrot.slane %v2189, 1
        %v2311 = vsel %vm483, %v2308, %v2310
        %v2312 = vrot.slane %v2190, 1
        %v2313 = vrot.slane %v2191, 1
        %v2314 = vsel %vm483, %v2312, %v2313
        %v2315 = vrot.slane %v2192, 1
        %v2316 = vsel %vm483, %v2313, %v2315
        %v2317 = vrot.slane %v2193, 1
        %v2318 = vrot.slane %v2194, 1
        %v2319 = vsel %vm483, %v2317, %v2318
        %v2320 = vrot.slane %v2195, 1
        %v2321 = vsel %vm483, %v2318, %v2320
        %v2322 = vrot.slane %v2196, 1
        %v2323 = vrot.slane %v2197, 1
        %v2324 = vsel %vm483, %v2322, %v2323
        %v2325 = vrot.slane %v2198, 1
        %v2326 = vsel %vm483, %v2323, %v2325
        %v2327 = vrot.slane %v2199, 1
        %v2328 = vrot.slane %v2200, 1
        %v2329 = vsel %vm483, %v2327, %v2328
        %v2330 = vrot.slane %v2201, 1
        %v2331 = vsel %vm483, %v2328, %v2330
        %v2332 = vrot.slane %v2202, 1
        %v2333 = vrot.slane %v2203, 1
        %v2334 = vsel %vm483, %v2332, %v2333
        %v2335 = vrot.slane %v2204, 1
        %v2336 = vsel %vm483, %v2333, %v2335
        %v2337 = vrot.slane %v2205, 1
        %v2338 = vrot.slane %v2206, 1
        %v2339 = vsel %vm483, %v2337, %v2338
        %v2340 = vrot.slane %v2207, 1
        %v2341 = vsel %vm483, %v2338, %v2340
        %2342 = vrot.lane.b32.xlu0 %v2264, 8
        %v2343 = vpop.permute.xlu0 %2342
        %2344 = vrot.lane.b32.xlu0 %v2266, 8
        %v2345 = vpop.permute.xlu0 %2344
        %2346 = vrot.lane.b32.xlu0 %v2269, 8
        %v2347 = vpop.permute.xlu0 %2346
        %2348 = vrot.lane.b32.xlu0 %v2271, 8
        %v2349 = vpop.permute.xlu0 %2348
        %2350 = vrot.lane.b32.xlu0 %v2274, 8
        %v2351 = vpop.permute.xlu0 %2350
        %2352 = vrot.lane.b32.xlu0 %v2276, 8
        %v2353 = vpop.permute.xlu0 %2352
        %2354 = vrot.lane.b32.xlu0 %v2279, 8
        %v2355 = vpop.permute.xlu0 %2354
        %2356 = vrot.lane.b32.xlu0 %v2281, 8
        %v2357 = vpop.permute.xlu0 %2356
        %2358 = vrot.lane.b32.xlu0 %v2284, 8
        %v2359 = vpop.permute.xlu0 %2358
        %2360 = vrot.lane.b32.xlu0 %v2286, 8
        %v2361 = vpop.permute.xlu0 %2360
        %2362 = vrot.lane.b32.xlu0 %v2289, 8
        %v2363 = vpop.permute.xlu0 %2362
        %2364 = vrot.lane.b32.xlu0 %v2291, 8
        %v2365 = vpop.permute.xlu0 %2364
        %2366 = vrot.lane.b32.xlu0 %v2294, 8
        %v2367 = vpop.permute.xlu0 %2366
        %2368 = vrot.lane.b32.xlu0 %v2296, 8
        %v2369 = vpop.permute.xlu0 %2368
        %2370 = vrot.lane.b32.xlu0 %v2299, 8
        %v2371 = vpop.permute.xlu0 %2370
        %2372 = vrot.lane.b32.xlu0 %v2301, 8
        %v2373 = vpop.permute.xlu0 %2372
        %2374 = vrot.lane.b32.xlu0 %v2304, 8
        %v2375 = vpop.permute.xlu0 %2374
        %2376 = vrot.lane.b32.xlu0 %v2306, 8
        %v2377 = vpop.permute.xlu0 %2376
        %2378 = vrot.lane.b32.xlu0 %v2309, 8
        %v2379 = vpop.permute.xlu0 %2378
        %2380 = vrot.lane.b32.xlu0 %v2311, 8
        %v2381 = vpop.permute.xlu0 %2380
        %2382 = vrot.lane.b32.xlu0 %v2314, 8
        %v2383 = vpop.permute.xlu0 %2382
        %2384 = vrot.lane.b32.xlu0 %v2316, 8
        %v2385 = vpop.permute.xlu0 %2384
        %2386 = vrot.lane.b32.xlu0 %v2319, 8
        %v2387 = vpop.permute.xlu0 %2386
        %2388 = vrot.lane.b32.xlu0 %v2321, 8
        %v2389 = vpop.permute.xlu0 %2388
        %2390 = vrot.lane.b32.xlu0 %v2324, 8
        %v2391 = vpop.permute.xlu0 %2390
        %2392 = vrot.lane.b32.xlu0 %v2326, 8
        %v2393 = vpop.permute.xlu0 %2392
        %2394 = vrot.lane.b32.xlu0 %v2329, 8
        %v2395 = vpop.permute.xlu0 %2394
        %2396 = vrot.lane.b32.xlu0 %v2331, 8
        %v2397 = vpop.permute.xlu0 %2396
        %2398 = vrot.lane.b32.xlu0 %v2334, 8
        %v2399 = vpop.permute.xlu0 %2398
        %2400 = vrot.lane.b32.xlu0 %v2336, 8
        %v2401 = vpop.permute.xlu0 %2400
        %2402 = vrot.lane.b32.xlu0 %v2339, 8
        %v2403 = vpop.permute.xlu0 %2402
        %2404 = vrot.lane.b32.xlu0 %v2341, 8
        %v2405 = vpop.permute.xlu0 %2404
        %v2438 = vrot.slane %v2160, 2
        %v2439 = vrot.slane %v2161, 2
        %v2440 = vsel %vm660, %v2438, %v2439
        %v2441 = vrot.slane %v2162, 2
        %v2442 = vsel %vm660, %v2439, %v2441
        %v2443 = vrot.slane %v2163, 2
        %v2444 = vrot.slane %v2164, 2
        %v2445 = vsel %vm660, %v2443, %v2444
        %v2446 = vrot.slane %v2165, 2
        %v2447 = vsel %vm660, %v2444, %v2446
        %v2448 = vrot.slane %v2166, 2
        %v2449 = vrot.slane %v2167, 2
        %v2450 = vsel %vm660, %v2448, %v2449
        %v2451 = vrot.slane %v2168, 2
        %v2452 = vsel %vm660, %v2449, %v2451
        %v2453 = vrot.slane %v2169, 2
        %v2454 = vrot.slane %v2170, 2
        %v2455 = vsel %vm660, %v2453, %v2454
        %v2456 = vrot.slane %v2171, 2
        %v2457 = vsel %vm660, %v2454, %v2456
        %v2458 = vrot.slane %v2172, 2
        %v2459 = vrot.slane %v2173, 2
        %v2460 = vsel %vm660, %v2458, %v2459
        %v2461 = vrot.slane %v2174, 2
        %v2462 = vsel %vm660, %v2459, %v2461
        %v2463 = vrot.slane %v2175, 2
        %v2464 = vrot.slane %v2176, 2
        %v2465 = vsel %vm660, %v2463, %v2464
        %v2466 = vrot.slane %v2177, 2
        %v2467 = vsel %vm660, %v2464, %v2466
        %v2468 = vrot.slane %v2178, 2
        %v2469 = vrot.slane %v2179, 2
        %v2470 = vsel %vm660, %v2468, %v2469
        %v2471 = vrot.slane %v2180, 2
        %v2472 = vsel %vm660, %v2469, %v2471
        %v2473 = vrot.slane %v2181, 2
        %v2474 = vrot.slane %v2182, 2
        %v2475 = vsel %vm660, %v2473, %v2474
        %v2476 = vrot.slane %v2183, 2
        %v2477 = vsel %vm660, %v2474, %v2476
        %v2478 = vrot.slane %v2184, 2
        %v2479 = vrot.slane %v2185, 2
        %v2480 = vsel %vm660, %v2478, %v2479
        %v2481 = vrot.slane %v2186, 2
        %v2482 = vsel %vm660, %v2479, %v2481
        %v2483 = vrot.slane %v2187, 2
        %v2484 = vrot.slane %v2188, 2
        %v2485 = vsel %vm660, %v2483, %v2484
        %v2486 = vrot.slane %v2189, 2
        %v2487 = vsel %vm660, %v2484, %v2486
        %v2488 = vrot.slane %v2190, 2
        %v2489 = vrot.slane %v2191, 2
        %v2490 = vsel %vm660, %v2488, %v2489
        %v2491 = vrot.slane %v2192, 2
        %v2492 = vsel %vm660, %v2489, %v2491
        %v2493 = vrot.slane %v2193, 2
        %v2494 = vrot.slane %v2194, 2
        %v2495 = vsel %vm660, %v2493, %v2494
        %v2496 = vrot.slane %v2195, 2
        %v2497 = vsel %vm660, %v2494, %v2496
        %v2498 = vrot.slane %v2196, 2
        %v2499 = vrot.slane %v2197, 2
        %v2500 = vsel %vm660, %v2498, %v2499
        %v2501 = vrot.slane %v2198, 2
        %v2502 = vsel %vm660, %v2499, %v2501
        %v2503 = vrot.slane %v2199, 2
        %v2504 = vrot.slane %v2200, 2
        %v2505 = vsel %vm660, %v2503, %v2504
        %v2506 = vrot.slane %v2201, 2
        %v2507 = vsel %vm660, %v2504, %v2506
        %v2508 = vrot.slane %v2202, 2
        %v2509 = vrot.slane %v2203, 2
        %v2510 = vsel %vm660, %v2508, %v2509
        %v2511 = vrot.slane %v2204, 2
        %v2512 = vsel %vm660, %v2509, %v2511
        %v2513 = vrot.slane %v2205, 2
        %v2514 = vrot.slane %v2206, 2
        %v2515 = vsel %vm660, %v2513, %v2514
        %v2516 = vrot.slane %v2207, 2
        %v2517 = vsel %vm660, %v2514, %v2516
        %2518 = vrot.lane.b32.xlu0 %v2440, 16
        %v2519 = vpop.permute.xlu0 %2518
        %2520 = vrot.lane.b32.xlu0 %v2442, 16
        %v2521 = vpop.permute.xlu0 %2520
        %2522 = vrot.lane.b32.xlu0 %v2445, 16
        %v2523 = vpop.permute.xlu0 %2522
        %2524 = vrot.lane.b32.xlu0 %v2447, 16
        %v2525 = vpop.permute.xlu0 %2524
        %2526 = vrot.lane.b32.xlu0 %v2450, 16
        %v2527 = vpop.permute.xlu0 %2526
        %2528 = vrot.lane.b32.xlu0 %v2452, 16
        %v2529 = vpop.permute.xlu0 %2528
        %2530 = vrot.lane.b32.xlu0 %v2455, 16
        %v2531 = vpop.permute.xlu0 %2530
        %2532 = vrot.lane.b32.xlu0 %v2457, 16
        %v2533 = vpop.permute.xlu0 %2532
        %2534 = vrot.lane.b32.xlu0 %v2460, 16
        %v2535 = vpop.permute.xlu0 %2534
        %2536 = vrot.lane.b32.xlu0 %v2462, 16
        %v2537 = vpop.permute.xlu0 %2536
        %2538 = vrot.lane.b32.xlu0 %v2465, 16
        %v2539 = vpop.permute.xlu0 %2538
        %2540 = vrot.lane.b32.xlu0 %v2467, 16
        %v2541 = vpop.permute.xlu0 %2540
        %2542 = vrot.lane.b32.xlu0 %v2470, 16
        %v2543 = vpop.permute.xlu0 %2542
        %2544 = vrot.lane.b32.xlu0 %v2472, 16
        %v2545 = vpop.permute.xlu0 %2544
        %2546 = vrot.lane.b32.xlu0 %v2475, 16
        %v2547 = vpop.permute.xlu0 %2546
        %2548 = vrot.lane.b32.xlu0 %v2477, 16
        %v2549 = vpop.permute.xlu0 %2548
        %2550 = vrot.lane.b32.xlu0 %v2480, 16
        %v2551 = vpop.permute.xlu0 %2550
        %2552 = vrot.lane.b32.xlu0 %v2482, 16
        %v2553 = vpop.permute.xlu0 %2552
        %2554 = vrot.lane.b32.xlu0 %v2485, 16
        %v2555 = vpop.permute.xlu0 %2554
        %2556 = vrot.lane.b32.xlu0 %v2487, 16
        %v2557 = vpop.permute.xlu0 %2556
        %2558 = vrot.lane.b32.xlu0 %v2490, 16
        %v2559 = vpop.permute.xlu0 %2558
        %2560 = vrot.lane.b32.xlu0 %v2492, 16
        %v2561 = vpop.permute.xlu0 %2560
        %2562 = vrot.lane.b32.xlu0 %v2495, 16
        %v2563 = vpop.permute.xlu0 %2562
        %2564 = vrot.lane.b32.xlu0 %v2497, 16
        %v2565 = vpop.permute.xlu0 %2564
        %2566 = vrot.lane.b32.xlu0 %v2500, 16
        %v2567 = vpop.permute.xlu0 %2566
        %2568 = vrot.lane.b32.xlu0 %v2502, 16
        %v2569 = vpop.permute.xlu0 %2568
        %2570 = vrot.lane.b32.xlu0 %v2505, 16
        %v2571 = vpop.permute.xlu0 %2570
        %2572 = vrot.lane.b32.xlu0 %v2507, 16
        %v2573 = vpop.permute.xlu0 %2572
        %2574 = vrot.lane.b32.xlu0 %v2510, 16
        %v2575 = vpop.permute.xlu0 %2574
        %2576 = vrot.lane.b32.xlu0 %v2512, 16
        %v2577 = vpop.permute.xlu0 %2576
        %2578 = vrot.lane.b32.xlu0 %v2515, 16
        %v2579 = vpop.permute.xlu0 %2578
        %2580 = vrot.lane.b32.xlu0 %v2517, 16
        %v2581 = vpop.permute.xlu0 %2580
        %2616 = vrot.lane.b32.xlu0 %v2163, 24
        %v2617 = vpop.permute.xlu0 %2616
        %2618 = vrot.lane.b32.xlu0 %v2164, 24
        %v2619 = vpop.permute.xlu0 %2618
        %2620 = vrot.lane.b32.xlu0 %v2166, 24
        %v2621 = vpop.permute.xlu0 %2620
        %2622 = vrot.lane.b32.xlu0 %v2167, 24
        %v2623 = vpop.permute.xlu0 %2622
        %2624 = vrot.lane.b32.xlu0 %v2169, 24
        %v2625 = vpop.permute.xlu0 %2624
        %2626 = vrot.lane.b32.xlu0 %v2170, 24
        %v2627 = vpop.permute.xlu0 %2626
        %2628 = vrot.lane.b32.xlu0 %v2172, 24
        %v2629 = vpop.permute.xlu0 %2628
        %2630 = vrot.lane.b32.xlu0 %v2173, 24
        %v2631 = vpop.permute.xlu0 %2630
        %2632 = vrot.lane.b32.xlu0 %v2175, 24
        %v2633 = vpop.permute.xlu0 %2632
        %2634 = vrot.lane.b32.xlu0 %v2176, 24
        %v2635 = vpop.permute.xlu0 %2634
        %2636 = vrot.lane.b32.xlu0 %v2178, 24
        %v2637 = vpop.permute.xlu0 %2636
        %2638 = vrot.lane.b32.xlu0 %v2179, 24
        %v2639 = vpop.permute.xlu0 %2638
        %2640 = vrot.lane.b32.xlu0 %v2181, 24
        %v2641 = vpop.permute.xlu0 %2640
        %2642 = vrot.lane.b32.xlu0 %v2182, 24
        %v2643 = vpop.permute.xlu0 %2642
        %2644 = vrot.lane.b32.xlu0 %v2184, 24
        %v2645 = vpop.permute.xlu0 %2644
        %2646 = vrot.lane.b32.xlu0 %v2185, 24
        %v2647 = vpop.permute.xlu0 %2646
        %2648 = vrot.lane.b32.xlu0 %v2187, 24
        %v2649 = vpop.permute.xlu0 %2648
        %2650 = vrot.lane.b32.xlu0 %v2188, 24
        %v2651 = vpop.permute.xlu0 %2650
        %2652 = vrot.lane.b32.xlu0 %v2190, 24
        %v2653 = vpop.permute.xlu0 %2652
        %2654 = vrot.lane.b32.xlu0 %v2191, 24
        %v2655 = vpop.permute.xlu0 %2654
        %2656 = vrot.lane.b32.xlu0 %v2193, 24
        %v2657 = vpop.permute.xlu0 %2656
        %2658 = vrot.lane.b32.xlu0 %v2194, 24
        %v2659 = vpop.permute.xlu0 %2658
        %2660 = vrot.lane.b32.xlu0 %v2196, 24
        %v2661 = vpop.permute.xlu0 %2660
        %2662 = vrot.lane.b32.xlu0 %v2197, 24
        %v2663 = vpop.permute.xlu0 %2662
        %2664 = vrot.lane.b32.xlu0 %v2199, 24
        %v2665 = vpop.permute.xlu0 %2664
        %2666 = vrot.lane.b32.xlu0 %v2200, 24
        %v2667 = vpop.permute.xlu0 %2666
        %2668 = vrot.lane.b32.xlu0 %v2202, 24
        %v2669 = vpop.permute.xlu0 %2668
        %2670 = vrot.lane.b32.xlu0 %v2203, 24
        %v2671 = vpop.permute.xlu0 %2670
        %2672 = vrot.lane.b32.xlu0 %v2205, 24
        %v2673 = vpop.permute.xlu0 %2672
        %2674 = vrot.lane.b32.xlu0 %v2206, 24
        %v2675 = vpop.permute.xlu0 %2674
        %2676 = vrot.lane.b32.xlu0 %v2208, 24
        %v2677 = vpop.permute.xlu0 %2676
        %2678 = vrot.lane.b32.xlu0 %v2209, 24
        %v2679 = vpop.permute.xlu0 %2678
        %v2713 = vrot.slane %v2208, 1
        %v2714 = vrot.slane %v2209, 1
        %v2715 = vsel %vm483, %v2713, %v2714
        %v2716 = vrot.slane %v2210, 1
        %v2717 = vsel %vm483, %v2714, %v2716
        %2718 = vrot.lane.b32.xlu0 %v2269, 32
        %v2719 = vpop.permute.xlu0 %2718
        %2720 = vrot.lane.b32.xlu0 %v2271, 32
        %v2721 = vpop.permute.xlu0 %2720
        %2722 = vrot.lane.b32.xlu0 %v2274, 32
        %v2723 = vpop.permute.xlu0 %2722
        %2724 = vrot.lane.b32.xlu0 %v2276, 32
        %v2725 = vpop.permute.xlu0 %2724
        %2726 = vrot.lane.b32.xlu0 %v2279, 32
        %v2727 = vpop.permute.xlu0 %2726
        %2728 = vrot.lane.b32.xlu0 %v2281, 32
        %v2729 = vpop.permute.xlu0 %2728
        %2730 = vrot.lane.b32.xlu0 %v2284, 32
        %v2731 = vpop.permute.xlu0 %2730
        %2732 = vrot.lane.b32.xlu0 %v2286, 32
        %v2733 = vpop.permute.xlu0 %2732
        %2734 = vrot.lane.b32.xlu0 %v2289, 32
        %v2735 = vpop.permute.xlu0 %2734
        %2736 = vrot.lane.b32.xlu0 %v2291, 32
        %v2737 = vpop.permute.xlu0 %2736
        %2738 = vrot.lane.b32.xlu0 %v2294, 32
        %v2739 = vpop.permute.xlu0 %2738
        %2740 = vrot.lane.b32.xlu0 %v2296, 32
        %v2741 = vpop.permute.xlu0 %2740
        %2742 = vrot.lane.b32.xlu0 %v2299, 32
        %v2743 = vpop.permute.xlu0 %2742
        %2744 = vrot.lane.b32.xlu0 %v2301, 32
        %v2745 = vpop.permute.xlu0 %2744
        %2746 = vrot.lane.b32.xlu0 %v2304, 32
        %v2747 = vpop.permute.xlu0 %2746
        %2748 = vrot.lane.b32.xlu0 %v2306, 32
        %v2749 = vpop.permute.xlu0 %2748
        %2750 = vrot.lane.b32.xlu0 %v2309, 32
        %v2751 = vpop.permute.xlu0 %2750
        %2752 = vrot.lane.b32.xlu0 %v2311, 32
        %v2753 = vpop.permute.xlu0 %2752
        %2754 = vrot.lane.b32.xlu0 %v2314, 32
        %v2755 = vpop.permute.xlu0 %2754
        %2756 = vrot.lane.b32.xlu0 %v2316, 32
        %v2757 = vpop.permute.xlu0 %2756
        %2758 = vrot.lane.b32.xlu0 %v2319, 32
        %v2759 = vpop.permute.xlu0 %2758
        %2760 = vrot.lane.b32.xlu0 %v2321, 32
        %v2761 = vpop.permute.xlu0 %2760
        %2762 = vrot.lane.b32.xlu0 %v2324, 32
        %v2763 = vpop.permute.xlu0 %2762
        %2764 = vrot.lane.b32.xlu0 %v2326, 32
        %v2765 = vpop.permute.xlu0 %2764
        %2766 = vrot.lane.b32.xlu0 %v2329, 32
        %v2767 = vpop.permute.xlu0 %2766
        %2768 = vrot.lane.b32.xlu0 %v2331, 32
        %v2769 = vpop.permute.xlu0 %2768
        %2770 = vrot.lane.b32.xlu0 %v2334, 32
        %v2771 = vpop.permute.xlu0 %2770
        %2772 = vrot.lane.b32.xlu0 %v2336, 32
        %v2773 = vpop.permute.xlu0 %2772
        %2774 = vrot.lane.b32.xlu0 %v2339, 32
        %v2775 = vpop.permute.xlu0 %2774
        %2776 = vrot.lane.b32.xlu0 %v2341, 32
        %v2777 = vpop.permute.xlu0 %2776
        %2778 = vrot.lane.b32.xlu0 %v2715, 32
        %v2779 = vpop.permute.xlu0 %2778
        %2780 = vrot.lane.b32.xlu0 %v2717, 32
        %v2781 = vpop.permute.xlu0 %2780
        %v2814 = vrot.slane %v2208, 2
        %v2815 = vrot.slane %v2209, 2
        %v2816 = vsel %vm660, %v2814, %v2815
        %v2817 = vrot.slane %v2210, 2
        %v2818 = vsel %vm660, %v2815, %v2817
        %2819 = vrot.lane.b32.xlu0 %v2445, 40
        %v2820 = vpop.permute.xlu0 %2819
        %2821 = vrot.lane.b32.xlu0 %v2447, 40
        %v2822 = vpop.permute.xlu0 %2821
        %2823 = vrot.lane.b32.xlu0 %v2450, 40
        %v2824 = vpop.permute.xlu0 %2823
        %2825 = vrot.lane.b32.xlu0 %v2452, 40
        %v2826 = vpop.permute.xlu0 %2825
        %2827 = vrot.lane.b32.xlu0 %v2455, 40
        %v2828 = vpop.permute.xlu0 %2827
        %2829 = vrot.lane.b32.xlu0 %v2457, 40
        %v2830 = vpop.permute.xlu0 %2829
        %2831 = vrot.lane.b32.xlu0 %v2460, 40
        %v2832 = vpop.permute.xlu0 %2831
        %2833 = vrot.lane.b32.xlu0 %v2462, 40
        %v2834 = vpop.permute.xlu0 %2833
        %2835 = vrot.lane.b32.xlu0 %v2465, 40
        %v2836 = vpop.permute.xlu0 %2835
        %2837 = vrot.lane.b32.xlu0 %v2467, 40
        %v2838 = vpop.permute.xlu0 %2837
        %2839 = vrot.lane.b32.xlu0 %v2470, 40
        %v2840 = vpop.permute.xlu0 %2839
        %2841 = vrot.lane.b32.xlu0 %v2472, 40
        %v2842 = vpop.permute.xlu0 %2841
        %2843 = vrot.lane.b32.xlu0 %v2475, 40
        %v2844 = vpop.permute.xlu0 %2843
        %2845 = vrot.lane.b32.xlu0 %v2477, 40
        %v2846 = vpop.permute.xlu0 %2845
        %2847 = vrot.lane.b32.xlu0 %v2480, 40
        %v2848 = vpop.permute.xlu0 %2847
        %2849 = vrot.lane.b32.xlu0 %v2482, 40
        %v2850 = vpop.permute.xlu0 %2849
        %2851 = vrot.lane.b32.xlu0 %v2485, 40
        %v2852 = vpop.permute.xlu0 %2851
        %2853 = vrot.lane.b32.xlu0 %v2487, 40
        %v2854 = vpop.permute.xlu0 %2853
        %2855 = vrot.lane.b32.xlu0 %v2490, 40
        %v2856 = vpop.permute.xlu0 %2855
        %2857 = vrot.lane.b32.xlu0 %v2492, 40
        %v2858 = vpop.permute.xlu0 %2857
        %2859 = vrot.lane.b32.xlu0 %v2495, 40
        %v2860 = vpop.permute.xlu0 %2859
        %2861 = vrot.lane.b32.xlu0 %v2497, 40
        %v2862 = vpop.permute.xlu0 %2861
        %2863 = vrot.lane.b32.xlu0 %v2500, 40
        %v2864 = vpop.permute.xlu0 %2863
        %2865 = vrot.lane.b32.xlu0 %v2502, 40
        %v2866 = vpop.permute.xlu0 %2865
        %2867 = vrot.lane.b32.xlu0 %v2505, 40
        %v2868 = vpop.permute.xlu0 %2867
        %2869 = vrot.lane.b32.xlu0 %v2507, 40
        %v2870 = vpop.permute.xlu0 %2869
        %2871 = vrot.lane.b32.xlu0 %v2510, 40
        %v2872 = vpop.permute.xlu0 %2871
        %2873 = vrot.lane.b32.xlu0 %v2512, 40
        %v2874 = vpop.permute.xlu0 %2873
        %2875 = vrot.lane.b32.xlu0 %v2515, 40
        %v2876 = vpop.permute.xlu0 %2875
        %2877 = vrot.lane.b32.xlu0 %v2517, 40
        %v2878 = vpop.permute.xlu0 %2877
        %2879 = vrot.lane.b32.xlu0 %v2816, 40
        %v2880 = vpop.permute.xlu0 %2879
        %2881 = vrot.lane.b32.xlu0 %v2818, 40
        %v2882 = vpop.permute.xlu0 %2881
        %2917 = vrot.lane.b32.xlu0 %v2166, 48
        %v2918 = vpop.permute.xlu0 %2917
        %2919 = vrot.lane.b32.xlu0 %v2167, 48
        %v2920 = vpop.permute.xlu0 %2919
        %2921 = vrot.lane.b32.xlu0 %v2169, 48
        %v2922 = vpop.permute.xlu0 %2921
        %2923 = vrot.lane.b32.xlu0 %v2170, 48
        %v2924 = vpop.permute.xlu0 %2923
        %2925 = vrot.lane.b32.xlu0 %v2172, 48
        %v2926 = vpop.permute.xlu0 %2925
        %2927 = vrot.lane.b32.xlu0 %v2173, 48
        %v2928 = vpop.permute.xlu0 %2927
        %2929 = vrot.lane.b32.xlu0 %v2175, 48
        %v2930 = vpop.permute.xlu0 %2929
        %2931 = vrot.lane.b32.xlu0 %v2176, 48
        %v2932 = vpop.permute.xlu0 %2931
        %2933 = vrot.lane.b32.xlu0 %v2178, 48
        %v2934 = vpop.permute.xlu0 %2933
        %2935 = vrot.lane.b32.xlu0 %v2179, 48
        %v2936 = vpop.permute.xlu0 %2935
        %2937 = vrot.lane.b32.xlu0 %v2181, 48
        %v2938 = vpop.permute.xlu0 %2937
        %2939 = vrot.lane.b32.xlu0 %v2182, 48
        %v2940 = vpop.permute.xlu0 %2939
        %2941 = vrot.lane.b32.xlu0 %v2184, 48
        %v2942 = vpop.permute.xlu0 %2941
        %2943 = vrot.lane.b32.xlu0 %v2185, 48
        %v2944 = vpop.permute.xlu0 %2943
        %2945 = vrot.lane.b32.xlu0 %v2187, 48
        %v2946 = vpop.permute.xlu0 %2945
        %2947 = vrot.lane.b32.xlu0 %v2188, 48
        %v2948 = vpop.permute.xlu0 %2947
        %2949 = vrot.lane.b32.xlu0 %v2190, 48
        %v2950 = vpop.permute.xlu0 %2949
        %2951 = vrot.lane.b32.xlu0 %v2191, 48
        %v2952 = vpop.permute.xlu0 %2951
        %2953 = vrot.lane.b32.xlu0 %v2193, 48
        %v2954 = vpop.permute.xlu0 %2953
        %2955 = vrot.lane.b32.xlu0 %v2194, 48
        %v2956 = vpop.permute.xlu0 %2955
        %2957 = vrot.lane.b32.xlu0 %v2196, 48
        %v2958 = vpop.permute.xlu0 %2957
        %2959 = vrot.lane.b32.xlu0 %v2197, 48
        %v2960 = vpop.permute.xlu0 %2959
        %2961 = vrot.lane.b32.xlu0 %v2199, 48
        %v2962 = vpop.permute.xlu0 %2961
        %2963 = vrot.lane.b32.xlu0 %v2200, 48
        %v2964 = vpop.permute.xlu0 %2963
        %2965 = vrot.lane.b32.xlu0 %v2202, 48
        %v2966 = vpop.permute.xlu0 %2965
        %2967 = vrot.lane.b32.xlu0 %v2203, 48
        %v2968 = vpop.permute.xlu0 %2967
        %2969 = vrot.lane.b32.xlu0 %v2205, 48
        %v2970 = vpop.permute.xlu0 %2969
        %2971 = vrot.lane.b32.xlu0 %v2206, 48
        %v2972 = vpop.permute.xlu0 %2971
        %2973 = vrot.lane.b32.xlu0 %v2208, 48
        %v2974 = vpop.permute.xlu0 %2973
        %2975 = vrot.lane.b32.xlu0 %v2209, 48
        %v2976 = vpop.permute.xlu0 %2975
        %2977 = vrot.lane.b32.xlu0 %v2211, 48
        %v2978 = vpop.permute.xlu0 %2977
        %2979 = vrot.lane.b32.xlu0 %v2212, 48
        %v2980 = vpop.permute.xlu0 %2979
        %v3014 = vrot.slane %v2211, 1
        %v3015 = vrot.slane %v2212, 1
        %v3016 = vsel %vm483, %v3014, %v3015
        %v3017 = vrot.slane %v2213, 1
        %v3018 = vsel %vm483, %v3015, %v3017
        %3019 = vrot.lane.b32.xlu0 %v2274, 56
        %v3020 = vpop.permute.xlu0 %3019
        %3021 = vrot.lane.b32.xlu0 %v2276, 56
        %v3022 = vpop.permute.xlu0 %3021
        %3023 = vrot.lane.b32.xlu0 %v2279, 56
        %v3024 = vpop.permute.xlu0 %3023
        %3025 = vrot.lane.b32.xlu0 %v2281, 56
        %v3026 = vpop.permute.xlu0 %3025
        %3027 = vrot.lane.b32.xlu0 %v2284, 56
        %v3028 = vpop.permute.xlu0 %3027
        %3029 = vrot.lane.b32.xlu0 %v2286, 56
        %v3030 = vpop.permute.xlu0 %3029
        %3031 = vrot.lane.b32.xlu0 %v2289, 56
        %v3032 = vpop.permute.xlu0 %3031
        %3033 = vrot.lane.b32.xlu0 %v2291, 56
        %v3034 = vpop.permute.xlu0 %3033
        %3035 = vrot.lane.b32.xlu0 %v2294, 56
        %v3036 = vpop.permute.xlu0 %3035
        %3037 = vrot.lane.b32.xlu0 %v2296, 56
        %v3038 = vpop.permute.xlu0 %3037
        %3039 = vrot.lane.b32.xlu0 %v2299, 56
        %v3040 = vpop.permute.xlu0 %3039
        %3041 = vrot.lane.b32.xlu0 %v2301, 56
        %v3042 = vpop.permute.xlu0 %3041
        %3043 = vrot.lane.b32.xlu0 %v2304, 56
        %v3044 = vpop.permute.xlu0 %3043
        %3045 = vrot.lane.b32.xlu0 %v2306, 56
        %v3046 = vpop.permute.xlu0 %3045
        %3047 = vrot.lane.b32.xlu0 %v2309, 56
        %v3048 = vpop.permute.xlu0 %3047
        %3049 = vrot.lane.b32.xlu0 %v2311, 56
        %v3050 = vpop.permute.xlu0 %3049
        %3051 = vrot.lane.b32.xlu0 %v2314, 56
        %v3052 = vpop.permute.xlu0 %3051
        %3053 = vrot.lane.b32.xlu0 %v2316, 56
        %v3054 = vpop.permute.xlu0 %3053
        %3055 = vrot.lane.b32.xlu0 %v2319, 56
        %v3056 = vpop.permute.xlu0 %3055
        %3057 = vrot.lane.b32.xlu0 %v2321, 56
        %v3058 = vpop.permute.xlu0 %3057
        %3059 = vrot.lane.b32.xlu0 %v2324, 56
        %v3060 = vpop.permute.xlu0 %3059
        %3061 = vrot.lane.b32.xlu0 %v2326, 56
        %v3062 = vpop.permute.xlu0 %3061
        %3063 = vrot.lane.b32.xlu0 %v2329, 56
        %v3064 = vpop.permute.xlu0 %3063
        %3065 = vrot.lane.b32.xlu0 %v2331, 56
        %v3066 = vpop.permute.xlu0 %3065
        %3067 = vrot.lane.b32.xlu0 %v2334, 56
        %v3068 = vpop.permute.xlu0 %3067
        %3069 = vrot.lane.b32.xlu0 %v2336, 56
        %v3070 = vpop.permute.xlu0 %3069
        %3071 = vrot.lane.b32.xlu0 %v2339, 56
        %v3072 = vpop.permute.xlu0 %3071
        %3073 = vrot.lane.b32.xlu0 %v2341, 56
        %v3074 = vpop.permute.xlu0 %3073
        %3075 = vrot.lane.b32.xlu0 %v2715, 56
        %v3076 = vpop.permute.xlu0 %3075
        %3077 = vrot.lane.b32.xlu0 %v2717, 56
        %v3078 = vpop.permute.xlu0 %3077
        %3079 = vrot.lane.b32.xlu0 %v3016, 56
        %v3080 = vpop.permute.xlu0 %3079
        %3081 = vrot.lane.b32.xlu0 %v3018, 56
        %v3082 = vpop.permute.xlu0 %3081
        %v3115 = vrot.slane %v2211, 2
        %v3116 = vrot.slane %v2212, 2
        %v3117 = vsel %vm660, %v3115, %v3116
        %v3118 = vrot.slane %v2213, 2
        %v3119 = vsel %vm660, %v3116, %v3118
        %3120 = vrot.lane.b32.xlu0 %v2450, 64
        %v3121 = vpop.permute.xlu0 %3120
        %3122 = vrot.lane.b32.xlu0 %v2452, 64
        %v3123 = vpop.permute.xlu0 %3122
        %3124 = vrot.lane.b32.xlu0 %v2455, 64
        %v3125 = vpop.permute.xlu0 %3124
        %3126 = vrot.lane.b32.xlu0 %v2457, 64
        %v3127 = vpop.permute.xlu0 %3126
        %3128 = vrot.lane.b32.xlu0 %v2460, 64
        %v3129 = vpop.permute.xlu0 %3128
        %3130 = vrot.lane.b32.xlu0 %v2462, 64
        %v3131 = vpop.permute.xlu0 %3130
        %3132 = vrot.lane.b32.xlu0 %v2465, 64
        %v3133 = vpop.permute.xlu0 %3132
        %3134 = vrot.lane.b32.xlu0 %v2467, 64
        %v3135 = vpop.permute.xlu0 %3134
        %3136 = vrot.lane.b32.xlu0 %v2470, 64
        %v3137 = vpop.permute.xlu0 %3136
        %3138 = vrot.lane.b32.xlu0 %v2472, 64
        %v3139 = vpop.permute.xlu0 %3138
        %3140 = vrot.lane.b32.xlu0 %v2475, 64
        %v3141 = vpop.permute.xlu0 %3140
        %3142 = vrot.lane.b32.xlu0 %v2477, 64
        %v3143 = vpop.permute.xlu0 %3142
        %3144 = vrot.lane.b32.xlu0 %v2480, 64
        %v3145 = vpop.permute.xlu0 %3144
        %3146 = vrot.lane.b32.xlu0 %v2482, 64
        %v3147 = vpop.permute.xlu0 %3146
        %3148 = vrot.lane.b32.xlu0 %v2485, 64
        %v3149 = vpop.permute.xlu0 %3148
        %3150 = vrot.lane.b32.xlu0 %v2487, 64
        %v3151 = vpop.permute.xlu0 %3150
        %3152 = vrot.lane.b32.xlu0 %v2490, 64
        %v3153 = vpop.permute.xlu0 %3152
        %3154 = vrot.lane.b32.xlu0 %v2492, 64
        %v3155 = vpop.permute.xlu0 %3154
        %3156 = vrot.lane.b32.xlu0 %v2495, 64
        %v3157 = vpop.permute.xlu0 %3156
        %3158 = vrot.lane.b32.xlu0 %v2497, 64
        %v3159 = vpop.permute.xlu0 %3158
        %3160 = vrot.lane.b32.xlu0 %v2500, 64
        %v3161 = vpop.permute.xlu0 %3160
        %3162 = vrot.lane.b32.xlu0 %v2502, 64
        %v3163 = vpop.permute.xlu0 %3162
        %3164 = vrot.lane.b32.xlu0 %v2505, 64
        %v3165 = vpop.permute.xlu0 %3164
        %3166 = vrot.lane.b32.xlu0 %v2507, 64
        %v3167 = vpop.permute.xlu0 %3166
        %3168 = vrot.lane.b32.xlu0 %v2510, 64
        %v3169 = vpop.permute.xlu0 %3168
        %3170 = vrot.lane.b32.xlu0 %v2512, 64
        %v3171 = vpop.permute.xlu0 %3170
        %3172 = vrot.lane.b32.xlu0 %v2515, 64
        %v3173 = vpop.permute.xlu0 %3172
        %3174 = vrot.lane.b32.xlu0 %v2517, 64
        %v3175 = vpop.permute.xlu0 %3174
        %3176 = vrot.lane.b32.xlu0 %v2816, 64
        %v3177 = vpop.permute.xlu0 %3176
        %3178 = vrot.lane.b32.xlu0 %v2818, 64
        %v3179 = vpop.permute.xlu0 %3178
        %3180 = vrot.lane.b32.xlu0 %v3117, 64
        %v3181 = vpop.permute.xlu0 %3180
        %3182 = vrot.lane.b32.xlu0 %v3119, 64
        %v3183 = vpop.permute.xlu0 %3182
        %v3216 = vsel %vm1471, %v2160, %v2343
        %v3217 = vsel %vm1471, %v2161, %v2345
        %v3218 = vsel %vm1471, %v2163, %v2347
        %v3219 = vsel %vm1471, %v2164, %v2349
        %v3220 = vsel %vm1471, %v2166, %v2351
        %v3221 = vsel %vm1471, %v2167, %v2353
        %v3222 = vsel %vm1471, %v2169, %v2355
        %v3223 = vsel %vm1471, %v2170, %v2357
        %v3224 = vsel %vm1471, %v2172, %v2359
        %v3225 = vsel %vm1471, %v2173, %v2361
        %v3226 = vsel %vm1471, %v2175, %v2363
        %v3227 = vsel %vm1471, %v2176, %v2365
        %v3228 = vsel %vm1471, %v2178, %v2367
        %v3229 = vsel %vm1471, %v2179, %v2369
        %v3230 = vsel %vm1471, %v2181, %v2371
        %v3231 = vsel %vm1471, %v2182, %v2373
        %v3232 = vsel %vm1471, %v2184, %v2375
        %v3233 = vsel %vm1471, %v2185, %v2377
        %v3234 = vsel %vm1471, %v2187, %v2379
        %v3235 = vsel %vm1471, %v2188, %v2381
        %v3236 = vsel %vm1471, %v2190, %v2383
        %v3237 = vsel %vm1471, %v2191, %v2385
        %v3238 = vsel %vm1471, %v2193, %v2387
        %v3239 = vsel %vm1471, %v2194, %v2389
        %v3240 = vsel %vm1471, %v2196, %v2391
        %v3241 = vsel %vm1471, %v2197, %v2393
        %v3242 = vsel %vm1471, %v2199, %v2395
        %v3243 = vsel %vm1471, %v2200, %v2397
        %v3244 = vsel %vm1471, %v2202, %v2399
        %v3245 = vsel %vm1471, %v2203, %v2401
        %v3246 = vsel %vm1471, %v2205, %v2403
        %v3247 = vsel %vm1471, %v2206, %v2405
        %v3248 = vsel %vm1537, %v3216, %v2519
        %v3249 = vsel %vm1537, %v3217, %v2521
        %v3250 = vsel %vm1537, %v3218, %v2523
        %v3251 = vsel %vm1537, %v3219, %v2525
        %v3252 = vsel %vm1537, %v3220, %v2527
        %v3253 = vsel %vm1537, %v3221, %v2529
        %v3254 = vsel %vm1537, %v3222, %v2531
        %v3255 = vsel %vm1537, %v3223, %v2533
        %v3256 = vsel %vm1537, %v3224, %v2535
        %v3257 = vsel %vm1537, %v3225, %v2537
        %v3258 = vsel %vm1537, %v3226, %v2539
        %v3259 = vsel %vm1537, %v3227, %v2541
        %v3260 = vsel %vm1537, %v3228, %v2543
        %v3261 = vsel %vm1537, %v3229, %v2545
        %v3262 = vsel %vm1537, %v3230, %v2547
        %v3263 = vsel %vm1537, %v3231, %v2549
        %v3264 = vsel %vm1537, %v3232, %v2551
        %v3265 = vsel %vm1537, %v3233, %v2553
        %v3266 = vsel %vm1537, %v3234, %v2555
        %v3267 = vsel %vm1537, %v3235, %v2557
        %v3268 = vsel %vm1537, %v3236, %v2559
        %v3269 = vsel %vm1537, %v3237, %v2561
        %v3270 = vsel %vm1537, %v3238, %v2563
        %v3271 = vsel %vm1537, %v3239, %v2565
        %v3272 = vsel %vm1537, %v3240, %v2567
        %v3273 = vsel %vm1537, %v3241, %v2569
        %v3274 = vsel %vm1537, %v3242, %v2571
        %v3275 = vsel %vm1537, %v3243, %v2573
        %v3276 = vsel %vm1537, %v3244, %v2575
        %v3277 = vsel %vm1537, %v3245, %v2577
        %v3278 = vsel %vm1537, %v3246, %v2579
        %v3279 = vsel %vm1537, %v3247, %v2581
        %v3280 = vsel %vm1603, %v3248, %v2617
        %v3281 = vsel %vm1603, %v3249, %v2619
        %v3282 = vsel %vm1603, %v3250, %v2621
        %v3283 = vsel %vm1603, %v3251, %v2623
        %v3284 = vsel %vm1603, %v3252, %v2625
        %v3285 = vsel %vm1603, %v3253, %v2627
        %v3286 = vsel %vm1603, %v3254, %v2629
        %v3287 = vsel %vm1603, %v3255, %v2631
        %v3288 = vsel %vm1603, %v3256, %v2633
        %v3289 = vsel %vm1603, %v3257, %v2635
        %v3290 = vsel %vm1603, %v3258, %v2637
        %v3291 = vsel %vm1603, %v3259, %v2639
        %v3292 = vsel %vm1603, %v3260, %v2641
        %v3293 = vsel %vm1603, %v3261, %v2643
        %v3294 = vsel %vm1603, %v3262, %v2645
        %v3295 = vsel %vm1603, %v3263, %v2647
        %v3296 = vsel %vm1603, %v3264, %v2649
        %v3297 = vsel %vm1603, %v3265, %v2651
        %v3298 = vsel %vm1603, %v3266, %v2653
        %v3299 = vsel %vm1603, %v3267, %v2655
        %v3300 = vsel %vm1603, %v3268, %v2657
        %v3301 = vsel %vm1603, %v3269, %v2659
        %v3302 = vsel %vm1603, %v3270, %v2661
        %v3303 = vsel %vm1603, %v3271, %v2663
        %v3304 = vsel %vm1603, %v3272, %v2665
        %v3305 = vsel %vm1603, %v3273, %v2667
        %v3306 = vsel %vm1603, %v3274, %v2669
        %v3307 = vsel %vm1603, %v3275, %v2671
        %v3308 = vsel %vm1603, %v3276, %v2673
        %v3309 = vsel %vm1603, %v3277, %v2675
        %v3310 = vsel %vm1603, %v3278, %v2677
        %v3311 = vsel %vm1603, %v3279, %v2679
        %v3312 = vsel %vm1669, %v3280, %v2719
        %v3313 = vsel %vm1669, %v3281, %v2721
        %v3314 = vsel %vm1669, %v3282, %v2723
        %v3315 = vsel %vm1669, %v3283, %v2725
        %v3316 = vsel %vm1669, %v3284, %v2727
        %v3317 = vsel %vm1669, %v3285, %v2729
        %v3318 = vsel %vm1669, %v3286, %v2731
        %v3319 = vsel %vm1669, %v3287, %v2733
        %v3320 = vsel %vm1669, %v3288, %v2735
        %v3321 = vsel %vm1669, %v3289, %v2737
        %v3322 = vsel %vm1669, %v3290, %v2739
        %v3323 = vsel %vm1669, %v3291, %v2741
        %v3324 = vsel %vm1669, %v3292, %v2743
        %v3325 = vsel %vm1669, %v3293, %v2745
        %v3326 = vsel %vm1669, %v3294, %v2747
        %v3327 = vsel %vm1669, %v3295, %v2749
        %v3328 = vsel %vm1669, %v3296, %v2751
        %v3329 = vsel %vm1669, %v3297, %v2753
        %v3330 = vsel %vm1669, %v3298, %v2755
        %v3331 = vsel %vm1669, %v3299, %v2757
        %v3332 = vsel %vm1669, %v3300, %v2759
        %v3333 = vsel %vm1669, %v3301, %v2761
        %v3334 = vsel %vm1669, %v3302, %v2763
        %v3335 = vsel %vm1669, %v3303, %v2765
        %v3336 = vsel %vm1669, %v3304, %v2767
        %v3337 = vsel %vm1669, %v3305, %v2769
        %v3338 = vsel %vm1669, %v3306, %v2771
        %v3339 = vsel %vm1669, %v3307, %v2773
        %v3340 = vsel %vm1669, %v3308, %v2775
        %v3341 = vsel %vm1669, %v3309, %v2777
        %v3342 = vsel %vm1669, %v3310, %v2779
        %v3343 = vsel %vm1669, %v3311, %v2781
        %vm3344 = vcmask 326656
        %v3345 = vsel %vm3344, %v3312, %v2820
        %v3346 = vsel %vm3344, %v3313, %v2822
        %v3347 = vsel %vm3344, %v3314, %v2824
        %v3348 = vsel %vm3344, %v3315, %v2826
        %v3349 = vsel %vm3344, %v3316, %v2828
        %v3350 = vsel %vm3344, %v3317, %v2830
        %v3351 = vsel %vm3344, %v3318, %v2832
        %v3352 = vsel %vm3344, %v3319, %v2834
        %v3353 = vsel %vm3344, %v3320, %v2836
        %v3354 = vsel %vm3344, %v3321, %v2838
        %v3355 = vsel %vm3344, %v3322, %v2840
        %v3356 = vsel %vm3344, %v3323, %v2842
        %v3357 = vsel %vm3344, %v3324, %v2844
        %v3358 = vsel %vm3344, %v3325, %v2846
        %v3359 = vsel %vm3344, %v3326, %v2848
        %v3360 = vsel %vm3344, %v3327, %v2850
        %v3361 = vsel %vm3344, %v3328, %v2852
        %v3362 = vsel %vm3344, %v3329, %v2854
        %v3363 = vsel %vm3344, %v3330, %v2856
        %v3364 = vsel %vm3344, %v3331, %v2858
        %v3365 = vsel %vm3344, %v3332, %v2860
        %v3366 = vsel %vm3344, %v3333, %v2862
        %v3367 = vsel %vm3344, %v3334, %v2864
        %v3368 = vsel %vm3344, %v3335, %v2866
        %v3369 = vsel %vm3344, %v3336, %v2868
        %v3370 = vsel %vm3344, %v3337, %v2870
        %v3371 = vsel %vm3344, %v3338, %v2872
        %v3372 = vsel %vm3344, %v3339, %v2874
        %v3373 = vsel %vm3344, %v3340, %v2876
        %v3374 = vsel %vm3344, %v3341, %v2878
        %v3375 = vsel %vm3344, %v3342, %v2880
        %v3376 = vsel %vm3344, %v3343, %v2882
        %vm3377 = vcmask 392192
        %v3378 = vsel %vm3377, %v3345, %v2918
        %v3379 = vsel %vm3377, %v3346, %v2920
        %v3380 = vsel %vm3377, %v3347, %v2922
        %v3381 = vsel %vm3377, %v3348, %v2924
        %v3382 = vsel %vm3377, %v3349, %v2926
        %v3383 = vsel %vm3377, %v3350, %v2928
        %v3384 = vsel %vm3377, %v3351, %v2930
        %v3385 = vsel %vm3377, %v3352, %v2932
        %v3386 = vsel %vm3377, %v3353, %v2934
        %v3387 = vsel %vm3377, %v3354, %v2936
        %v3388 = vsel %vm3377, %v3355, %v2938
        %v3389 = vsel %vm3377, %v3356, %v2940
        %v3390 = vsel %vm3377, %v3357, %v2942
        %v3391 = vsel %vm3377, %v3358, %v2944
        %v3392 = vsel %vm3377, %v3359, %v2946
        %v3393 = vsel %vm3377, %v3360, %v2948
        %v3394 = vsel %vm3377, %v3361, %v2950
        %v3395 = vsel %vm3377, %v3362, %v2952
        %v3396 = vsel %vm3377, %v3363, %v2954
        %v3397 = vsel %vm3377, %v3364, %v2956
        %v3398 = vsel %vm3377, %v3365, %v2958
        %v3399 = vsel %vm3377, %v3366, %v2960
        %v3400 = vsel %vm3377, %v3367, %v2962
        %v3401 = vsel %vm3377, %v3368, %v2964
        %v3402 = vsel %vm3377, %v3369, %v2966
        %v3403 = vsel %vm3377, %v3370, %v2968
        %v3404 = vsel %vm3377, %v3371, %v2970
        %v3405 = vsel %vm3377, %v3372, %v2972
        %v3406 = vsel %vm3377, %v3373, %v2974
        %v3407 = vsel %vm3377, %v3374, %v2976
        %v3408 = vsel %vm3377, %v3375, %v2978
        %v3409 = vsel %vm3377, %v3376, %v2980
        %vm3410 = vcmask 457728
        %v3411 = vsel %vm3410, %v3378, %v3020
        %v3412 = vsel %vm3410, %v3379, %v3022
        %v3413 = vsel %vm3410, %v3380, %v3024
        %v3414 = vsel %vm3410, %v3381, %v3026
        %v3415 = vsel %vm3410, %v3382, %v3028
        %v3416 = vsel %vm3410, %v3383, %v3030
        %v3417 = vsel %vm3410, %v3384, %v3032
        %v3418 = vsel %vm3410, %v3385, %v3034
        %v3419 = vsel %vm3410, %v3386, %v3036
        %v3420 = vsel %vm3410, %v3387, %v3038
        %v3421 = vsel %vm3410, %v3388, %v3040
        %v3422 = vsel %vm3410, %v3389, %v3042
        %v3423 = vsel %vm3410, %v3390, %v3044
        %v3424 = vsel %vm3410, %v3391, %v3046
        %v3425 = vsel %vm3410, %v3392, %v3048
        %v3426 = vsel %vm3410, %v3393, %v3050
        %v3427 = vsel %vm3410, %v3394, %v3052
        %v3428 = vsel %vm3410, %v3395, %v3054
        %v3429 = vsel %vm3410, %v3396, %v3056
        %v3430 = vsel %vm3410, %v3397, %v3058
        %v3431 = vsel %vm3410, %v3398, %v3060
        %v3432 = vsel %vm3410, %v3399, %v3062
        %v3433 = vsel %vm3410, %v3400, %v3064
        %v3434 = vsel %vm3410, %v3401, %v3066
        %v3435 = vsel %vm3410, %v3402, %v3068
        %v3436 = vsel %vm3410, %v3403, %v3070
        %v3437 = vsel %vm3410, %v3404, %v3072
        %v3438 = vsel %vm3410, %v3405, %v3074
        %v3439 = vsel %vm3410, %v3406, %v3076
        %v3440 = vsel %vm3410, %v3407, %v3078
        %v3441 = vsel %vm3410, %v3408, %v3080
        %v3442 = vsel %vm3410, %v3409, %v3082
        %vm3443 = vcmask 523264
        %v3444 = vsel %vm3443, %v3411, %v3121
        %v3445 = vsel %vm3443, %v3412, %v3123
        %v3446 = vsel %vm3443, %v3413, %v3125
        %v3447 = vsel %vm3443, %v3414, %v3127
        %v3448 = vsel %vm3443, %v3415, %v3129
        %v3449 = vsel %vm3443, %v3416, %v3131
        %v3450 = vsel %vm3443, %v3417, %v3133
        %v3451 = vsel %vm3443, %v3418, %v3135
        %v3452 = vsel %vm3443, %v3419, %v3137
        %v3453 = vsel %vm3443, %v3420, %v3139
        %v3454 = vsel %vm3443, %v3421, %v3141
        %v3455 = vsel %vm3443, %v3422, %v3143
        %v3456 = vsel %vm3443, %v3423, %v3145
        %v3457 = vsel %vm3443, %v3424, %v3147
        %v3458 = vsel %vm3443, %v3425, %v3149
        %v3459 = vsel %vm3443, %v3426, %v3151
        %v3460 = vsel %vm3443, %v3427, %v3153
        %v3461 = vsel %vm3443, %v3428, %v3155
        %v3462 = vsel %vm3443, %v3429, %v3157
        %v3463 = vsel %vm3443, %v3430, %v3159
        %v3464 = vsel %vm3443, %v3431, %v3161
        %v3465 = vsel %vm3443, %v3432, %v3163
        %v3466 = vsel %vm3443, %v3433, %v3165
        %v3467 = vsel %vm3443, %v3434, %v3167
        %v3468 = vsel %vm3443, %v3435, %v3169
        %v3469 = vsel %vm3443, %v3436, %v3171
        %v3470 = vsel %vm3443, %v3437, %v3173
        %v3471 = vsel %vm3443, %v3438, %v3175
        %v3472 = vsel %vm3443, %v3439, %v3177
        %v3473 = vsel %vm3443, %v3440, %v3179
        %v3474 = vsel %vm3443, %v3441, %v3181
        %v3475 = vsel %vm3443, %v3442, %v3183
        %v3476 = vld [vmem:[%s3] sm:$0xff]
        %v3477 = vld [vmem:[%s3 + $0x8] sm:$0xff]
        %v3478 = vld [vmem:[%s3 + $0x10] sm:$0xff]
        %v3479 = vld [vmem:[%s3 + $0x18] sm:$0xff]
        %v3480 = vld [vmem:[%s3 + $0x20] sm:$0xff]
        %v3481 = vld [vmem:[%s3 + $0x28] sm:$0xff]
        %v3482 = vld [vmem:[%s3 + $0x30] sm:$0xff]
        %v3483 = vld [vmem:[%s3 + $0x38] sm:$0xff]
        %v3484 = vld [vmem:[%s3 + $0x40] sm:$0xff]
        %v3485 = vld [vmem:[%s4] sm:$0x1]
        %v3487 = vlaneseq
        %v3488 = vshrl.u32 %v3487, 7
        %v3489 = vsub.s32 0, %v3488
        %v3490 = vrot.slane %v3485, %v3489
        %vm3492 = vcmask 588800
        %v3494 = vsel %vm3492, %v3444, 0
        %v3497 = vsel %vm3492, %v3445, 0
        %v3500 = vsel %vm3492, %v3446, 0
        %v3503 = vsel %vm3492, %v3447, 0
        %v3506 = vsel %vm3492, %v3448, 0
        %v3509 = vsel %vm3492, %v3449, 0
        %v3512 = vsel %vm3492, %v3450, 0
        %v3515 = vsel %vm3492, %v3451, 0
        %v3518 = vsel %vm3492, %v3452, 0
        %v3521 = vsel %vm3492, %v3453, 0
        %v3524 = vsel %vm3492, %v3454, 0
        %v3527 = vsel %vm3492, %v3455, 0
        %v3530 = vsel %vm3492, %v3456, 0
        %v3533 = vsel %vm3492, %v3457, 0
        %v3536 = vsel %vm3492, %v3458, 0
        %v3539 = vsel %vm3492, %v3459, 0
        %v3542 = vsel %vm3492, %v3460, 0
        %v3545 = vsel %vm3492, %v3461, 0
        %v3548 = vsel %vm3492, %v3462, 0
        %v3551 = vsel %vm3492, %v3463, 0
        %v3554 = vsel %vm3492, %v3464, 0
        %v3557 = vsel %vm3492, %v3465, 0
        %v3560 = vsel %vm3492, %v3466, 0
        %v3563 = vsel %vm3492, %v3467, 0
        %v3566 = vsel %vm3492, %v3468, 0
        %v3569 = vsel %vm3492, %v3469, 0
        %v3572 = vsel %vm3492, %v3470, 0
        %v3575 = vsel %vm3492, %v3471, 0
        %v3578 = vsel %vm3492, %v3472, 0
        %v3581 = vsel %vm3492, %v3473, 0
        %v3584 = vsel %vm3492, %v3474, 0
        %v3587 = vsel %vm3492, %v3475, 0
        %3589 = vmatprep.subr.mxu0 0.0
        %3590 = vmatpush1.msra.mxu0 %v3476
        %3591 = vmatprep.subr.mxu0 0.0
        %3592 = vmatpush1.msra.mxu0 %v3477
        %3593 = vmatprep.subr.mxu0 0.0
        %3594 = vmatpush1.msra.mxu0 %v3478
        %3595 = vmatprep.subr.mxu0 0.0
        %3596 = vmatpush1.msra.mxu0 %v3479
        %3597 = vmatprep.subr.mxu0 0.0
        %3598 = vmatpush1.msra.mxu0 %v3480
        %3599 = vmatprep.subr.mxu0 0.0
        %3600 = vmatpush1.msra.mxu0 %v3481
        %3601 = vmatprep.subr.mxu0 0.0
        %3602 = vmatpush1.msra.mxu0 %v3482
        %3603 = vmatprep.subr.mxu0 0.0
        %3604 = vmatpush1.msra.mxu0 %v3483
        %3605 = vmatprep.subr.mxu0 0.0
        %3606 = vmatpush1.msra.mxu0 %v3484
        %3607 = vmatprep.subr.mxu0 0.0
        %3608 = vmatpush1.msra.mxu0 0.0
        %3609 = vmatprep.subr.mxu0 0.0
        %3610 = vmatpush1.msra.mxu0 0.0
        %3611 = vmatprep.subr.mxu0 0.0
        %3612 = vmatpush1.msra.mxu0 0.0
        %3613 = vmatprep.subr.mxu0 0.0
        %3614 = vmatpush1.msra.mxu0 0.0
        %3615 = vmatprep.subr.mxu0 0.0
        %3616 = vmatpush1.msra.mxu0 0.0
        %3617 = vmatprep.subr.mxu0 0.0
        %3618 = vmatpush1.msra.mxu0 0.0
        %3619 = vmatprep.subr.mxu0 0.0
        %3620 = vmatpush1.msra.mxu0 0.0
        %3621 = vmatprep.subr.mxu0 0.0
        %3622 = vmatpush1.msra.mxu0 0.0
        %3623 = vmatprep.subr.mxu0 0.0
        %3624 = vmatpush1.msra.mxu0 0.0
        %3625 = vmatprep.subr.mxu0 0.0
        %3626 = vmatpush1.msra.mxu0 0.0
        %3627 = vmatprep.subr.mxu0 0.0
        %3628 = vmatpush1.msra.mxu0 0.0
        %3629 = vmatprep.subr.mxu0 0.0
        %3630 = vmatpush1.msra.mxu0 0.0
        %3631 = vmatprep.subr.mxu0 0.0
        %3632 = vmatpush1.msra.mxu0 0.0
        %3633 = vmatprep.subr.mxu0 0.0
        %3634 = vmatpush1.msra.mxu0 0.0
        %3635 = vmatprep.subr.mxu0 0.0
        %3636 = vmatpush1.msra.mxu0 0.0
        %3637 = vmatprep.subr.mxu0 0.0
        %3638 = vmatpush1.msra.mxu0 0.0
        %3639 = vmatprep.subr.mxu0 0.0
        %3640 = vmatpush1.msra.mxu0 0.0
        %3641 = vmatprep.subr.mxu0 0.0
        %3642 = vmatpush1.msra.mxu0 0.0
        %3643 = vmatprep.subr.mxu0 0.0
        %3644 = vmatpush1.msra.mxu0 0.0
        %3645 = vmatprep.subr.mxu0 0.0
        %3646 = vmatpush1.msra.mxu0 0.0
        %3647 = vmatprep.subr.mxu0 0.0
        %3648 = vmatpush1.msra.mxu0 0.0
        %3649 = vmatprep.subr.mxu0 0.0
        %3650 = vmatpush1.msra.mxu0 0.0
        %3651 = vmatprep.subr.mxu0 0.0
        %3652 = vmatpush1.msra.mxu0 0.0
        %3653 = vmatprep.mubr.f32.mxu0 0.0
        %3654 = vmatmul.mubr.f32.gmra.mrb[0].mxu0 %v3494
        %v3655 = vpop.f32.mrb[0].mxu0
        %v3656 = vadd.f32 %v3490, %v3655
        %v3657 = vpop.f32.mrb[0].mxu0
        %3658 = vmatprep.mubr.f32.mxu0 0.0
        %3659 = vmatmul.mubr.f32.gmra.mrb[0].mxu0 %v3497
        %v3660 = vpop.f32.mrb[0].mxu0
        %v3661 = vadd.f32 %v3490, %v3660
        %v3662 = vpop.f32.mrb[0].mxu0
        %3663 = vmatprep.mubr.f32.mxu0 0.0
        %3664 = vmatmul.mubr.f32.gmra.mrb[0].mxu0 %v3500
        %v3665 = vpop.f32.mrb[0].mxu0
        %v3666 = vadd.f32 %v3490, %v3665
        %v3667 = vpop.f32.mrb[0].mxu0
        %3668 = vmatprep.mubr.f32.mxu0 0.0
        %3669 = vmatmul.mubr.f32.gmra.mrb[0].mxu0 %v3503
        %v3670 = vpop.f32.mrb[0].mxu0
        %v3671 = vadd.f32 %v3490, %v3670
        %v3672 = vpop.f32.mrb[0].mxu0
        %3673 = vmatprep.mubr.f32.mxu0 0.0
        %3674 = vmatmul.mubr.f32.gmra.mrb[0].mxu0 %v3506
        %v3675 = vpop.f32.mrb[0].mxu0
        %v3676 = vadd.f32 %v3490, %v3675
        %v3677 = vpop.f32.mrb[0].mxu0
        %3678 = vmatprep.mubr.f32.mxu0 0.0
        %3679 = vmatmul.mubr.f32.gmra.mrb[0].mxu0 %v3509
        %v3680 = vpop.f32.mrb[0].mxu0
        %v3681 = vadd.f32 %v3490, %v3680
        %v3682 = vpop.f32.mrb[0].mxu0
        %3683 = vmatprep.mubr.f32.mxu0 0.0
        %3684 = vmatmul.mubr.f32.gmra.mrb[0].mxu0 %v3512
        %v3685 = vpop.f32.mrb[0].mxu0
        %v3686 = vadd.f32 %v3490, %v3685
        %v3687 = vpop.f32.mrb[0].mxu0
        %3688 = vmatprep.mubr.f32.mxu0 0.0
        %3689 = vmatmul.mubr.f32.gmra.mrb[0].mxu0 %v3515
        %v3690 = vpop.f32.mrb[0].mxu0
        %v3691 = vadd.f32 %v3490, %v3690
        %v3692 = vpop.f32.mrb[0].mxu0
        %3693 = vmatprep.mubr.f32.mxu0 0.0
        %3694 = vmatmul.mubr.f32.gmra.mrb[0].mxu0 %v3518
        %v3695 = vpop.f32.mrb[0].mxu0
        %v3696 = vadd.f32 %v3490, %v3695
        %v3697 = vpop.f32.mrb[0].mxu0
        %3698 = vmatprep.mubr.f32.mxu0 0.0
        %3699 = vmatmul.mubr.f32.gmra.mrb[0].mxu0 %v3521
        %v3700 = vpop.f32.mrb[0].mxu0
        %v3701 = vadd.f32 %v3490, %v3700
        %v3702 = vpop.f32.mrb[0].mxu0
        %3703 = vmatprep.mubr.f32.mxu0 0.0
        %3704 = vmatmul.mubr.f32.gmra.mrb[0].mxu0 %v3524
        %v3705 = vpop.f32.mrb[0].mxu0
        %v3706 = vadd.f32 %v3490, %v3705
        %v3707 = vpop.f32.mrb[0].mxu0
        %3708 = vmatprep.mubr.f32.mxu0 0.0
        %3709 = vmatmul.mubr.f32.gmra.mrb[0].mxu0 %v3527
        %v3710 = vpop.f32.mrb[0].mxu0
        %v3711 = vadd.f32 %v3490, %v3710
        %v3712 = vpop.f32.mrb[0].mxu0
        %3713 = vmatprep.mubr.f32.mxu0 0.0
        %3714 = vmatmul.mubr.f32.gmra.mrb[0].mxu0 %v3530
        %v3715 = vpop.f32.mrb[0].mxu0
        %v3716 = vadd.f32 %v3490, %v3715
        %v3717 = vpop.f32.mrb[0].mxu0
        %3718 = vmatprep.mubr.f32.mxu0 0.0
        %3719 = vmatmul.mubr.f32.gmra.mrb[0].mxu0 %v3533
        %v3720 = vpop.f32.mrb[0].mxu0
        %v3721 = vadd.f32 %v3490, %v3720
        %v3722 = vpop.f32.mrb[0].mxu0
        %3723 = vmatprep.mubr.f32.mxu0 0.0
        %3724 = vmatmul.mubr.f32.gmra.mrb[0].mxu0 %v3536
        %v3725 = vpop.f32.mrb[0].mxu0
        %v3726 = vadd.f32 %v3490, %v3725
        %v3727 = vpop.f32.mrb[0].mxu0
        %3728 = vmatprep.mubr.f32.mxu0 0.0
        %3729 = vmatmul.mubr.f32.gmra.mrb[0].mxu0 %v3539
        %v3730 = vpop.f32.mrb[0].mxu0
        %v3731 = vadd.f32 %v3490, %v3730
        %v3732 = vpop.f32.mrb[0].mxu0
        %3733 = vmatprep.mubr.f32.mxu0 0.0
        %3734 = vmatmul.mubr.f32.gmra.mrb[0].mxu0 %v3542
        %v3735 = vpop.f32.mrb[0].mxu0
        %v3736 = vadd.f32 %v3490, %v3735
        %v3737 = vpop.f32.mrb[0].mxu0
        %3738 = vmatprep.mubr.f32.mxu0 0.0
        %3739 = vmatmul.mubr.f32.gmra.mrb[0].mxu0 %v3545
        %v3740 = vpop.f32.mrb[0].mxu0
        %v3741 = vadd.f32 %v3490, %v3740
        %v3742 = vpop.f32.mrb[0].mxu0
        %3743 = vmatprep.mubr.f32.mxu0 0.0
        %3744 = vmatmul.mubr.f32.gmra.mrb[0].mxu0 %v3548
        %v3745 = vpop.f32.mrb[0].mxu0
        %v3746 = vadd.f32 %v3490, %v3745
        %v3747 = vpop.f32.mrb[0].mxu0
        %3748 = vmatprep.mubr.f32.mxu0 0.0
        %3749 = vmatmul.mubr.f32.gmra.mrb[0].mxu0 %v3551
        %v3750 = vpop.f32.mrb[0].mxu0
        %v3751 = vadd.f32 %v3490, %v3750
        %v3752 = vpop.f32.mrb[0].mxu0
        %3753 = vmatprep.mubr.f32.mxu0 0.0
        %3754 = vmatmul.mubr.f32.gmra.mrb[0].mxu0 %v3554
        %v3755 = vpop.f32.mrb[0].mxu0
        %v3756 = vadd.f32 %v3490, %v3755
        %v3757 = vpop.f32.mrb[0].mxu0
        %3758 = vmatprep.mubr.f32.mxu0 0.0
        %3759 = vmatmul.mubr.f32.gmra.mrb[0].mxu0 %v3557
        %v3760 = vpop.f32.mrb[0].mxu0
        %v3761 = vadd.f32 %v3490, %v3760
        %v3762 = vpop.f32.mrb[0].mxu0
        %3763 = vmatprep.mubr.f32.mxu0 0.0
        %3764 = vmatmul.mubr.f32.gmra.mrb[0].mxu0 %v3560
        %v3765 = vpop.f32.mrb[0].mxu0
        %v3766 = vadd.f32 %v3490, %v3765
        %v3767 = vpop.f32.mrb[0].mxu0
        %3768 = vmatprep.mubr.f32.mxu0 0.0
        %3769 = vmatmul.mubr.f32.gmra.mrb[0].mxu0 %v3563
        %v3770 = vpop.f32.mrb[0].mxu0
        %v3771 = vadd.f32 %v3490, %v3770
        %v3772 = vpop.f32.mrb[0].mxu0
        %3773 = vmatprep.mubr.f32.mxu0 0.0
        %3774 = vmatmul.mubr.f32.gmra.mrb[0].mxu0 %v3566
        %v3775 = vpop.f32.mrb[0].mxu0
        %v3776 = vadd.f32 %v3490, %v3775
        %v3777 = vpop.f32.mrb[0].mxu0
        %3778 = vmatprep.mubr.f32.mxu0 0.0
        %3779 = vmatmul.mubr.f32.gmra.mrb[0].mxu0 %v3569
        %v3780 = vpop.f32.mrb[0].mxu0
        %v3781 = vadd.f32 %v3490, %v3780
        %v3782 = vpop.f32.mrb[0].mxu0
        %3783 = vmatprep.mubr.f32.mxu0 0.0
        %3784 = vmatmul.mubr.f32.gmra.mrb[0].mxu0 %v3572
        %v3785 = vpop.f32.mrb[0].mxu0
        %v3786 = vadd.f32 %v3490, %v3785
        %v3787 = vpop.f32.mrb[0].mxu0
        %3788 = vmatprep.mubr.f32.mxu0 0.0
        %3789 = vmatmul.mubr.f32.gmra.mrb[0].mxu0 %v3575
        %v3790 = vpop.f32.mrb[0].mxu0
        %v3791 = vadd.f32 %v3490, %v3790
        %v3792 = vpop.f32.mrb[0].mxu0
        %3793 = vmatprep.mubr.f32.mxu0 0.0
        %3794 = vmatmul.mubr.f32.gmra.mrb[0].mxu0 %v3578
        %v3795 = vpop.f32.mrb[0].mxu0
        %v3796 = vadd.f32 %v3490, %v3795
        %v3797 = vpop.f32.mrb[0].mxu0
        %3798 = vmatprep.mubr.f32.mxu0 0.0
        %3799 = vmatmul.mubr.f32.gmra.mrb[0].mxu0 %v3581
        %v3800 = vpop.f32.mrb[0].mxu0
        %v3801 = vadd.f32 %v3490, %v3800
        %v3802 = vpop.f32.mrb[0].mxu0
        %3803 = vmatprep.mubr.f32.mxu0 0.0
        %3804 = vmatmul.mubr.f32.gmra.mrb[0].mxu0 %v3584
        %v3805 = vpop.f32.mrb[0].mxu0
        %v3806 = vadd.f32 %v3490, %v3805
        %v3807 = vpop.f32.mrb[0].mxu0
        %3808 = vmatprep.mubr.f32.mxu0 0.0
        %3809 = vmatmul.mubr.f32.gmra.mrb[0].mxu0 %v3587
        %v3810 = vpop.f32.mrb[0].mxu0
        %v3811 = vadd.f32 %v3490, %v3810
        %v3812 = vpop.f32.mrb[0].mxu0
        %3813 = vdwg.mxu0
        %v3814 = vmax.f32 %v3656, 0.0
        %v3815 = vmax.f32 %v3661, 0.0
        %v3816 = vmax.f32 %v3666, 0.0
        %v3817 = vmax.f32 %v3671, 0.0
        %v3818 = vmax.f32 %v3676, 0.0
        %v3819 = vmax.f32 %v3681, 0.0
        %v3820 = vmax.f32 %v3686, 0.0
        %v3821 = vmax.f32 %v3691, 0.0
        %v3822 = vmax.f32 %v3696, 0.0
        %v3823 = vmax.f32 %v3701, 0.0
        %v3824 = vmax.f32 %v3706, 0.0
        %v3825 = vmax.f32 %v3711, 0.0
        %v3826 = vmax.f32 %v3716, 0.0
        %v3827 = vmax.f32 %v3721, 0.0
        %v3828 = vmax.f32 %v3726, 0.0
        %v3829 = vmax.f32 %v3731, 0.0
        %v3830 = vmax.f32 %v3736, 0.0
        %v3831 = vmax.f32 %v3741, 0.0
        %v3832 = vmax.f32 %v3746, 0.0
        %v3833 = vmax.f32 %v3751, 0.0
        %v3834 = vmax.f32 %v3756, 0.0
        %v3835 = vmax.f32 %v3761, 0.0
        %v3836 = vmax.f32 %v3766, 0.0
        %v3837 = vmax.f32 %v3771, 0.0
        %v3838 = vmax.f32 %v3776, 0.0
        %v3839 = vmax.f32 %v3781, 0.0
        %v3840 = vmax.f32 %v3786, 0.0
        %v3841 = vmax.f32 %v3791, 0.0
        %v3842 = vmax.f32 %v3796, 0.0
        %v3843 = vmax.f32 %v3801, 0.0
        %v3844 = vmax.f32 %v3806, 0.0
        %v3845 = vmax.f32 %v3811, 0.0
        %3846 = vxpose.xlu0.b32.start [1/16] %v3814, 128
        %3847 = vxpose.xlu0.b32.cont [2/16] %v3815, 128
        %3848 = vxpose.xlu0.b32.cont [3/16] %v3816, 128
        %3849 = vxpose.xlu0.b32.cont [4/16] %v3817, 128
        %3850 = vxpose.xlu0.b32.cont [5/16] %v3818, 128
        %3851 = vxpose.xlu0.b32.cont [6/16] %v3819, 128
        %3852 = vxpose.xlu0.b32.cont [7/16] %v3820, 128
        %3853 = vxpose.xlu0.b32.cont [8/16] %v3821, 128
        %3854 = vxpose.xlu0.b32.cont [9/16] %v3822, 128
        %3855 = vxpose.xlu0.b32.cont [10/16] %v3823, 128
        %3856 = vxpose.xlu0.b32.cont [11/16] %v3824, 128
        %3857 = vxpose.xlu0.b32.cont [12/16] %v3825, 128
        %3858 = vxpose.xlu0.b32.cont [13/16] %v3826, 128
        %3859 = vxpose.xlu0.b32.cont [14/16] %v3827, 128
        %3860 = vxpose.xlu0.b32.cont [15/16] %v3828, 128
        %3861 = vxpose.xlu0.b32.end [16/16] %v3829, 128
        %v3862 = vpop.trf.xlu0
        %v3863 = vpop.trf.xlu0
        %v3864 = vpop.trf.xlu0
        %v3865 = vpop.trf.xlu0
        %v3866 = vpop.trf.xlu0
        %v3867 = vpop.trf.xlu0
        %v3868 = vpop.trf.xlu0
        %v3869 = vpop.trf.xlu0
        %v3870 = vpop.trf.xlu0
        %v3871 = vpop.trf.xlu0
        %v3872 = vpop.trf.xlu0
        %v3873 = vpop.trf.xlu0
        %v3874 = vpop.trf.xlu0
        %v3875 = vpop.trf.xlu0
        %v3876 = vpop.trf.xlu0
        %v3877 = vpop.trf.xlu0
        %3878 = vxpose.xlu0.b32.start [1/16] %v3830, 128
        %3879 = vxpose.xlu0.b32.cont [2/16] %v3831, 128
        %3880 = vxpose.xlu0.b32.cont [3/16] %v3832, 128
        %3881 = vxpose.xlu0.b32.cont [4/16] %v3833, 128
        %3882 = vxpose.xlu0.b32.cont [5/16] %v3834, 128
        %3883 = vxpose.xlu0.b32.cont [6/16] %v3835, 128
        %3884 = vxpose.xlu0.b32.cont [7/16] %v3836, 128
        %3885 = vxpose.xlu0.b32.cont [8/16] %v3837, 128
        %3886 = vxpose.xlu0.b32.cont [9/16] %v3838, 128
        %3887 = vxpose.xlu0.b32.cont [10/16] %v3839, 128
        %3888 = vxpose.xlu0.b32.cont [11/16] %v3840, 128
        %3889 = vxpose.xlu0.b32.cont [12/16] %v3841, 128
        %3890 = vxpose.xlu0.b32.cont [13/16] %v3842, 128
        %3891 = vxpose.xlu0.b32.cont [14/16] %v3843, 128
        %3892 = vxpose.xlu0.b32.cont [15/16] %v3844, 128
        %3893 = vxpose.xlu0.b32.end [16/16] %v3845, 128
        %v3894 = vpop.trf.xlu0
        %v3895 = vpop.trf.xlu0
        %v3896 = vpop.trf.xlu0
        %v3897 = vpop.trf.xlu0
        %v3898 = vpop.trf.xlu0
        %v3899 = vpop.trf.xlu0
        %v3900 = vpop.trf.xlu0
        %v3901 = vpop.trf.xlu0
        %v3902 = vpop.trf.xlu0
        %v3903 = vpop.trf.xlu0
        %v3904 = vpop.trf.xlu0
        %v3905 = vpop.trf.xlu0
        %v3906 = vpop.trf.xlu0
        %v3907 = vpop.trf.xlu0
        %v3908 = vpop.trf.xlu0
        %v3909 = vpop.trf.xlu0
        %3910 = vst [vmem:[%s248] sm:$0xff] %v3862
        %3911 = vst [vmem:[%s248 + $0x8] sm:$0xff] %v3894
        %3912 = vst [vmem:[%s248 + $0x10] sm:$0xff] %v3863
        %3913 = vst [vmem:[%s248 + $0x18] sm:$0xff] %v3895
        %v3914 = vsel %vm1537, %v3814, 0.0
        %v3915 = vsel %vm1537, %v3815, 0.0
        %v3916 = vadd.f32 %v3914, %v3915
        %v3917 = vsel %vm1537, %v3816, 0.0
        %v3918 = vadd.f32 %v3916, %v3917
        %v3919 = vsel %vm1537, %v3817, 0.0
        %v3920 = vadd.f32 %v3918, %v3919
        %v3921 = vsel %vm1537, %v3818, 0.0
        %v3922 = vadd.f32 %v3920, %v3921
        %v3923 = vsel %vm1537, %v3819, 0.0
        %v3924 = vadd.f32 %v3922, %v3923
        %v3925 = vsel %vm1537, %v3820, 0.0
        %v3926 = vadd.f32 %v3924, %v3925
        %v3927 = vsel %vm1537, %v3821, 0.0
        %v3928 = vadd.f32 %v3926, %v3927
        %v3929 = vsel %vm1537, %v3822, 0.0
        %v3930 = vadd.f32 %v3928, %v3929
        %v3931 = vsel %vm1537, %v3823, 0.0
        %v3932 = vadd.f32 %v3930, %v3931
        %v3933 = vsel %vm1537, %v3824, 0.0
        %v3934 = vadd.f32 %v3932, %v3933
        %v3935 = vsel %vm1537, %v3825, 0.0
        %v3936 = vadd.f32 %v3934, %v3935
        %v3937 = vsel %vm1537, %v3826, 0.0
        %v3938 = vadd.f32 %v3936, %v3937
        %v3939 = vsel %vm1537, %v3827, 0.0
        %v3940 = vadd.f32 %v3938, %v3939
        %v3941 = vsel %vm1537, %v3828, 0.0
        %v3942 = vadd.f32 %v3940, %v3941
        %v3943 = vsel %vm1537, %v3829, 0.0
        %v3944 = vadd.f32 %v3942, %v3943
        %v3945 = vsel %vm1537, %v3830, 0.0
        %v3946 = vadd.f32 %v3944, %v3945
        %v3947 = vsel %vm1537, %v3831, 0.0
        %v3948 = vadd.f32 %v3946, %v3947
        %v3949 = vsel %vm1537, %v3832, 0.0
        %v3950 = vadd.f32 %v3948, %v3949
        %v3951 = vsel %vm1537, %v3833, 0.0
        %v3952 = vadd.f32 %v3950, %v3951
        %v3953 = vsel %vm1537, %v3834, 0.0
        %v3954 = vadd.f32 %v3952, %v3953
        %v3955 = vsel %vm1537, %v3835, 0.0
        %v3956 = vadd.f32 %v3954, %v3955
        %v3957 = vsel %vm1537, %v3836, 0.0
        %v3958 = vadd.f32 %v3956, %v3957
        %v3959 = vsel %vm1537, %v3837, 0.0
        %v3960 = vadd.f32 %v3958, %v3959
        %v3961 = vsel %vm1537, %v3838, 0.0
        %v3962 = vadd.f32 %v3960, %v3961
        %v3963 = vsel %vm1537, %v3839, 0.0
        %v3964 = vadd.f32 %v3962, %v3963
        %v3965 = vsel %vm1537, %v3840, 0.0
        %v3966 = vadd.f32 %v3964, %v3965
        %v3967 = vsel %vm1537, %v3841, 0.0
        %v3968 = vadd.f32 %v3966, %v3967
        %v3969 = vsel %vm1537, %v3842, 0.0
        %v3970 = vadd.f32 %v3968, %v3969
        %v3971 = vsel %vm1537, %v3843, 0.0
        %v3972 = vadd.f32 %v3970, %v3971
        %v3973 = vsel %vm1537, %v3844, 0.0
        %v3974 = vadd.f32 %v3972, %v3973
        %v3975 = vsel %vm1537, %v3845, 0.0
        %v3976 = vadd.f32 %v3974, %v3975
        %v3977 = vrot.slane %v3976, 4
        %v3978 = vadd.f32 %v3976, %v3977
        %v3979 = vrot.slane %v3978, 2
        %v3980 = vadd.f32 %v3978, %v3979
        %v3981 = vrot.slane %v3980, 1
        %v3982 = vadd.f32 %v3980, %v3981
        %v3983 = vrcp.pop 256.0
        %v3984 = vmul.f32 %v3982, %v3983
        %vm3985 = vcmask 122880
        %3986 = vst.msk [vmem:[%s254] sm:$0x1] %vm3985, %v3984
        %s3987 = sand.u32 %s142, 1
        %s3988 = scalar_lea.sflag [#allocation5], %s3987
        %s3989 = sand.u32 %s142, 1
        %s3990 = smul.addr %s3989, 32
        %s3991 = scalar_lea.vmem [#allocation4], %s3990
        %s3992 = sand.u32 %s168, 1
        %s3993 = scalar_lea.sflag [#allocation7], %s3992
        %s3994 = sand.u32 %s168, 1
        %s3995 = scalar_lea.vmem [#allocation6], %s3994
        // Predicated region
        $region41: #{tpu_custom_call.1} parent=39 // pred_check
          %p3996 = pneg %p152
        $region42: #{tpu_custom_call.1} parent=39 // pred_check_branch
          %3998 = sbr.rel (%p3996) target = $region44
        $region43: #{tpu_custom_call.1} parent=39 // pred_region
          %s4000 = ssub.s32 512, 512
          %4001 = vsyncadd %s3988, %s4000
          %s4002 = smul.addr %s24, 4
          %s4003 = smul.addr %s4002, 128
          %s4004 = scalar_lea.hbm %s5, %s4003
          %s4005 = sshll.u32 %s3991, 4
          %s4006 = int_to_ptr.vmem [resolvable:$true] %s4005
          %4011 = dma.vmem_to_hbm [thread:$0]  %s4006, 512, %s4004, %s3988, 256, 256, 16
        $region44: #{tpu_custom_call.1} parent=39 // pred_fallthru
          _
        // Predicated region
        $region45: #{tpu_custom_call.1} parent=39 // pred_check
          %p4012 = pneg %p178
        $region46: #{tpu_custom_call.1} parent=39 // pred_check_branch
          %4014 = sbr.rel (%p4012) target = $region48
        $region47: #{tpu_custom_call.1} parent=39 // pred_region
          %s4016 = ssub.s32 16, 16
          %4017 = vsyncadd %s3993, %s4016
          %s4018 = smul.addr %s24, 16
          %s4019 = scalar_lea.hbm %s6, %s4018
          %s4021 = sshll.u32 %s3995, 4
          %s4022 = int_to_ptr.vmem [resolvable:$true] %s4021
          %4024 = dma.vmem_to_hbm [thread:$0]  %s4022, 16, %s4019, %s3993
        $region48: #{tpu_custom_call.1} parent=39 // pred_fallthru
          _
      $region40: #{tpu_custom_call.1} parent=5 // pred_fallthru
        _
      %p4025 = scmp.le.s32.totalorder 2, %s19
      // Predicated region
      $region49: #{tpu_custom_call.1} parent=5 // pred_check
        %p4026 = pneg %p4025
      $region50: #{tpu_custom_call.1} parent=5 // pred_check_branch
        %4028 = sbr.rel (%p4026) target = $region52
      $region51: #{tpu_custom_call.1} parent=5 // pred_region
        %s4029 = ssub.s32 %s19, 2
        // Predicated region
        $region53: #{tpu_custom_call.1} parent=51 // pred_check
          %p4030 = pneg %p158
        $region54: #{tpu_custom_call.1} parent=51 // pred_check_branch
          %4032 = sbr.rel (%p4030) target = $region56
        $region55: #{tpu_custom_call.1} parent=51 // pred_region
          %s4033 = sand.u32 %s143, 1
          %s4034 = scalar_lea.sflag [#allocation5], %s4033
          %s4035 = sand.u32 %s143, 1
          %s4036 = smul.addr %s4035, 32
          %s4037 = scalar_lea.vmem [#allocation4], %s4036
          %4038 = dma.done %s4034, 512
        $region56: #{tpu_custom_call.1} parent=51 // pred_fallthru
          _
        // Predicated region
        $region57: #{tpu_custom_call.1} parent=51 // pred_check
          %p4039 = pneg %p184
        $region58: #{tpu_custom_call.1} parent=51 // pred_check_branch
          %4041 = sbr.rel (%p4039) target = $region60
        $region59: #{tpu_custom_call.1} parent=51 // pred_region
          %s4042 = sand.u32 %s169, 1
          %s4043 = scalar_lea.sflag [#allocation7], %s4042
          %s4044 = sand.u32 %s169, 1
          %s4045 = scalar_lea.vmem [#allocation6], %s4044
          %4046 = dma.done %s4043, 16
        $region60: #{tpu_custom_call.1} parent=51 // pred_fallthru
          _
      $region52: #{tpu_custom_call.1} parent=5 // pred_fallthru
        _
    $region6: #{tpu_custom_call.1} parent=1 // loop_footer
      %s23 = sadd.s32 1, %s19
    $region7: #{tpu_custom_call.1} parent=1 // loop_footer_branch
      %18 = sbr.rel target = $region3
    $region8: #{tpu_custom_call.1} parent=1 // loop_exit
      _
    %4047 = vsyncpa [#allocation5], 1
    %s4048 = scalar_lea.sflag [#allocation5], 1
    %4049 = vsyncpa %s4048, 1
    %4050 = vsyncpa [#allocation7], 1
    %s4051 = scalar_lea.sflag [#allocation7], 1
    %4052 = vsyncpa %s4051, 1

</llo_original>
